<compile_context>
chip_gen: v5e
topology: v5e:2x2
jax: 0.10.0
libtpu: 0.0.40
codegen_flags: <defaults>
</compile_context>

<pallas_src>
import functools
import math

import jax
import jax.numpy as jnp
import numpy as np
from jax.experimental import pallas as pl
from jax.experimental.pallas import tpu as pltpu

DEPTH = 3            # dilation_depth -> dilations 1, 2, 4
RES = 16             # residual_size
SKIP = 16            # skip_size (must equal residual_size, see module)
BATCH = 2
T_LEN = 128          # time steps (lane-dense: B*T = 256 lanes)
EPS = 1e-5


# ---------------------------------------------------------------------------
# Fused kernel: all DEPTH residual layers in one invocation, all data in VMEM.
# Activations are (C, N) with N = B*T, columns batch-major (n = b*T + t).
# ---------------------------------------------------------------------------
def dilated_stack_kernel(x_ref, wfg_ref, gam_ref, bet_ref, wrs_ref, brs_ref,
                         skips_ref, resid_ref, *, depth, res_ch, t_len):
    HI = jax.lax.Precision.HIGHEST
    z = x_ref[...]                                                # (R, N) f32
    # time index of every column (columns are batch-major: n = b*T + t)
    t_idx = jax.lax.broadcasted_iota(jnp.int32, z.shape, 1) % t_len

    def causal_shift(v, m):
        # v[:, b*T + t] -> v[:, b*T + t - m] within each batch element,
        # zeros where t < m (masks both the wrap and cross-batch leakage).
        return jnp.where(t_idx < m, 0.0, pltpu.roll(v, m, axis=1))

    for layer in range(depth):                 # static unroll; dilation static
        d = 1 << layer
        # taps k=0,1,2 of the dilated causal conv read x[t-2d], x[t-d], x[t]
        zcat = jnp.concatenate(
            [causal_shift(z, 2 * d), causal_shift(z, d), z], axis=0)  # (3R, N)

        # fused conv_filter + conv_gate: one (2R, 3R) @ (3R, N) MXU matmul
        y = jnp.dot(wfg_ref[layer], zcat,
                    preferred_element_type=jnp.float32, precision=HI)

        # BatchNorm1d (training mode, biased variance) per channel over (B, T)
        mu = jnp.mean(y, axis=1, keepdims=True)
        ctr = y - mu
        var = jnp.mean(ctr * ctr, axis=1, keepdims=True)
        yn = ctr * (gam_ref[layer] * jax.lax.rsqrt(var + EPS)) + bet_ref[layer]

        # gated activation: tanh(filter) * sigmoid(gate)  (EUP ops)
        act = jnp.tanh(yn[:res_ch]) * (1.0 / (1.0 + jnp.exp(-yn[res_ch:])))

        # fused 1x1 convs: rows [:R] = resconv1_1(act), rows [R:] =
        # skipconv1_1(resconv1_1(act)) -- one (R+S, R) @ (R, N) matmul
        y2 = jnp.dot(wrs_ref[layer], act,
                     preferred_element_type=jnp.float32,
                     precision=HI) + brs_ref[layer]                  # (R+S, N)

        skips_ref[layer, :, :] = y2[res_ch:]
        z = y2[:res_ch] + z                                          # residual

    resid_ref[...] = z


# ---------------------------------------------------------------------------
# Wrapper: weight re-layout (tap/branch stacking, res+skip folding), lane-dense
# data layout, single pallas_call, final transposes back to PyTorch (B, C, T).
# ---------------------------------------------------------------------------
@jax.jit
def dilated_stack_forward(x, w_filter, w_gate, gam_f, bet_f, gam_g, bet_g,
                          w_res, b_res, w_skip, b_skip):
    """x: (B, R, T).  w_filter/w_gate: (D, R, R, 3) [out, in, tap];
       BN gamma/beta: (D, R) each for filter & gate; w_res: (D, R, R);
       b_res: (D, R); w_skip: (D, S, S); b_skip: (D, S)."""
    HI = jax.lax.Precision.HIGHEST
    B, R, T = x.shape
    D = w_filter.shape[0]
    S = w_skip.shape[1]
    N = B * T

    # channel-major, lane-dense activations: column n = b*T + t
    x2 = jnp.transpose(x, (1, 0, 2)).reshape(R, N)

    # tap-stacked + filter/gate-stacked conv weight: (D, 2R, 3R)
    wf = jnp.concatenate([w_filter[..., k] for k in range(3)], axis=2)  # (D,R,3R)
    wg = jnp.concatenate([w_gate[..., k] for k in range(3)], axis=2)
    w_fg = jnp.concatenate([wf, wg], axis=1)                            # (D,2R,3R)

    # per-channel BN params as column vectors (sublane layout)
    gamma = jnp.concatenate([gam_f, gam_g], axis=1)[..., None]          # (D,2R,1)
    beta = jnp.concatenate([bet_f, bet_g], axis=1)[..., None]

    # fold skipconv1_1(resconv1_1(.)) into the res weight: one matmul/layer
    w_sk = jnp.einsum('dij,djk->dik', w_skip, w_res, precision=HI)      # (D,S,R)
    b_sk = jnp.einsum('dij,dj->di', w_skip, b_res, precision=HI) + b_skip
    w_rs = jnp.concatenate([w_res, w_sk], axis=1)                       # (D,R+S,R)
    b_rs = jnp.concatenate([b_res, b_sk], axis=1)[..., None]            # (D,R+S,1)

    vmem = pl.BlockSpec(memory_space=pltpu.MemorySpace.VMEM)
    kern = functools.partial(dilated_stack_kernel, depth=D, res_ch=R, t_len=T)

    skips2, resid2 = pl.pallas_call(
        kern,
        out_shape=(jax.ShapeDtypeStruct((D, S, N), jnp.float32),
                   jax.ShapeDtypeStruct((R, N), jnp.float32)),
        in_specs=[vmem] * 6,
        out_specs=(vmem, vmem),
    )(x2, w_fg, gamma, beta, w_rs, b_rs)

    # back to PyTorch layout: skips (D, B, S, T), residual (B, R, T)
    skips = jnp.transpose(skips2.reshape(D, S, B, T), (0, 2, 1, 3))
    resid = jnp.transpose(resid2.reshape(R, B, T), (1, 0, 2))
    return skips, resid


# ---------------------------------------------------------------------------
# Pure-JAX reference (same math, no Pallas, un-fused) for a correctness check
# ---------------------------------------------------------------------------
def dilated_stack_ref(x, w_filter, w_gate, gam_f, bet_f, gam_g, bet_g,
                      w_res, b_res, w_skip, b_skip):
    HI = jax.lax.Precision.HIGHEST
    B, R, T = x.shape
    D = w_filter.shape[0]

    def causal_conv(z, w, d):
        zp = jnp.pad(z, ((0, 0), (0, 0), (2 * d, 0)))
        return sum(jnp.einsum('oc,bct->bot', w[:, :, k],
                              zp[:, :, k * d:k * d + T], precision=HI)
                   for k in range(3))

    def bn(z, gamma, beta):
        mu = jnp.mean(z, axis=(0, 2), keepdims=True)
        var = jnp.mean((z - mu) ** 2, axis=(0, 2), keepdims=True)
        return (z - mu) * jax.lax.rsqrt(var + EPS) * gamma[None, :, None] \
               + beta[None, :, None]

    z = x
    skips = []
    for n in range(D):
        d = 2 ** n
        f = bn(causal_conv(z, w_filter[n], d), gam_f[n], bet_f[n])
        g = bn(causal_conv(z, w_gate[n], d), gam_g[n], bet_g[n])
        act = jnp.tanh(f) * (1.0 / (1.0 + jnp.exp(-g)))
        fx = jnp.einsum('oc,bct->bot', w_res[n], act, precision=HI) \
             + b_res[n][None, :, None]
        skip = jnp.einsum('oc,bct->bot', w_skip[n], fx, precision=HI) \
               + b_skip[n][None, :, None]
        skips.append(skip)
        z = fx + z
    return jnp.stack(skips, axis=0), z


if __name__ == "__main__":
    key = jax.random.PRNGKey(0)
    ks = jax.random.split(key, 12)

    x = jax.random.normal(ks[0], (BATCH, RES, T_LEN), jnp.float32)

    # PyTorch-style init bounds (Conv1d: U(-1/sqrt(fan_in), +1/sqrt(fan_in)))
    bnd3 = 1.0 / math.sqrt(RES * 3)
    w_filter = jax.random.uniform(ks[1], (DEPTH, RES, RES, 3), jnp.float32, -bnd3, bnd3)
    w_gate = jax.random.uniform(ks[2], (DEPTH, RES, RES, 3), jnp.float32, -bnd3, bnd3)
    gam_f = 1.0 + 0.1 * jax.random.normal(ks[3], (DEPTH, RES), jnp.float32)
    bet_f = 0.1 * jax.random.normal(ks[4], (DEPTH, RES), jnp.float32)
    gam_g = 1.0 + 0.1 * jax.random.normal(ks[5], (DEPTH, RES), jnp.float32)
    bet_g = 0.1 * jax.random.normal(ks[6], (DEPTH, RES), jnp.float32)
    bnd1 = 1.0 / math.sqrt(RES)
    w_res = jax.random.uniform(ks[7], (DEPTH, RES, RES), jnp.float32, -bnd1, bnd1)
    b_res = jax.random.uniform(ks[8], (DEPTH, RES), jnp.float32, -bnd1, bnd1)
    w_skip = jax.random.uniform(ks[9], (DEPTH, SKIP, SKIP), jnp.float32, -bnd1, bnd1)
    b_skip = jax.random.uniform(ks[10], (DEPTH, SKIP), jnp.float32, -bnd1, bnd1)

    args = (x, w_filter, w_gate, gam_f, bet_f, gam_g, bet_g,
            w_res, b_res, w_skip, b_skip)

    skips, resid = jax.block_until_ready(dilated_stack_forward(*args))
    skips_r, resid_r = jax.block_until_ready(dilated_stack_ref(*args))

    assert skips.shape == (DEPTH, BATCH, SKIP, T_LEN), skips.shape
    assert resid.shape == (BATCH, RES, T_LEN), resid.shape
    np.testing.assert_allclose(np.asarray(skips), np.asarray(skips_r),
                               rtol=2e-3, atol=2e-3)
    np.testing.assert_allclose(np.asarray(resid), np.asarray(resid_r),
                               rtol=2e-3, atol=2e-3)
    print("KERNEL_OK")
</pallas_src>

<mosaic_0001>
module attributes {stable_mosaic.version = 11 : i64} {
  func.func @dilated_stack_kernel(%arg0: memref<16x256xf32, #tpu.memory_space<vmem>>, %arg1: memref<3x32x48xf32, #tpu.memory_space<vmem>>, %arg2: memref<3x32x1xf32, #tpu.memory_space<vmem>>, %arg3: memref<3x32x1xf32, #tpu.memory_space<vmem>>, %arg4: memref<3x32x16xf32, #tpu.memory_space<vmem>>, %arg5: memref<3x32x1xf32, #tpu.memory_space<vmem>>, %arg6: memref<3x16x256xf32, #tpu.memory_space<vmem>>, %arg7: memref<16x256xf32, #tpu.memory_space<vmem>>) attributes {dimension_semantics = [], scalar_prefetch = 0 : i64, scratch_operands = 0 : i64, tpu.core_type = #tpu.core_type<tc>} {
    %c0 = arith.constant 0 : index
    %c0_0 = arith.constant 0 : index
    %0 = vector.load %arg0[%c0, %c0_0] : memref<16x256xf32, #tpu.memory_space<vmem>>, vector<16x256xf32>
    %1 = tpu.iota {dimensions = array<i32: 1>} : vector<16x256xi32>
    %c128_i32 = arith.constant 128 : i32
    %c0_i32 = arith.constant 0 : i32
    %2 = arith.cmpi eq, %c128_i32, %c0_i32 : i32
    %c1_i32 = arith.constant 1 : i32
    %3 = arith.select %2, %c1_i32, %c128_i32 : i32
    %4 = vector.broadcast %3 : i32 to vector<16x256xi32>
    %5 = arith.remsi %1, %4 : vector<16x256xi32>
    %c0_i32_1 = arith.constant 0 : i32
    %6 = vector.broadcast %c0_i32_1 : i32 to vector<16x256xi32>
    %7 = arith.cmpi ne, %5, %6 : vector<16x256xi32>
    %c0_i32_2 = arith.constant 0 : i32
    %8 = vector.broadcast %c0_i32_2 : i32 to vector<16x256xi32>
    %9 = arith.cmpi slt, %5, %8 : vector<16x256xi32>
    %c0_i32_3 = arith.constant 0 : i32
    %10 = arith.cmpi slt, %3, %c0_i32_3 : i32
    %11 = vector.broadcast %10 : i1 to vector<16x256xi1>
    %12 = vector.broadcast %11 : vector<16x256xi1> to vector<16x256xi1>
    %13 = arith.xori %9, %12 : vector<16x256xi1>
    %14 = arith.andi %13, %7 : vector<16x256xi1>
    %15 = vector.broadcast %3 : i32 to vector<16x256xi32>
    %16 = arith.addi %5, %15 : vector<16x256xi32>
    %17 = arith.select %14, %16, %5 : vector<16x256xi1>, vector<16x256xi32>
    %c2_i32 = arith.constant 2 : i32
    %18 = vector.broadcast %c2_i32 : i32 to vector<16x256xi32>
    %19 = arith.cmpi slt, %17, %18 : vector<16x256xi32>
    %c2_i32_4 = arith.constant 2 : i32
    %20 = tpu.dynamic_rotate %0 by %c2_i32_4 dim 1 : vector<16x256xf32>, i32 -> vector<16x256xf32>
    %cst = arith.constant 0.000000e+00 : f32
    %21 = vector.broadcast %cst : f32 to vector<16x256xf32>
    %22 = arith.select %19, %21, %20 : vector<16x256xi1>, vector<16x256xf32>
    %c1_i32_5 = arith.constant 1 : i32
    %23 = vector.broadcast %c1_i32_5 : i32 to vector<16x256xi32>
    %24 = arith.cmpi slt, %17, %23 : vector<16x256xi32>
    %c1_i32_6 = arith.constant 1 : i32
    %25 = tpu.dynamic_rotate %0 by %c1_i32_6 dim 1 : vector<16x256xf32>, i32 -> vector<16x256xf32>
    %cst_7 = arith.constant 0.000000e+00 : f32
    %26 = vector.broadcast %cst_7 : f32 to vector<16x256xf32>
    %27 = arith.select %24, %26, %25 : vector<16x256xi1>, vector<16x256xf32>
    %28 = tpu.concatenate %22, %27, %0 in 0 : vector<16x256xf32>, vector<16x256xf32>, vector<16x256xf32> -> vector<48x256xf32>
    %c0_8 = arith.constant 0 : index
    %c0_9 = arith.constant 0 : index
    %c0_10 = arith.constant 0 : index
    %29 = vector.load %arg1[%c0_8, %c0_9, %c0_10] : memref<3x32x48xf32, #tpu.memory_space<vmem>>, vector<1x32x48xf32>
    %30 = vector.shape_cast %29 : vector<1x32x48xf32> to vector<32x48xf32>
    %cst_11 = arith.constant dense<0.000000e+00> : vector<32x256xf32>
    %31 = tpu.matmul %30, %28, %cst_11 {dimension_numbers = #tpu.dot_dimension_numbers<[1], [0], [0], [1], [0, 0, 1, 1], [], []>, precision = #tpu.contract_precision<fp32>} : vector<32x48xf32>, vector<48x256xf32>, vector<32x256xf32> -> vector<32x256xf32>
    %cst_12 = arith.constant dense<0.000000e+00> : vector<32xf32>
    %32 = vector.multi_reduction <add>, %31, %cst_12 [1] : vector<32x256xf32> to vector<32xf32>
    %33 = vector.shape_cast %32 : vector<32xf32> to vector<32x1xf32>
    %cst_13 = arith.constant 2.560000e+02 : f32
    %34 = vector.broadcast %cst_13 : f32 to vector<32x1xf32>
    %35 = arith.divf %33, %34 : vector<32x1xf32>
    %36 = vector.broadcast %35 : vector<32x1xf32> to vector<32x256xf32>
    %37 = arith.subf %31, %36 : vector<32x256xf32>
    %38 = arith.mulf %37, %37 : vector<32x256xf32>
    %cst_14 = arith.constant dense<0.000000e+00> : vector<32xf32>
    %39 = vector.multi_reduction <add>, %38, %cst_14 [1] : vector<32x256xf32> to vector<32xf32>
    %40 = vector.shape_cast %39 : vector<32xf32> to vector<32x1xf32>
    %cst_15 = arith.constant 2.560000e+02 : f32
    %41 = vector.broadcast %cst_15 : f32 to vector<32x1xf32>
    %42 = arith.divf %40, %41 : vector<32x1xf32>
    %c0_16 = arith.constant 0 : index
    %c0_17 = arith.constant 0 : index
    %c0_18 = arith.constant 0 : index
    %43 = vector.load %arg2[%c0_16, %c0_17, %c0_18] : memref<3x32x1xf32, #tpu.memory_space<vmem>>, vector<1x32x1xf32>
    %44 = vector.shape_cast %43 : vector<1x32x1xf32> to vector<32x1xf32>
    %cst_19 = arith.constant 9.99999974E-6 : f32
    %45 = vector.broadcast %cst_19 : f32 to vector<32x1xf32>
    %46 = arith.addf %42, %45 : vector<32x1xf32>
    %47 = math.rsqrt %46 : vector<32x1xf32>
    %48 = arith.mulf %44, %47 : vector<32x1xf32>
    %49 = vector.broadcast %48 : vector<32x1xf32> to vector<32x256xf32>
    %50 = arith.mulf %37, %49 : vector<32x256xf32>
    %c0_20 = arith.constant 0 : index
    %c0_21 = arith.constant 0 : index
    %c0_22 = arith.constant 0 : index
    %51 = vector.load %arg3[%c0_20, %c0_21, %c0_22] : memref<3x32x1xf32, #tpu.memory_space<vmem>>, vector<1x32x1xf32>
    %52 = vector.shape_cast %51 : vector<1x32x1xf32> to vector<32x1xf32>
    %53 = vector.broadcast %52 : vector<32x1xf32> to vector<32x256xf32>
    %54 = arith.addf %50, %53 : vector<32x256xf32>
    %55 = vector.extract_strided_slice %54 {offsets = [0, 0], sizes = [16, 256], strides = [1, 1]} : vector<32x256xf32> to vector<16x256xf32>
    %56 = math.tanh %55 : vector<16x256xf32>
    %57 = vector.extract_strided_slice %54 {offsets = [16, 0], sizes = [16, 256], strides = [1, 1]} : vector<32x256xf32> to vector<16x256xf32>
    %cst_23 = arith.constant 0.000000e+00 : f32
    %58 = vector.broadcast %cst_23 : f32 to vector<16x256xf32>
    %59 = arith.subf %58, %57 : vector<16x256xf32>
    %60 = math.exp %59 : vector<16x256xf32>
    %cst_24 = arith.constant 1.000000e+00 : f32
    %61 = vector.broadcast %cst_24 : f32 to vector<16x256xf32>
    %62 = arith.addf %61, %60 : vector<16x256xf32>
    %cst_25 = arith.constant 1.000000e+00 : f32
    %63 = vector.broadcast %cst_25 : f32 to vector<16x256xf32>
    %64 = arith.divf %63, %62 : vector<16x256xf32>
    %65 = arith.mulf %56, %64 : vector<16x256xf32>
    %c0_26 = arith.constant 0 : index
    %c0_27 = arith.constant 0 : index
    %c0_28 = arith.constant 0 : index
    %66 = vector.load %arg4[%c0_26, %c0_27, %c0_28] : memref<3x32x16xf32, #tpu.memory_space<vmem>>, vector<1x32x16xf32>
    %67 = vector.shape_cast %66 : vector<1x32x16xf32> to vector<32x16xf32>
    %cst_29 = arith.constant dense<0.000000e+00> : vector<32x256xf32>
    %68 = tpu.matmul %67, %65, %cst_29 {dimension_numbers = #tpu.dot_dimension_numbers<[1], [0], [0], [1], [0, 0, 1, 1], [], []>, precision = #tpu.contract_precision<fp32>} : vector<32x16xf32>, vector<16x256xf32>, vector<32x256xf32> -> vector<32x256xf32>
    %c0_30 = arith.constant 0 : index
    %c0_31 = arith.constant 0 : index
    %c0_32 = arith.constant 0 : index
    %69 = vector.load %arg5[%c0_30, %c0_31, %c0_32] : memref<3x32x1xf32, #tpu.memory_space<vmem>>, vector<1x32x1xf32>
    %70 = vector.shape_cast %69 : vector<1x32x1xf32> to vector<32x1xf32>
    %71 = vector.broadcast %70 : vector<32x1xf32> to vector<32x256xf32>
    %72 = arith.addf %68, %71 : vector<32x256xf32>
    %73 = vector.extract_strided_slice %72 {offsets = [16, 0], sizes = [16, 256], strides = [1, 1]} : vector<32x256xf32> to vector<16x256xf32>
    %c0_33 = arith.constant 0 : index
    %c0_34 = arith.constant 0 : index
    %c0_35 = arith.constant 0 : index
    %74 = vector.load %arg6[%c0_33, %c0_34, %c0_35] : memref<3x16x256xf32, #tpu.memory_space<vmem>>, vector<1x16x256xf32>
    %75 = vector.shape_cast %74 : vector<1x16x256xf32> to vector<16x256xf32>
    %76 = vector.shape_cast %73 : vector<16x256xf32> to vector<1x16x256xf32>
    tpu.vector_store %arg6[%c0_33, %c0_34, %c0_35], %76 {strides = array<i32>} : memref<3x16x256xf32, #tpu.memory_space<vmem>>, vector<1x16x256xf32>,
    %77 = vector.extract_strided_slice %72 {offsets = [0, 0], sizes = [16, 256], strides = [1, 1]} : vector<32x256xf32> to vector<16x256xf32>
    %78 = arith.addf %77, %0 : vector<16x256xf32>
    %c4_i32 = arith.constant 4 : i32
    %79 = vector.broadcast %c4_i32 : i32 to vector<16x256xi32>
    %80 = arith.cmpi slt, %17, %79 : vector<16x256xi32>
    %c4_i32_36 = arith.constant 4 : i32
    %81 = tpu.dynamic_rotate %78 by %c4_i32_36 dim 1 : vector<16x256xf32>, i32 -> vector<16x256xf32>
    %cst_37 = arith.constant 0.000000e+00 : f32
    %82 = vector.broadcast %cst_37 : f32 to vector<16x256xf32>
    %83 = arith.select %80, %82, %81 : vector<16x256xi1>, vector<16x256xf32>
    %c2_i32_38 = arith.constant 2 : i32
    %84 = vector.broadcast %c2_i32_38 : i32 to vector<16x256xi32>
    %85 = arith.cmpi slt, %17, %84 : vector<16x256xi32>
    %c2_i32_39 = arith.constant 2 : i32
    %86 = tpu.dynamic_rotate %78 by %c2_i32_39 dim 1 : vector<16x256xf32>, i32 -> vector<16x256xf32>
    %cst_40 = arith.constant 0.000000e+00 : f32
    %87 = vector.broadcast %cst_40 : f32 to vector<16x256xf32>
    %88 = arith.select %85, %87, %86 : vector<16x256xi1>, vector<16x256xf32>
    %89 = tpu.concatenate %83, %88, %78 in 0 : vector<16x256xf32>, vector<16x256xf32>, vector<16x256xf32> -> vector<48x256xf32>
    %c1 = arith.constant 1 : index
    %c0_41 = arith.constant 0 : index
    %c0_42 = arith.constant 0 : index
    %90 = vector.load %arg1[%c1, %c0_41, %c0_42] : memref<3x32x48xf32, #tpu.memory_space<vmem>>, vector<1x32x48xf32>
    %91 = vector.shape_cast %90 : vector<1x32x48xf32> to vector<32x48xf32>
    %cst_43 = arith.constant dense<0.000000e+00> : vector<32x256xf32>
    %92 = tpu.matmul %91, %89, %cst_43 {dimension_numbers = #tpu.dot_dimension_numbers<[1], [0], [0], [1], [0, 0, 1, 1], [], []>, precision = #tpu.contract_precision<fp32>} : vector<32x48xf32>, vector<48x256xf32>, vector<32x256xf32> -> vector<32x256xf32>
    %cst_44 = arith.constant dense<0.000000e+00> : vector<32xf32>
    %93 = vector.multi_reduction <add>, %92, %cst_44 [1] : vector<32x256xf32> to vector<32xf32>
    %94 = vector.shape_cast %93 : vector<32xf32> to vector<32x1xf32>
    %cst_45 = arith.constant 2.560000e+02 : f32
    %95 = vector.broadcast %cst_45 : f32 to vector<32x1xf32>
    %96 = arith.divf %94, %95 : vector<32x1xf32>
    %97 = vector.broadcast %96 : vector<32x1xf32> to vector<32x256xf32>
    %98 = arith.subf %92, %97 : vector<32x256xf32>
    %99 = arith.mulf %98, %98 : vector<32x256xf32>
    %cst_46 = arith.constant dense<0.000000e+00> : vector<32xf32>
    %100 = vector.multi_reduction <add>, %99, %cst_46 [1] : vector<32x256xf32> to vector<32xf32>
    %101 = vector.shape_cast %100 : vector<32xf32> to vector<32x1xf32>
    %cst_47 = arith.constant 2.560000e+02 : f32
    %102 = vector.broadcast %cst_47 : f32 to vector<32x1xf32>
    %103 = arith.divf %101, %102 : vector<32x1xf32>
    %c1_48 = arith.constant 1 : index
    %c0_49 = arith.constant 0 : index
    %c0_50 = arith.constant 0 : index
    %104 = vector.load %arg2[%c1_48, %c0_49, %c0_50] : memref<3x32x1xf32, #tpu.memory_space<vmem>>, vector<1x32x1xf32>
    %105 = vector.shape_cast %104 : vector<1x32x1xf32> to vector<32x1xf32>
    %cst_51 = arith.constant 9.99999974E-6 : f32
    %106 = vector.broadcast %cst_51 : f32 to vector<32x1xf32>
    %107 = arith.addf %103, %106 : vector<32x1xf32>
    %108 = math.rsqrt %107 : vector<32x1xf32>
    %109 = arith.mulf %105, %108 : vector<32x1xf32>
    %110 = vector.broadcast %109 : vector<32x1xf32> to vector<32x256xf32>
    %111 = arith.mulf %98, %110 : vector<32x256xf32>
    %c1_52 = arith.constant 1 : index
    %c0_53 = arith.constant 0 : index
    %c0_54 = arith.constant 0 : index
    %112 = vector.load %arg3[%c1_52, %c0_53, %c0_54] : memref<3x32x1xf32, #tpu.memory_space<vmem>>, vector<1x32x1xf32>
    %113 = vector.shape_cast %112 : vector<1x32x1xf32> to vector<32x1xf32>
    %114 = vector.broadcast %113 : vector<32x1xf32> to vector<32x256xf32>
    %115 = arith.addf %111, %114 : vector<32x256xf32>
    %116 = vector.extract_strided_slice %115 {offsets = [0, 0], sizes = [16, 256], strides = [1, 1]} : vector<32x256xf32> to vector<16x256xf32>
    %117 = math.tanh %116 : vector<16x256xf32>
    %118 = vector.extract_strided_slice %115 {offsets = [16, 0], sizes = [16, 256], strides = [1, 1]} : vector<32x256xf32> to vector<16x256xf32>
    %cst_55 = arith.constant 0.000000e+00 : f32
    %119 = vector.broadcast %cst_55 : f32 to vector<16x256xf32>
    %120 = arith.subf %119, %118 : vector<16x256xf32>
    %121 = math.exp %120 : vector<16x256xf32>
    %cst_56 = arith.constant 1.000000e+00 : f32
    %122 = vector.broadcast %cst_56 : f32 to vector<16x256xf32>
    %123 = arith.addf %122, %121 : vector<16x256xf32>
    %cst_57 = arith.constant 1.000000e+00 : f32
    %124 = vector.broadcast %cst_57 : f32 to vector<16x256xf32>
    %125 = arith.divf %124, %123 : vector<16x256xf32>
    %126 = arith.mulf %117, %125 : vector<16x256xf32>
    %c1_58 = arith.constant 1 : index
    %c0_59 = arith.constant 0 : index
    %c0_60 = arith.constant 0 : index
    %127 = vector.load %arg4[%c1_58, %c0_59, %c0_60] : memref<3x32x16xf32, #tpu.memory_space<vmem>>, vector<1x32x16xf32>
    %128 = vector.shape_cast %127 : vector<1x32x16xf32> to vector<32x16xf32>
    %cst_61 = arith.constant dense<0.000000e+00> : vector<32x256xf32>
    %129 = tpu.matmul %128, %126, %cst_61 {dimension_numbers = #tpu.dot_dimension_numbers<[1], [0], [0], [1], [0, 0, 1, 1], [], []>, precision = #tpu.contract_precision<fp32>} : vector<32x16xf32>, vector<16x256xf32>, vector<32x256xf32> -> vector<32x256xf32>
    %c1_62 = arith.constant 1 : index
    %c0_63 = arith.constant 0 : index
    %c0_64 = arith.constant 0 : index
    %130 = vector.load %arg5[%c1_62, %c0_63, %c0_64] : memref<3x32x1xf32, #tpu.memory_space<vmem>>, vector<1x32x1xf32>
    %131 = vector.shape_cast %130 : vector<1x32x1xf32> to vector<32x1xf32>
    %132 = vector.broadcast %131 : vector<32x1xf32> to vector<32x256xf32>
    %133 = arith.addf %129, %132 : vector<32x256xf32>
    %134 = vector.extract_strided_slice %133 {offsets = [16, 0], sizes = [16, 256], strides = [1, 1]} : vector<32x256xf32> to vector<16x256xf32>
    %c1_65 = arith.constant 1 : index
    %c0_66 = arith.constant 0 : index
    %c0_67 = arith.constant 0 : index
    %135 = vector.load %arg6[%c1_65, %c0_66, %c0_67] : memref<3x16x256xf32, #tpu.memory_space<vmem>>, vector<1x16x256xf32>
    %136 = vector.shape_cast %135 : vector<1x16x256xf32> to vector<16x256xf32>
    %137 = vector.shape_cast %134 : vector<16x256xf32> to vector<1x16x256xf32>
    tpu.vector_store %arg6[%c1_65, %c0_66, %c0_67], %137 {strides = array<i32>} : memref<3x16x256xf32, #tpu.memory_space<vmem>>, vector<1x16x256xf32>,
    %138 = vector.extract_strided_slice %133 {offsets = [0, 0], sizes = [16, 256], strides = [1, 1]} : vector<32x256xf32> to vector<16x256xf32>
    %139 = arith.addf %138, %78 : vector<16x256xf32>
    %c8_i32 = arith.constant 8 : i32
    %140 = vector.broadcast %c8_i32 : i32 to vector<16x256xi32>
    %141 = arith.cmpi slt, %17, %140 : vector<16x256xi32>
    %c8_i32_68 = arith.constant 8 : i32
    %142 = tpu.dynamic_rotate %139 by %c8_i32_68 dim 1 : vector<16x256xf32>, i32 -> vector<16x256xf32>
    %cst_69 = arith.constant 0.000000e+00 : f32
    %143 = vector.broadcast %cst_69 : f32 to vector<16x256xf32>
    %144 = arith.select %141, %143, %142 : vector<16x256xi1>, vector<16x256xf32>
    %c4_i32_70 = arith.constant 4 : i32
    %145 = vector.broadcast %c4_i32_70 : i32 to vector<16x256xi32>
    %146 = arith.cmpi slt, %17, %145 : vector<16x256xi32>
    %c4_i32_71 = arith.constant 4 : i32
    %147 = tpu.dynamic_rotate %139 by %c4_i32_71 dim 1 : vector<16x256xf32>, i32 -> vector<16x256xf32>
    %cst_72 = arith.constant 0.000000e+00 : f32
    %148 = vector.broadcast %cst_72 : f32 to vector<16x256xf32>
    %149 = arith.select %146, %148, %147 : vector<16x256xi1>, vector<16x256xf32>
    %150 = tpu.concatenate %144, %149, %139 in 0 : vector<16x256xf32>, vector<16x256xf32>, vector<16x256xf32> -> vector<48x256xf32>
    %c2 = arith.constant 2 : index
    %c0_73 = arith.constant 0 : index
    %c0_74 = arith.constant 0 : index
    %151 = vector.load %arg1[%c2, %c0_73, %c0_74] : memref<3x32x48xf32, #tpu.memory_space<vmem>>, vector<1x32x48xf32>
    %152 = vector.shape_cast %151 : vector<1x32x48xf32> to vector<32x48xf32>
    %cst_75 = arith.constant dense<0.000000e+00> : vector<32x256xf32>
    %153 = tpu.matmul %152, %150, %cst_75 {dimension_numbers = #tpu.dot_dimension_numbers<[1], [0], [0], [1], [0, 0, 1, 1], [], []>, precision = #tpu.contract_precision<fp32>} : vector<32x48xf32>, vector<48x256xf32>, vector<32x256xf32> -> vector<32x256xf32>
    %cst_76 = arith.constant dense<0.000000e+00> : vector<32xf32>
    %154 = vector.multi_reduction <add>, %153, %cst_76 [1] : vector<32x256xf32> to vector<32xf32>
    %155 = vector.shape_cast %154 : vector<32xf32> to vector<32x1xf32>
    %cst_77 = arith.constant 2.560000e+02 : f32
    %156 = vector.broadcast %cst_77 : f32 to vector<32x1xf32>
    %157 = arith.divf %155, %156 : vector<32x1xf32>
    %158 = vector.broadcast %157 : vector<32x1xf32> to vector<32x256xf32>
    %159 = arith.subf %153, %158 : vector<32x256xf32>
    %160 = arith.mulf %159, %159 : vector<32x256xf32>
    %cst_78 = arith.constant dense<0.000000e+00> : vector<32xf32>
    %161 = vector.multi_reduction <add>, %160, %cst_78 [1] : vector<32x256xf32> to vector<32xf32>
    %162 = vector.shape_cast %161 : vector<32xf32> to vector<32x1xf32>
    %cst_79 = arith.constant 2.560000e+02 : f32
    %163 = vector.broadcast %cst_79 : f32 to vector<32x1xf32>
    %164 = arith.divf %162, %163 : vector<32x1xf32>
    %c2_80 = arith.constant 2 : index
    %c0_81 = arith.constant 0 : index
    %c0_82 = arith.constant 0 : index
    %165 = vector.load %arg2[%c2_80, %c0_81, %c0_82] : memref<3x32x1xf32, #tpu.memory_space<vmem>>, vector<1x32x1xf32>
    %166 = vector.shape_cast %165 : vector<1x32x1xf32> to vector<32x1xf32>
    %cst_83 = arith.constant 9.99999974E-6 : f32
    %167 = vector.broadcast %cst_83 : f32 to vector<32x1xf32>
    %168 = arith.addf %164, %167 : vector<32x1xf32>
    %169 = math.rsqrt %168 : vector<32x1xf32>
    %170 = arith.mulf %166, %169 : vector<32x1xf32>
    %171 = vector.broadcast %170 : vector<32x1xf32> to vector<32x256xf32>
    %172 = arith.mulf %159, %171 : vector<32x256xf32>
    %c2_84 = arith.constant 2 : index
    %c0_85 = arith.constant 0 : index
    %c0_86 = arith.constant 0 : index
    %173 = vector.load %arg3[%c2_84, %c0_85, %c0_86] : memref<3x32x1xf32, #tpu.memory_space<vmem>>, vector<1x32x1xf32>
    %174 = vector.shape_cast %173 : vector<1x32x1xf32> to vector<32x1xf32>
    %175 = vector.broadcast %174 : vector<32x1xf32> to vector<32x256xf32>
    %176 = arith.addf %172, %175 : vector<32x256xf32>
    %177 = vector.extract_strided_slice %176 {offsets = [0, 0], sizes = [16, 256], strides = [1, 1]} : vector<32x256xf32> to vector<16x256xf32>
    %178 = math.tanh %177 : vector<16x256xf32>
    %179 = vector.extract_strided_slice %176 {offsets = [16, 0], sizes = [16, 256], strides = [1, 1]} : vector<32x256xf32> to vector<16x256xf32>
    %cst_87 = arith.constant 0.000000e+00 : f32
    %180 = vector.broadcast %cst_87 : f32 to vector<16x256xf32>
    %181 = arith.subf %180, %179 : vector<16x256xf32>
    %182 = math.exp %181 : vector<16x256xf32>
    %cst_88 = arith.constant 1.000000e+00 : f32
    %183 = vector.broadcast %cst_88 : f32 to vector<16x256xf32>
    %184 = arith.addf %183, %182 : vector<16x256xf32>
    %cst_89 = arith.constant 1.000000e+00 : f32
    %185 = vector.broadcast %cst_89 : f32 to vector<16x256xf32>
    %186 = arith.divf %185, %184 : vector<16x256xf32>
    %187 = arith.mulf %178, %186 : vector<16x256xf32>
    %c2_90 = arith.constant 2 : index
    %c0_91 = arith.constant 0 : index
    %c0_92 = arith.constant 0 : index
    %188 = vector.load %arg4[%c2_90, %c0_91, %c0_92] : memref<3x32x16xf32, #tpu.memory_space<vmem>>, vector<1x32x16xf32>
    %189 = vector.shape_cast %188 : vector<1x32x16xf32> to vector<32x16xf32>
    %cst_93 = arith.constant dense<0.000000e+00> : vector<32x256xf32>
    %190 = tpu.matmul %189, %187, %cst_93 {dimension_numbers = #tpu.dot_dimension_numbers<[1], [0], [0], [1], [0, 0, 1, 1], [], []>, precision = #tpu.contract_precision<fp32>} : vector<32x16xf32>, vector<16x256xf32>, vector<32x256xf32> -> vector<32x256xf32>
    %c2_94 = arith.constant 2 : index
    %c0_95 = arith.constant 0 : index
    %c0_96 = arith.constant 0 : index
    %191 = vector.load %arg5[%c2_94, %c0_95, %c0_96] : memref<3x32x1xf32, #tpu.memory_space<vmem>>, vector<1x32x1xf32>
    %192 = vector.shape_cast %191 : vector<1x32x1xf32> to vector<32x1xf32>
    %193 = vector.broadcast %192 : vector<32x1xf32> to vector<32x256xf32>
    %194 = arith.addf %190, %193 : vector<32x256xf32>
    %195 = vector.extract_strided_slice %194 {offsets = [16, 0], sizes = [16, 256], strides = [1, 1]} : vector<32x256xf32> to vector<16x256xf32>
    %c2_97 = arith.constant 2 : index
    %c0_98 = arith.constant 0 : index
    %c0_99 = arith.constant 0 : index
    %196 = vector.load %arg6[%c2_97, %c0_98, %c0_99] : memref<3x16x256xf32, #tpu.memory_space<vmem>>, vector<1x16x256xf32>
    %197 = vector.shape_cast %196 : vector<1x16x256xf32> to vector<16x256xf32>
    %198 = vector.shape_cast %195 : vector<16x256xf32> to vector<1x16x256xf32>
    tpu.vector_store %arg6[%c2_97, %c0_98, %c0_99], %198 {strides = array<i32>} : memref<3x16x256xf32, #tpu.memory_space<vmem>>, vector<1x16x256xf32>,
    %199 = vector.extract_strided_slice %194 {offsets = [0, 0], sizes = [16, 256], strides = [1, 1]} : vector<32x256xf32> to vector<16x256xf32>
    %200 = arith.addf %199, %139 : vector<16x256xf32>
    %c0_100 = arith.constant 0 : index
    %c0_101 = arith.constant 0 : index
    %201 = vector.load %arg7[%c0_100, %c0_101] : memref<16x256xf32, #tpu.memory_space<vmem>>, vector<16x256xf32>
    tpu.vector_store %arg7[%c0_100, %c0_101], %200 {strides = array<i32>} : memref<16x256xf32, #tpu.memory_space<vmem>>, vector<16x256xf32>,
    return
  }
}

</mosaic_0001>

<llo_original>
// kernel: dilated_stack_forward.1
$region0: #{dilated_stack_forward.1}
  #allocation0 [shape = 'u32[]', space=smem, size = 0x4, offset = 0x4, fixed_abs, tag = 'smem constant byte address 0x4 - core index']
  #allocation1 [shape = 'u32[72,128]{1,0:T(1,128)}', space=vmem, size = 0x9000, scoped, tag = 'internal scratch']
  %s0 = inlined_call_operand.vmem [shape: f32[16,256], index: 0, kind: input, shape index: {}]
  %s1 = inlined_call_operand.vmem [shape: f32[3,32,48], index: 1, kind: input, shape index: {}]
  %s2 = inlined_call_operand.vmem [shape: f32[3,32,1], index: 2, kind: input, shape index: {}]
  %s3 = inlined_call_operand.vmem [shape: f32[3,32,1], index: 3, kind: input, shape index: {}]
  %s4 = inlined_call_operand.vmem [shape: f32[3,32,16], index: 4, kind: input, shape index: {}]
  %s5 = inlined_call_operand.vmem [shape: f32[3,32,1], index: 5, kind: input, shape index: {}]
  %s6 = inlined_call_operand.vmem [shape: f32[3,16,256], index: 6, kind: output, shape index: {0}]
  %s7 = inlined_call_operand.vmem [shape: f32[16,256], index: 7, kind: output, shape index: {1}]
  %8 = xla_tuple %s6, %s7
  %s9 = sld [smem:[#allocation0]]
  $region42: #{dilated_stack_forward.1} parent=0
    _
  %s11 = ssub.s32 1, %s9
  %s12 = scalar_select 0, %s11, %s9
  // Predicated region
  $region2: #{dilated_stack_forward.1} parent=0 // pred_check
    _
  $region3: #{dilated_stack_forward.1} parent=0 // pred_check_branch
    %14 = sbr.rel (0) target = $region5
  $region4: #{dilated_stack_forward.1} parent=0 // pred_region
    _
  $region5: #{dilated_stack_forward.1} parent=0 // pred_fallthru
    _
  // Predicated region
  $region6: #{dilated_stack_forward.1} parent=0 // pred_check
    _
  $region7: #{dilated_stack_forward.1} parent=0 // pred_check_branch
    %16 = sbr.rel (0) target = $region9
  $region8: #{dilated_stack_forward.1} parent=0 // pred_region
    _
  $region9: #{dilated_stack_forward.1} parent=0 // pred_fallthru
    _
  // Predicated region
  $region10: #{dilated_stack_forward.1} parent=0 // pred_check
    _
  $region11: #{dilated_stack_forward.1} parent=0 // pred_check_branch
    %18 = sbr.rel (0) target = $region13
  $region12: #{dilated_stack_forward.1} parent=0 // pred_region
    _
  $region13: #{dilated_stack_forward.1} parent=0 // pred_fallthru
    _
  // Predicated region
  $region14: #{dilated_stack_forward.1} parent=0 // pred_check
    _
  $region15: #{dilated_stack_forward.1} parent=0 // pred_check_branch
    %20 = sbr.rel (0) target = $region17
  $region16: #{dilated_stack_forward.1} parent=0 // pred_region
    _
  $region17: #{dilated_stack_forward.1} parent=0 // pred_fallthru
    _
  // Predicated region
  $region18: #{dilated_stack_forward.1} parent=0 // pred_check
    _
  $region19: #{dilated_stack_forward.1} parent=0 // pred_check_branch
    %22 = sbr.rel (0) target = $region21
  $region20: #{dilated_stack_forward.1} parent=0 // pred_region
    _
  $region21: #{dilated_stack_forward.1} parent=0 // pred_fallthru
    _
  // Predicated region
  $region22: #{dilated_stack_forward.1} parent=0 // pred_check
    _
  $region23: #{dilated_stack_forward.1} parent=0 // pred_check_branch
    %24 = sbr.rel (0) target = $region25
  $region24: #{dilated_stack_forward.1} parent=0 // pred_region
    _
  $region25: #{dilated_stack_forward.1} parent=0 // pred_fallthru
    _
  %v25 = vld [vmem:[%s0] sm:$0xff]
  %v26 = vld [vmem:[%s0 + $0x8] sm:$0xff]
  %v27 = vld [vmem:[%s0 + $0x10] sm:$0xff]
  %v28 = vld [vmem:[%s0 + $0x18] sm:$0xff]
  %v29 = vlaneseq
  %v30 = vand.u32 %v29, 127
  %v31 = vadd.s32 %v30, 128
  %vm32 = vcmp.lt.s32.totalorder %v30, 0
  %v33 = vsub.s32 0, %v30
  %v34 = vsel %vm32, %v33, %v30
  %v35 = vshrl.u32 %v34, 7
  %v36 = vand.u32 %v34, 127
  %v37 = vsub.s32 0, %v36
  %v38 = vsel %vm32, %v37, %v36
  %vm39 = vcmp.lt.s32.totalorder %v31, 0
  %v40 = vsub.s32 0, %v31
  %v41 = vsel %vm39, %v40, %v31
  %v42 = vshrl.u32 %v41, 7
  %v43 = vand.u32 %v41, 127
  %v44 = vsub.s32 0, %v43
  %v45 = vsel %vm39, %v44, %v43
  %vm46 = vcmp.ne.s32.totalorder %v38, 0
  %vm47 = vcmp.ne.s32.totalorder %v45, 0
  %vm48 = vcmp.lt.s32.totalorder %v38, 0
  %vm49 = vcmp.lt.s32.totalorder %v45, 0
  %vm50 = vmand %vm48, %vm46
  %vm51 = vmand %vm49, %vm47
  %v52 = vadd.s32 %v38, 128
  %v53 = vadd.s32 %v45, 128
  %v54 = vsel %vm50, %v52, %v38
  %v55 = vsel %vm51, %v53, %v45
  %vm56 = vcmp.lt.s32.totalorder %v54, 2
  %vm57 = vcmp.lt.s32.totalorder %v55, 2
  %58 = vrot.lane.b32.xlu0 %v25, 2
  %v59 = vpop.permute.xlu0 %58
  %60 = vrot.lane.b32.xlu0 %v27, 2
  %v61 = vpop.permute.xlu0 %60
  %62 = vrot.lane.b32.xlu0 %v26, 2
  %v63 = vpop.permute.xlu0 %62
  %64 = vrot.lane.b32.xlu0 %v28, 2
  %v65 = vpop.permute.xlu0 %64
  %vm66 = vcmp.lt.s32.totalorder %v30, 2
  %v67 = vsel %vm66, %v59, %v63
  %v68 = vsel %vm66, %v61, %v65
  %v69 = vsel %vm66, %v63, %v59
  %v70 = vsel %vm66, %v65, %v61
  %v71 = vsel %vm56, 0.0, %v69
  %v72 = vsel %vm57, 0.0, %v67
  %v73 = vsel %vm56, 0.0, %v70
  %v74 = vsel %vm57, 0.0, %v68
  %vm75 = vcmp.lt.s32.totalorder %v54, 1
  %vm76 = vcmp.lt.s32.totalorder %v55, 1
  %77 = vrot.lane.b32.xlu0 %v25, 1
  %v78 = vpop.permute.xlu0 %77
  %79 = vrot.lane.b32.xlu0 %v27, 1
  %v80 = vpop.permute.xlu0 %79
  %81 = vrot.lane.b32.xlu0 %v26, 1
  %v82 = vpop.permute.xlu0 %81
  %83 = vrot.lane.b32.xlu0 %v28, 1
  %v84 = vpop.permute.xlu0 %83
  %vm85 = vcmp.lt.s32.totalorder %v30, 1
  %v86 = vsel %vm85, %v78, %v82
  %v87 = vsel %vm85, %v80, %v84
  %v88 = vsel %vm85, %v82, %v78
  %v89 = vsel %vm85, %v84, %v80
  %v90 = vsel %vm75, 0.0, %v88
  %v91 = vsel %vm76, 0.0, %v86
  %v92 = vsel %vm75, 0.0, %v89
  %v93 = vsel %vm76, 0.0, %v87
  %v94 = vld [vmem:[%s1] sm:$0xff]
  %v95 = vld [vmem:[%s1 + $0x8] sm:$0xff]
  %v96 = vld [vmem:[%s1 + $0x10] sm:$0xff]
  %v97 = vld [vmem:[%s1 + $0x18] sm:$0xff]
  %vm98 = vcmask 392192
  %v100 = vsel %vm98, %v94, 0
  %v103 = vsel %vm98, %v95, 0
  %v106 = vsel %vm98, %v96, 0
  %v109 = vsel %vm98, %v97, 0
  %111 = vmatpush.msra.mxu0 0.0
  %112 = vmatpush.msra.mxu0 0.0
  %113 = vmatpush.msra.mxu0 0.0
  %114 = vmatpush.msra.mxu0 0.0
  %115 = vmatpush.msra.mxu0 0.0
  %116 = vmatpush.msra.mxu0 0.0
  %117 = vmatpush.msra.mxu0 0.0
  %118 = vmatpush.msra.mxu0 0.0
  %119 = vmatpush.msra.mxu0 0.0
  %120 = vmatpush.msra.mxu0 0.0
  %v121 = vand.u32 %v27, 4294901760
  %122 = vmatpush.msra.mxu0 %v121
  %v123 = vand.u32 %v25, 4294901760
  %124 = vmatpush.msra.mxu0 %v123
  %v125 = vand.u32 %v92, 4294901760
  %126 = vmatpush.msra.mxu0 %v125
  %v127 = vand.u32 %v90, 4294901760
  %128 = vmatpush.msra.mxu0 %v127
  %v129 = vand.u32 %v73, 4294901760
  %130 = vmatpush.msra.mxu0 %v129
  %v131 = vand.u32 %v71, 4294901760
  %132 = vmatpush.msra.mxu0 %v131
  %v133 = vand.u32 %v100, 4294901760
  %v134 = vsub.f32 %v100, %v133
  %v135 = vand.u32 %v134, 4294901760
  %v136 = vsub.f32 %v134, %v135
  %v137 = vand.u32 %v136, 4294901760
  %138 = vmatmul.f32.gmra.mxu0 %v137
  %v139 = vpop.f32.mrf.mxu0
  %v140 = vadd.f32 0.0, %v139
  %v141 = vand.u32 %v103, 4294901760
  %v142 = vsub.f32 %v103, %v141
  %v143 = vand.u32 %v142, 4294901760
  %v144 = vsub.f32 %v142, %v143
  %v145 = vand.u32 %v144, 4294901760
  %146 = vmatmul.f32.gmra.mxu0 %v145
  %v147 = vpop.f32.mrf.mxu0
  %v148 = vadd.f32 0.0, %v147
  %v149 = vand.u32 %v106, 4294901760
  %v150 = vsub.f32 %v106, %v149
  %v151 = vand.u32 %v150, 4294901760
  %v152 = vsub.f32 %v150, %v151
  %v153 = vand.u32 %v152, 4294901760
  %154 = vmatmul.f32.gmra.mxu0 %v153
  %v155 = vpop.f32.mrf.mxu0
  %v156 = vadd.f32 0.0, %v155
  %v157 = vand.u32 %v109, 4294901760
  %v158 = vsub.f32 %v109, %v157
  %v159 = vand.u32 %v158, 4294901760
  %v160 = vsub.f32 %v158, %v159
  %v161 = vand.u32 %v160, 4294901760
  %162 = vmatmul.f32.gmra.mxu0 %v161
  %v163 = vpop.f32.mrf.mxu0
  %v164 = vadd.f32 0.0, %v163
  %165 = vdwg.mxu0
  %166 = vmatpush.msra.mxu0 0.0
  %167 = vmatpush.msra.mxu0 0.0
  %168 = vmatpush.msra.mxu0 0.0
  %169 = vmatpush.msra.mxu0 0.0
  %170 = vmatpush.msra.mxu0 0.0
  %171 = vmatpush.msra.mxu0 0.0
  %172 = vmatpush.msra.mxu0 0.0
  %173 = vmatpush.msra.mxu0 0.0
  %174 = vmatpush.msra.mxu0 0.0
  %175 = vmatpush.msra.mxu0 0.0
  %v176 = vand.u32 %v27, 4294901760
  %v177 = vsub.f32 %v27, %v176
  %v178 = vand.u32 %v177, 4294901760
  %v179 = vsub.f32 %v177, %v178
  %v180 = vand.u32 %v179, 4294901760
  %181 = vmatpush.msra.mxu0 %v180
  %v182 = vand.u32 %v25, 4294901760
  %v183 = vsub.f32 %v25, %v182
  %v184 = vand.u32 %v183, 4294901760
  %v185 = vsub.f32 %v183, %v184
  %v186 = vand.u32 %v185, 4294901760
  %187 = vmatpush.msra.mxu0 %v186
  %v188 = vand.u32 %v92, 4294901760
  %v189 = vsub.f32 %v92, %v188
  %v190 = vand.u32 %v189, 4294901760
  %v191 = vsub.f32 %v189, %v190
  %v192 = vand.u32 %v191, 4294901760
  %193 = vmatpush.msra.mxu0 %v192
  %v194 = vand.u32 %v90, 4294901760
  %v195 = vsub.f32 %v90, %v194
  %v196 = vand.u32 %v195, 4294901760
  %v197 = vsub.f32 %v195, %v196
  %v198 = vand.u32 %v197, 4294901760
  %199 = vmatpush.msra.mxu0 %v198
  %v200 = vand.u32 %v73, 4294901760
  %v201 = vsub.f32 %v73, %v200
  %v202 = vand.u32 %v201, 4294901760
  %v203 = vsub.f32 %v201, %v202
  %v204 = vand.u32 %v203, 4294901760
  %205 = vmatpush.msra.mxu0 %v204
  %v206 = vand.u32 %v71, 4294901760
  %v207 = vsub.f32 %v71, %v206
  %v208 = vand.u32 %v207, 4294901760
  %v209 = vsub.f32 %v207, %v208
  %v210 = vand.u32 %v209, 4294901760
  %211 = vmatpush.msra.mxu0 %v210
  %v212 = vand.u32 %v100, 4294901760
  %213 = vmatmul.f32.gmra.mxu0 %v212
  %v214 = vpop.f32.mrf.mxu0
  %v215 = vadd.f32 %v140, %v214
  %v216 = vand.u32 %v103, 4294901760
  %217 = vmatmul.f32.gmra.mxu0 %v216
  %v218 = vpop.f32.mrf.mxu0
  %v219 = vadd.f32 %v148, %v218
  %v220 = vand.u32 %v106, 4294901760
  %221 = vmatmul.f32.gmra.mxu0 %v220
  %v222 = vpop.f32.mrf.mxu0
  %v223 = vadd.f32 %v156, %v222
  %v224 = vand.u32 %v109, 4294901760
  %225 = vmatmul.f32.gmra.mxu0 %v224
  %v226 = vpop.f32.mrf.mxu0
  %v227 = vadd.f32 %v164, %v226
  %228 = vdwg.mxu0
  %229 = vmatpush.msra.mxu0 0.0
  %230 = vmatpush.msra.mxu0 0.0
  %231 = vmatpush.msra.mxu0 0.0
  %232 = vmatpush.msra.mxu0 0.0
  %233 = vmatpush.msra.mxu0 0.0
  %234 = vmatpush.msra.mxu0 0.0
  %235 = vmatpush.msra.mxu0 0.0
  %236 = vmatpush.msra.mxu0 0.0
  %237 = vmatpush.msra.mxu0 0.0
  %238 = vmatpush.msra.mxu0 0.0
  %v239 = vand.u32 %v27, 4294901760
  %v240 = vsub.f32 %v27, %v239
  %241 = vmatpush.msra.mxu0 %v240
  %v242 = vand.u32 %v25, 4294901760
  %v243 = vsub.f32 %v25, %v242
  %244 = vmatpush.msra.mxu0 %v243
  %v245 = vand.u32 %v92, 4294901760
  %v246 = vsub.f32 %v92, %v245
  %247 = vmatpush.msra.mxu0 %v246
  %v248 = vand.u32 %v90, 4294901760
  %v249 = vsub.f32 %v90, %v248
  %250 = vmatpush.msra.mxu0 %v249
  %v251 = vand.u32 %v73, 4294901760
  %v252 = vsub.f32 %v73, %v251
  %253 = vmatpush.msra.mxu0 %v252
  %v254 = vand.u32 %v71, 4294901760
  %v255 = vsub.f32 %v71, %v254
  %256 = vmatpush.msra.mxu0 %v255
  %v257 = vand.u32 %v100, 4294901760
  %v258 = vsub.f32 %v100, %v257
  %259 = vmatmul.f32.gmra.mxu0 %v258
  %v260 = vpop.f32.mrf.mxu0
  %v261 = vadd.f32 %v215, %v260
  %v262 = vand.u32 %v103, 4294901760
  %v263 = vsub.f32 %v103, %v262
  %264 = vmatmul.f32.gmra.mxu0 %v263
  %v265 = vpop.f32.mrf.mxu0
  %v266 = vadd.f32 %v219, %v265
  %v267 = vand.u32 %v106, 4294901760
  %v268 = vsub.f32 %v106, %v267
  %269 = vmatmul.f32.gmra.mxu0 %v268
  %v270 = vpop.f32.mrf.mxu0
  %v271 = vadd.f32 %v223, %v270
  %v272 = vand.u32 %v109, 4294901760
  %v273 = vsub.f32 %v109, %v272
  %274 = vmatmul.f32.gmra.mxu0 %v273
  %v275 = vpop.f32.mrf.mxu0
  %v276 = vadd.f32 %v227, %v275
  %277 = vdwg.mxu0
  %278 = vmatpush.msra.mxu0 0.0
  %279 = vmatpush.msra.mxu0 0.0
  %280 = vmatpush.msra.mxu0 0.0
  %281 = vmatpush.msra.mxu0 0.0
  %282 = vmatpush.msra.mxu0 0.0
  %283 = vmatpush.msra.mxu0 0.0
  %284 = vmatpush.msra.mxu0 0.0
  %285 = vmatpush.msra.mxu0 0.0
  %286 = vmatpush.msra.mxu0 0.0
  %287 = vmatpush.msra.mxu0 0.0
  %v288 = vand.u32 %v27, 4294901760
  %289 = vmatpush.msra.mxu0 %v288
  %v290 = vand.u32 %v25, 4294901760
  %291 = vmatpush.msra.mxu0 %v290
  %v292 = vand.u32 %v92, 4294901760
  %293 = vmatpush.msra.mxu0 %v292
  %v294 = vand.u32 %v90, 4294901760
  %295 = vmatpush.msra.mxu0 %v294
  %v296 = vand.u32 %v73, 4294901760
  %297 = vmatpush.msra.mxu0 %v296
  %v298 = vand.u32 %v71, 4294901760
  %299 = vmatpush.msra.mxu0 %v298
  %v300 = vand.u32 %v100, 4294901760
  %v301 = vsub.f32 %v100, %v300
  %v302 = vand.u32 %v301, 4294901760
  %303 = vmatmul.f32.gmra.mxu0 %v302
  %v304 = vpop.f32.mrf.mxu0
  %v305 = vadd.f32 %v261, %v304
  %v306 = vand.u32 %v103, 4294901760
  %v307 = vsub.f32 %v103, %v306
  %v308 = vand.u32 %v307, 4294901760
  %309 = vmatmul.f32.gmra.mxu0 %v308
  %v310 = vpop.f32.mrf.mxu0
  %v311 = vadd.f32 %v266, %v310
  %v312 = vand.u32 %v106, 4294901760
  %v313 = vsub.f32 %v106, %v312
  %v314 = vand.u32 %v313, 4294901760
  %315 = vmatmul.f32.gmra.mxu0 %v314
  %v316 = vpop.f32.mrf.mxu0
  %v317 = vadd.f32 %v271, %v316
  %v318 = vand.u32 %v109, 4294901760
  %v319 = vsub.f32 %v109, %v318
  %v320 = vand.u32 %v319, 4294901760
  %321 = vmatmul.f32.gmra.mxu0 %v320
  %v322 = vpop.f32.mrf.mxu0
  %v323 = vadd.f32 %v276, %v322
  %324 = vdwg.mxu0
  %325 = vmatpush.msra.mxu0 0.0
  %326 = vmatpush.msra.mxu0 0.0
  %327 = vmatpush.msra.mxu0 0.0
  %328 = vmatpush.msra.mxu0 0.0
  %329 = vmatpush.msra.mxu0 0.0
  %330 = vmatpush.msra.mxu0 0.0
  %331 = vmatpush.msra.mxu0 0.0
  %332 = vmatpush.msra.mxu0 0.0
  %333 = vmatpush.msra.mxu0 0.0
  %334 = vmatpush.msra.mxu0 0.0
  %v335 = vand.u32 %v27, 4294901760
  %v336 = vsub.f32 %v27, %v335
  %v337 = vand.u32 %v336, 4294901760
  %338 = vmatpush.msra.mxu0 %v337
  %v339 = vand.u32 %v25, 4294901760
  %v340 = vsub.f32 %v25, %v339
  %v341 = vand.u32 %v340, 4294901760
  %342 = vmatpush.msra.mxu0 %v341
  %v343 = vand.u32 %v92, 4294901760
  %v344 = vsub.f32 %v92, %v343
  %v345 = vand.u32 %v344, 4294901760
  %346 = vmatpush.msra.mxu0 %v345
  %v347 = vand.u32 %v90, 4294901760
  %v348 = vsub.f32 %v90, %v347
  %v349 = vand.u32 %v348, 4294901760
  %350 = vmatpush.msra.mxu0 %v349
  %v351 = vand.u32 %v73, 4294901760
  %v352 = vsub.f32 %v73, %v351
  %v353 = vand.u32 %v352, 4294901760
  %354 = vmatpush.msra.mxu0 %v353
  %v355 = vand.u32 %v71, 4294901760
  %v356 = vsub.f32 %v71, %v355
  %v357 = vand.u32 %v356, 4294901760
  %358 = vmatpush.msra.mxu0 %v357
  %v359 = vand.u32 %v100, 4294901760
  %360 = vmatmul.f32.gmra.mxu0 %v359
  %v361 = vpop.f32.mrf.mxu0
  %v362 = vadd.f32 %v305, %v361
  %v363 = vand.u32 %v103, 4294901760
  %364 = vmatmul.f32.gmra.mxu0 %v363
  %v365 = vpop.f32.mrf.mxu0
  %v366 = vadd.f32 %v311, %v365
  %v367 = vand.u32 %v106, 4294901760
  %368 = vmatmul.f32.gmra.mxu0 %v367
  %v369 = vpop.f32.mrf.mxu0
  %v370 = vadd.f32 %v317, %v369
  %v371 = vand.u32 %v109, 4294901760
  %372 = vmatmul.f32.gmra.mxu0 %v371
  %v373 = vpop.f32.mrf.mxu0
  %v374 = vadd.f32 %v323, %v373
  %375 = vdwg.mxu0
  %376 = vmatpush.msra.mxu0 0.0
  %377 = vmatpush.msra.mxu0 0.0
  %378 = vmatpush.msra.mxu0 0.0
  %379 = vmatpush.msra.mxu0 0.0
  %380 = vmatpush.msra.mxu0 0.0
  %381 = vmatpush.msra.mxu0 0.0
  %382 = vmatpush.msra.mxu0 0.0
  %383 = vmatpush.msra.mxu0 0.0
  %384 = vmatpush.msra.mxu0 0.0
  %385 = vmatpush.msra.mxu0 0.0
  %v386 = vand.u32 %v27, 4294901760
  %387 = vmatpush.msra.mxu0 %v386
  %v388 = vand.u32 %v25, 4294901760
  %389 = vmatpush.msra.mxu0 %v388
  %v390 = vand.u32 %v92, 4294901760
  %391 = vmatpush.msra.mxu0 %v390
  %v392 = vand.u32 %v90, 4294901760
  %393 = vmatpush.msra.mxu0 %v392
  %v394 = vand.u32 %v73, 4294901760
  %395 = vmatpush.msra.mxu0 %v394
  %v396 = vand.u32 %v71, 4294901760
  %397 = vmatpush.msra.mxu0 %v396
  %v398 = vand.u32 %v100, 4294901760
  %399 = vmatmul.f32.gmra.mxu0 %v398
  %v400 = vpop.f32.mrf.mxu0
  %v401 = vadd.f32 %v362, %v400
  %v402 = vand.u32 %v103, 4294901760
  %403 = vmatmul.f32.gmra.mxu0 %v402
  %v404 = vpop.f32.mrf.mxu0
  %v405 = vadd.f32 %v366, %v404
  %v406 = vand.u32 %v106, 4294901760
  %407 = vmatmul.f32.gmra.mxu0 %v406
  %v408 = vpop.f32.mrf.mxu0
  %v409 = vadd.f32 %v370, %v408
  %v410 = vand.u32 %v109, 4294901760
  %411 = vmatmul.f32.gmra.mxu0 %v410
  %v412 = vpop.f32.mrf.mxu0
  %v413 = vadd.f32 %v374, %v412
  %414 = vdwg.mxu0
  %415 = vmatpush.msra.mxu0 0.0
  %416 = vmatpush.msra.mxu0 0.0
  %417 = vmatpush.msra.mxu0 0.0
  %418 = vmatpush.msra.mxu0 0.0
  %419 = vmatpush.msra.mxu0 0.0
  %420 = vmatpush.msra.mxu0 0.0
  %421 = vmatpush.msra.mxu0 0.0
  %422 = vmatpush.msra.mxu0 0.0
  %423 = vmatpush.msra.mxu0 0.0
  %424 = vmatpush.msra.mxu0 0.0
  %v425 = vand.u32 %v28, 4294901760
  %426 = vmatpush.msra.mxu0 %v425
  %v427 = vand.u32 %v26, 4294901760
  %428 = vmatpush.msra.mxu0 %v427
  %v429 = vand.u32 %v93, 4294901760
  %430 = vmatpush.msra.mxu0 %v429
  %v431 = vand.u32 %v91, 4294901760
  %432 = vmatpush.msra.mxu0 %v431
  %v433 = vand.u32 %v74, 4294901760
  %434 = vmatpush.msra.mxu0 %v433
  %v435 = vand.u32 %v72, 4294901760
  %436 = vmatpush.msra.mxu0 %v435
  %v437 = vand.u32 %v100, 4294901760
  %v438 = vsub.f32 %v100, %v437
  %v439 = vand.u32 %v438, 4294901760
  %v440 = vsub.f32 %v438, %v439
  %v441 = vand.u32 %v440, 4294901760
  %442 = vmatmul.f32.gmra.mxu0 %v441
  %v443 = vpop.f32.mrf.mxu0
  %v444 = vadd.f32 0.0, %v443
  %v445 = vand.u32 %v103, 4294901760
  %v446 = vsub.f32 %v103, %v445
  %v447 = vand.u32 %v446, 4294901760
  %v448 = vsub.f32 %v446, %v447
  %v449 = vand.u32 %v448, 4294901760
  %450 = vmatmul.f32.gmra.mxu0 %v449
  %v451 = vpop.f32.mrf.mxu0
  %v452 = vadd.f32 0.0, %v451
  %v453 = vand.u32 %v106, 4294901760
  %v454 = vsub.f32 %v106, %v453
  %v455 = vand.u32 %v454, 4294901760
  %v456 = vsub.f32 %v454, %v455
  %v457 = vand.u32 %v456, 4294901760
  %458 = vmatmul.f32.gmra.mxu0 %v457
  %v459 = vpop.f32.mrf.mxu0
  %v460 = vadd.f32 0.0, %v459
  %v461 = vand.u32 %v109, 4294901760
  %v462 = vsub.f32 %v109, %v461
  %v463 = vand.u32 %v462, 4294901760
  %v464 = vsub.f32 %v462, %v463
  %v465 = vand.u32 %v464, 4294901760
  %466 = vmatmul.f32.gmra.mxu0 %v465
  %v467 = vpop.f32.mrf.mxu0
  %v468 = vadd.f32 0.0, %v467
  %469 = vdwg.mxu0
  %470 = vmatpush.msra.mxu0 0.0
  %471 = vmatpush.msra.mxu0 0.0
  %472 = vmatpush.msra.mxu0 0.0
  %473 = vmatpush.msra.mxu0 0.0
  %474 = vmatpush.msra.mxu0 0.0
  %475 = vmatpush.msra.mxu0 0.0
  %476 = vmatpush.msra.mxu0 0.0
  %477 = vmatpush.msra.mxu0 0.0
  %478 = vmatpush.msra.mxu0 0.0
  %479 = vmatpush.msra.mxu0 0.0
  %v480 = vand.u32 %v28, 4294901760
  %v481 = vsub.f32 %v28, %v480
  %v482 = vand.u32 %v481, 4294901760
  %v483 = vsub.f32 %v481, %v482
  %v484 = vand.u32 %v483, 4294901760
  %485 = vmatpush.msra.mxu0 %v484
  %v486 = vand.u32 %v26, 4294901760
  %v487 = vsub.f32 %v26, %v486
  %v488 = vand.u32 %v487, 4294901760
  %v489 = vsub.f32 %v487, %v488
  %v490 = vand.u32 %v489, 4294901760
  %491 = vmatpush.msra.mxu0 %v490
  %v492 = vand.u32 %v93, 4294901760
  %v493 = vsub.f32 %v93, %v492
  %v494 = vand.u32 %v493, 4294901760
  %v495 = vsub.f32 %v493, %v494
  %v496 = vand.u32 %v495, 4294901760
  %497 = vmatpush.msra.mxu0 %v496
  %v498 = vand.u32 %v91, 4294901760
  %v499 = vsub.f32 %v91, %v498
  %v500 = vand.u32 %v499, 4294901760
  %v501 = vsub.f32 %v499, %v500
  %v502 = vand.u32 %v501, 4294901760
  %503 = vmatpush.msra.mxu0 %v502
  %v504 = vand.u32 %v74, 4294901760
  %v505 = vsub.f32 %v74, %v504
  %v506 = vand.u32 %v505, 4294901760
  %v507 = vsub.f32 %v505, %v506
  %v508 = vand.u32 %v507, 4294901760
  %509 = vmatpush.msra.mxu0 %v508
  %v510 = vand.u32 %v72, 4294901760
  %v511 = vsub.f32 %v72, %v510
  %v512 = vand.u32 %v511, 4294901760
  %v513 = vsub.f32 %v511, %v512
  %v514 = vand.u32 %v513, 4294901760
  %515 = vmatpush.msra.mxu0 %v514
  %v516 = vand.u32 %v100, 4294901760
  %517 = vmatmul.f32.gmra.mxu0 %v516
  %v518 = vpop.f32.mrf.mxu0
  %v519 = vadd.f32 %v444, %v518
  %v520 = vand.u32 %v103, 4294901760
  %521 = vmatmul.f32.gmra.mxu0 %v520
  %v522 = vpop.f32.mrf.mxu0
  %v523 = vadd.f32 %v452, %v522
  %v524 = vand.u32 %v106, 4294901760
  %525 = vmatmul.f32.gmra.mxu0 %v524
  %v526 = vpop.f32.mrf.mxu0
  %v527 = vadd.f32 %v460, %v526
  %v528 = vand.u32 %v109, 4294901760
  %529 = vmatmul.f32.gmra.mxu0 %v528
  %v530 = vpop.f32.mrf.mxu0
  %v531 = vadd.f32 %v468, %v530
  %532 = vdwg.mxu0
  %533 = vmatpush.msra.mxu0 0.0
  %534 = vmatpush.msra.mxu0 0.0
  %535 = vmatpush.msra.mxu0 0.0
  %536 = vmatpush.msra.mxu0 0.0
  %537 = vmatpush.msra.mxu0 0.0
  %538 = vmatpush.msra.mxu0 0.0
  %539 = vmatpush.msra.mxu0 0.0
  %540 = vmatpush.msra.mxu0 0.0
  %541 = vmatpush.msra.mxu0 0.0
  %542 = vmatpush.msra.mxu0 0.0
  %v543 = vand.u32 %v28, 4294901760
  %v544 = vsub.f32 %v28, %v543
  %545 = vmatpush.msra.mxu0 %v544
  %v546 = vand.u32 %v26, 4294901760
  %v547 = vsub.f32 %v26, %v546
  %548 = vmatpush.msra.mxu0 %v547
  %v549 = vand.u32 %v93, 4294901760
  %v550 = vsub.f32 %v93, %v549
  %551 = vmatpush.msra.mxu0 %v550
  %v552 = vand.u32 %v91, 4294901760
  %v553 = vsub.f32 %v91, %v552
  %554 = vmatpush.msra.mxu0 %v553
  %v555 = vand.u32 %v74, 4294901760
  %v556 = vsub.f32 %v74, %v555
  %557 = vmatpush.msra.mxu0 %v556
  %v558 = vand.u32 %v72, 4294901760
  %v559 = vsub.f32 %v72, %v558
  %560 = vmatpush.msra.mxu0 %v559
  %v561 = vand.u32 %v100, 4294901760
  %v562 = vsub.f32 %v100, %v561
  %563 = vmatmul.f32.gmra.mxu0 %v562
  %v564 = vpop.f32.mrf.mxu0
  %v565 = vadd.f32 %v519, %v564
  %v566 = vand.u32 %v103, 4294901760
  %v567 = vsub.f32 %v103, %v566
  %568 = vmatmul.f32.gmra.mxu0 %v567
  %v569 = vpop.f32.mrf.mxu0
  %v570 = vadd.f32 %v523, %v569
  %v571 = vand.u32 %v106, 4294901760
  %v572 = vsub.f32 %v106, %v571
  %573 = vmatmul.f32.gmra.mxu0 %v572
  %v574 = vpop.f32.mrf.mxu0
  %v575 = vadd.f32 %v527, %v574
  %v576 = vand.u32 %v109, 4294901760
  %v577 = vsub.f32 %v109, %v576
  %578 = vmatmul.f32.gmra.mxu0 %v577
  %v579 = vpop.f32.mrf.mxu0
  %v580 = vadd.f32 %v531, %v579
  %581 = vdwg.mxu0
  %582 = vmatpush.msra.mxu0 0.0
  %583 = vmatpush.msra.mxu0 0.0
  %584 = vmatpush.msra.mxu0 0.0
  %585 = vmatpush.msra.mxu0 0.0
  %586 = vmatpush.msra.mxu0 0.0
  %587 = vmatpush.msra.mxu0 0.0
  %588 = vmatpush.msra.mxu0 0.0
  %589 = vmatpush.msra.mxu0 0.0
  %590 = vmatpush.msra.mxu0 0.0
  %591 = vmatpush.msra.mxu0 0.0
  %v592 = vand.u32 %v28, 4294901760
  %593 = vmatpush.msra.mxu0 %v592
  %v594 = vand.u32 %v26, 4294901760
  %595 = vmatpush.msra.mxu0 %v594
  %v596 = vand.u32 %v93, 4294901760
  %597 = vmatpush.msra.mxu0 %v596
  %v598 = vand.u32 %v91, 4294901760
  %599 = vmatpush.msra.mxu0 %v598
  %v600 = vand.u32 %v74, 4294901760
  %601 = vmatpush.msra.mxu0 %v600
  %v602 = vand.u32 %v72, 4294901760
  %603 = vmatpush.msra.mxu0 %v602
  %v604 = vand.u32 %v100, 4294901760
  %v605 = vsub.f32 %v100, %v604
  %v606 = vand.u32 %v605, 4294901760
  %607 = vmatmul.f32.gmra.mxu0 %v606
  %v608 = vpop.f32.mrf.mxu0
  %v609 = vadd.f32 %v565, %v608
  %v610 = vand.u32 %v103, 4294901760
  %v611 = vsub.f32 %v103, %v610
  %v612 = vand.u32 %v611, 4294901760
  %613 = vmatmul.f32.gmra.mxu0 %v612
  %v614 = vpop.f32.mrf.mxu0
  %v615 = vadd.f32 %v570, %v614
  %v616 = vand.u32 %v106, 4294901760
  %v617 = vsub.f32 %v106, %v616
  %v618 = vand.u32 %v617, 4294901760
  %619 = vmatmul.f32.gmra.mxu0 %v618
  %v620 = vpop.f32.mrf.mxu0
  %v621 = vadd.f32 %v575, %v620
  %v622 = vand.u32 %v109, 4294901760
  %v623 = vsub.f32 %v109, %v622
  %v624 = vand.u32 %v623, 4294901760
  %625 = vmatmul.f32.gmra.mxu0 %v624
  %v626 = vpop.f32.mrf.mxu0
  %v627 = vadd.f32 %v580, %v626
  %628 = vdwg.mxu0
  %629 = vmatpush.msra.mxu0 0.0
  %630 = vmatpush.msra.mxu0 0.0
  %631 = vmatpush.msra.mxu0 0.0
  %632 = vmatpush.msra.mxu0 0.0
  %633 = vmatpush.msra.mxu0 0.0
  %634 = vmatpush.msra.mxu0 0.0
  %635 = vmatpush.msra.mxu0 0.0
  %636 = vmatpush.msra.mxu0 0.0
  %637 = vmatpush.msra.mxu0 0.0
  %638 = vmatpush.msra.mxu0 0.0
  %v639 = vand.u32 %v28, 4294901760
  %v640 = vsub.f32 %v28, %v639
  %v641 = vand.u32 %v640, 4294901760
  %642 = vmatpush.msra.mxu0 %v641
  %v643 = vand.u32 %v26, 4294901760
  %v644 = vsub.f32 %v26, %v643
  %v645 = vand.u32 %v644, 4294901760
  %646 = vmatpush.msra.mxu0 %v645
  %v647 = vand.u32 %v93, 4294901760
  %v648 = vsub.f32 %v93, %v647
  %v649 = vand.u32 %v648, 4294901760
  %650 = vmatpush.msra.mxu0 %v649
  %v651 = vand.u32 %v91, 4294901760
  %v652 = vsub.f32 %v91, %v651
  %v653 = vand.u32 %v652, 4294901760
  %654 = vmatpush.msra.mxu0 %v653
  %v655 = vand.u32 %v74, 4294901760
  %v656 = vsub.f32 %v74, %v655
  %v657 = vand.u32 %v656, 4294901760
  %658 = vmatpush.msra.mxu0 %v657
  %v659 = vand.u32 %v72, 4294901760
  %v660 = vsub.f32 %v72, %v659
  %v661 = vand.u32 %v660, 4294901760
  %662 = vmatpush.msra.mxu0 %v661
  %v663 = vand.u32 %v100, 4294901760
  %664 = vmatmul.f32.gmra.mxu0 %v663
  %v665 = vpop.f32.mrf.mxu0
  %v666 = vadd.f32 %v609, %v665
  %v667 = vand.u32 %v103, 4294901760
  %668 = vmatmul.f32.gmra.mxu0 %v667
  %v669 = vpop.f32.mrf.mxu0
  %v670 = vadd.f32 %v615, %v669
  %v671 = vand.u32 %v106, 4294901760
  %672 = vmatmul.f32.gmra.mxu0 %v671
  %v673 = vpop.f32.mrf.mxu0
  %v674 = vadd.f32 %v621, %v673
  %v675 = vand.u32 %v109, 4294901760
  %676 = vmatmul.f32.gmra.mxu0 %v675
  %v677 = vpop.f32.mrf.mxu0
  %v678 = vadd.f32 %v627, %v677
  %679 = vdwg.mxu0
  %680 = vmatpush.msra.mxu0 0.0
  %681 = vmatpush.msra.mxu0 0.0
  %682 = vmatpush.msra.mxu0 0.0
  %683 = vmatpush.msra.mxu0 0.0
  %684 = vmatpush.msra.mxu0 0.0
  %685 = vmatpush.msra.mxu0 0.0
  %686 = vmatpush.msra.mxu0 0.0
  %687 = vmatpush.msra.mxu0 0.0
  %688 = vmatpush.msra.mxu0 0.0
  %689 = vmatpush.msra.mxu0 0.0
  %v690 = vand.u32 %v28, 4294901760
  %691 = vmatpush.msra.mxu0 %v690
  %v692 = vand.u32 %v26, 4294901760
  %693 = vmatpush.msra.mxu0 %v692
  %v694 = vand.u32 %v93, 4294901760
  %695 = vmatpush.msra.mxu0 %v694
  %v696 = vand.u32 %v91, 4294901760
  %697 = vmatpush.msra.mxu0 %v696
  %v698 = vand.u32 %v74, 4294901760
  %699 = vmatpush.msra.mxu0 %v698
  %v700 = vand.u32 %v72, 4294901760
  %701 = vmatpush.msra.mxu0 %v700
  %v702 = vand.u32 %v100, 4294901760
  %703 = vmatmul.f32.gmra.mxu0 %v702
  %v704 = vpop.f32.mrf.mxu0
  %v705 = vadd.f32 %v666, %v704
  %v706 = vand.u32 %v103, 4294901760
  %707 = vmatmul.f32.gmra.mxu0 %v706
  %v708 = vpop.f32.mrf.mxu0
  %v709 = vadd.f32 %v670, %v708
  %v710 = vand.u32 %v106, 4294901760
  %711 = vmatmul.f32.gmra.mxu0 %v710
  %v712 = vpop.f32.mrf.mxu0
  %v713 = vadd.f32 %v674, %v712
  %v714 = vand.u32 %v109, 4294901760
  %715 = vmatmul.f32.gmra.mxu0 %v714
  %v716 = vpop.f32.mrf.mxu0
  %v717 = vadd.f32 %v678, %v716
  %718 = vdwg.mxu0
  %v719 = vadd.f32 %v401, %v705
  %720 = vadd.xlane.f32.xlu0 %v719
  %v721 = vpop.xlane.xlu0 %720
  %v722 = vadd.f32 %v405, %v709
  %723 = vadd.xlane.f32.xlu0 %v722
  %v724 = vpop.xlane.xlu0 %723
  %v725 = vadd.f32 %v409, %v713
  %726 = vadd.xlane.f32.xlu0 %v725
  %v727 = vpop.xlane.xlu0 %726
  %v728 = vadd.f32 %v413, %v717
  %729 = vadd.xlane.f32.xlu0 %v728
  %v730 = vpop.xlane.xlu0 %729
  %v731 = vrcp.pop 256.0
  %v732 = vmul.f32 256.0, %v731
  %v733 = vsub.f32 1.0, %v732
  %v734 = vmul.f32 %v731, %v733
  %v735 = vadd.f32 %v731, %v734
  %vm736 = vweird.f32 %v731
  %v737 = vsel %vm736, %v731, %v735
  %v738 = vmul.f32 %v721, %v737
  %v739 = vmul.f32 %v724, %v737
  %v740 = vmul.f32 %v727, %v737
  %v741 = vmul.f32 %v730, %v737
  %v742 = vsub.f32 %v401, %v738
  %v743 = vsub.f32 %v705, %v738
  %v744 = vsub.f32 %v405, %v739
  %v745 = vsub.f32 %v709, %v739
  %v746 = vsub.f32 %v409, %v740
  %v747 = vsub.f32 %v713, %v740
  %v748 = vsub.f32 %v413, %v741
  %v749 = vsub.f32 %v717, %v741
  %v750 = vmul.f32 %v742, %v742
  %v751 = vmul.f32 %v743, %v743
  %v752 = vmul.f32 %v744, %v744
  %v753 = vmul.f32 %v745, %v745
  %v754 = vmul.f32 %v746, %v746
  %v755 = vmul.f32 %v747, %v747
  %v756 = vmul.f32 %v748, %v748
  %v757 = vmul.f32 %v749, %v749
  %v758 = vadd.f32 %v750, %v751
  %759 = vadd.xlane.f32.xlu0 %v758
  %v760 = vpop.xlane.xlu0 %759
  %v761 = vadd.f32 %v752, %v753
  %762 = vadd.xlane.f32.xlu0 %v761
  %v763 = vpop.xlane.xlu0 %762
  %v764 = vadd.f32 %v754, %v755
  %765 = vadd.xlane.f32.xlu0 %v764
  %v766 = vpop.xlane.xlu0 %765
  %v767 = vadd.f32 %v756, %v757
  %768 = vadd.xlane.f32.xlu0 %v767
  %v769 = vpop.xlane.xlu0 %768
  %v770 = vmul.f32 %v760, %v737
  %v771 = vmul.f32 %v763, %v737
  %v772 = vmul.f32 %v766, %v737
  %v773 = vmul.f32 %v769, %v737
  %v774 = vld [vmem:[%s2] sm:$0xff]
  %v775 = vld [vmem:[%s2 + $0x8] sm:$0xff]
  %v776 = vld [vmem:[%s2 + $0x10] sm:$0xff]
  %v777 = vld [vmem:[%s2 + $0x18] sm:$0xff]
  %v778 = vadd.f32 %v770, 1e-05
  %v779 = vadd.f32 %v771, 1e-05
  %v780 = vadd.f32 %v772, 1e-05
  %v781 = vadd.f32 %v773, 1e-05
  %v782 = vrsqrt.pop %v778
  %v783 = vmul.f32 %v782, %v778
  %v784 = vmul.f32 %v783, %v782
  %v785 = vmul.f32 0.5, %v784
  %v786 = vsub.f32 1.5, %v785
  %v787 = vmul.f32 %v782, %v786
  %vm788 = vweird.f32 %v778
  %vm789 = vweird.f32 %v782
  %vm790 = vmor %vm788, %vm789
  %v791 = vsel %vm790, %v782, %v787
  %v792 = vrsqrt.pop %v779
  %v793 = vmul.f32 %v792, %v779
  %v794 = vmul.f32 %v793, %v792
  %v795 = vmul.f32 0.5, %v794
  %v796 = vsub.f32 1.5, %v795
  %v797 = vmul.f32 %v792, %v796
  %vm798 = vweird.f32 %v779
  %vm799 = vweird.f32 %v792
  %vm800 = vmor %vm798, %vm799
  %v801 = vsel %vm800, %v792, %v797
  %v802 = vrsqrt.pop %v780
  %v803 = vmul.f32 %v802, %v780
  %v804 = vmul.f32 %v803, %v802
  %v805 = vmul.f32 0.5, %v804
  %v806 = vsub.f32 1.5, %v805
  %v807 = vmul.f32 %v802, %v806
  %vm808 = vweird.f32 %v780
  %vm809 = vweird.f32 %v802
  %vm810 = vmor %vm808, %vm809
  %v811 = vsel %vm810, %v802, %v807
  %v812 = vrsqrt.pop %v781
  %v813 = vmul.f32 %v812, %v781
  %v814 = vmul.f32 %v813, %v812
  %v815 = vmul.f32 0.5, %v814
  %v816 = vsub.f32 1.5, %v815
  %v817 = vmul.f32 %v812, %v816
  %vm818 = vweird.f32 %v781
  %vm819 = vweird.f32 %v812
  %vm820 = vmor %vm818, %vm819
  %v821 = vsel %vm820, %v812, %v817
  %v822 = vmul.f32 %v774, %v791
  %v823 = vmul.f32 %v775, %v801
  %v824 = vmul.f32 %v776, %v811
  %v825 = vmul.f32 %v777, %v821
  %827 = vset.pattern.permute.xlu0 0
  %828 = vperm.xlu0 %827, %v822
  %v829 = vpop.permute.xlu0 %828
  %832 = vset.pattern.permute.xlu0 0
  %833 = vperm.xlu0 %832, %v823
  %v834 = vpop.permute.xlu0 %833
  %837 = vset.pattern.permute.xlu0 0
  %838 = vperm.xlu0 %837, %v824
  %v839 = vpop.permute.xlu0 %838
  %842 = vset.pattern.permute.xlu0 0
  %843 = vperm.xlu0 %842, %v825
  %v844 = vpop.permute.xlu0 %843
  %v846 = vmul.f32 %v742, %v829
  %v847 = vmul.f32 %v743, %v829
  %v848 = vmul.f32 %v744, %v834
  %v849 = vmul.f32 %v745, %v834
  %v850 = vmul.f32 %v746, %v839
  %v851 = vmul.f32 %v747, %v839
  %v852 = vmul.f32 %v748, %v844
  %v853 = vmul.f32 %v749, %v844
  %v854 = vld [vmem:[%s3] sm:$0xff]
  %v855 = vld [vmem:[%s3 + $0x8] sm:$0xff]
  %v856 = vld [vmem:[%s3 + $0x10] sm:$0xff]
  %v857 = vld [vmem:[%s3 + $0x18] sm:$0xff]
  %859 = vset.pattern.permute.xlu0 0
  %860 = vperm.xlu0 %859, %v854
  %v861 = vpop.permute.xlu0 %860
  %864 = vset.pattern.permute.xlu0 0
  %865 = vperm.xlu0 %864, %v855
  %v866 = vpop.permute.xlu0 %865
  %869 = vset.pattern.permute.xlu0 0
  %870 = vperm.xlu0 %869, %v856
  %v871 = vpop.permute.xlu0 %870
  %874 = vset.pattern.permute.xlu0 0
  %875 = vperm.xlu0 %874, %v857
  %v876 = vpop.permute.xlu0 %875
  %v878 = vadd.f32 %v846, %v861
  %v879 = vadd.f32 %v847, %v861
  %v880 = vadd.f32 %v848, %v866
  %v881 = vadd.f32 %v849, %v866
  %v882 = vadd.f32 %v850, %v871
  %v883 = vadd.f32 %v851, %v871
  %v884 = vadd.f32 %v852, %v876
  %v885 = vadd.f32 %v853, %v876
  %v886 = vtanh.pop %v878
  %v887 = vtanh.pop %v879
  %v888 = vtanh.pop %v880
  %v889 = vtanh.pop %v881
  %v890 = vsub.f32 0.0, %v882
  %v891 = vsub.f32 0.0, %v883
  %v892 = vsub.f32 0.0, %v884
  %v893 = vsub.f32 0.0, %v885
  %v894 = vmul.f32 %v890, 1.442695
  %v895 = vpow.pop %v894
  %v896 = vmul.f32 %v891, 1.442695
  %v897 = vpow.pop %v896
  %v898 = vmul.f32 %v892, 1.442695
  %v899 = vpow.pop %v898
  %v900 = vmul.f32 %v893, 1.442695
  %v901 = vpow.pop %v900
  %v902 = vadd.f32 %v895, 1.0
  %v903 = vadd.f32 %v897, 1.0
  %v904 = vadd.f32 %v899, 1.0
  %v905 = vadd.f32 %v901, 1.0
  %v906 = vrcp.pop %v902
  %v907 = vmul.f32 %v902, %v906
  %v908 = vsub.f32 1.0, %v907
  %v909 = vmul.f32 %v906, %v908
  %v910 = vadd.f32 %v906, %v909
  %vm911 = vweird.f32 %v902
  %vm912 = vweird.f32 %v906
  %vm913 = vmor %vm911, %vm912
  %v914 = vsel %vm913, %v906, %v910
  %v915 = vand.u32 2147483647, %v902
  %vm916 = vcmp.eq.f32.partialorder %v915, 8.507059e+37
  %v917 = vand.u32 %v902, 2147483648
  %v918 = vor.u32 1.1754944e-38, %v917
  %v919 = vsel %vm916, %v918, %v914
  %v920 = vmul.f32 1.0, %v919
  %v921 = vrcp.pop %v903
  %v922 = vmul.f32 %v903, %v921
  %v923 = vsub.f32 1.0, %v922
  %v924 = vmul.f32 %v921, %v923
  %v925 = vadd.f32 %v921, %v924
  %vm926 = vweird.f32 %v903
  %vm927 = vweird.f32 %v921
  %vm928 = vmor %vm926, %vm927
  %v929 = vsel %vm928, %v921, %v925
  %v930 = vand.u32 2147483647, %v903
  %vm931 = vcmp.eq.f32.partialorder %v930, 8.507059e+37
  %v932 = vand.u32 %v903, 2147483648
  %v933 = vor.u32 1.1754944e-38, %v932
  %v934 = vsel %vm931, %v933, %v929
  %v935 = vmul.f32 1.0, %v934
  %v936 = vrcp.pop %v904
  %v937 = vmul.f32 %v904, %v936
  %v938 = vsub.f32 1.0, %v937
  %v939 = vmul.f32 %v936, %v938
  %v940 = vadd.f32 %v936, %v939
  %vm941 = vweird.f32 %v904
  %vm942 = vweird.f32 %v936
  %vm943 = vmor %vm941, %vm942
  %v944 = vsel %vm943, %v936, %v940
  %v945 = vand.u32 2147483647, %v904
  %vm946 = vcmp.eq.f32.partialorder %v945, 8.507059e+37
  %v947 = vand.u32 %v904, 2147483648
  %v948 = vor.u32 1.1754944e-38, %v947
  %v949 = vsel %vm946, %v948, %v944
  %v950 = vmul.f32 1.0, %v949
  %v951 = vrcp.pop %v905
  %v952 = vmul.f32 %v905, %v951
  %v953 = vsub.f32 1.0, %v952
  %v954 = vmul.f32 %v951, %v953
  %v955 = vadd.f32 %v951, %v954
  %vm956 = vweird.f32 %v905
  %vm957 = vweird.f32 %v951
  %vm958 = vmor %vm956, %vm957
  %v959 = vsel %vm958, %v951, %v955
  %v960 = vand.u32 2147483647, %v905
  %vm961 = vcmp.eq.f32.partialorder %v960, 8.507059e+37
  %v962 = vand.u32 %v905, 2147483648
  %v963 = vor.u32 1.1754944e-38, %v962
  %v964 = vsel %vm961, %v963, %v959
  %v965 = vmul.f32 1.0, %v964
  %v966 = vmul.f32 %v886, %v920
  %v967 = vmul.f32 %v887, %v935
  %v968 = vmul.f32 %v888, %v950
  %v969 = vmul.f32 %v889, %v965
  %v970 = vld [vmem:[%s4] sm:$0xff]
  %v971 = vld [vmem:[%s4 + $0x8] sm:$0xff]
  %v972 = vld [vmem:[%s4 + $0x10] sm:$0xff]
  %v973 = vld [vmem:[%s4 + $0x18] sm:$0xff]
  %v974 = vld [vmem:[%s5] sm:$0xff]
  %v975 = vld [vmem:[%s5 + $0x8] sm:$0xff]
  %v976 = vld [vmem:[%s5 + $0x10] sm:$0xff]
  %v977 = vld [vmem:[%s5 + $0x18] sm:$0xff]
  %979 = vset.pattern.permute.xlu0 0
  %980 = vperm.xlu0 %979, %v974
  %v981 = vpop.permute.xlu0 %980
  %984 = vset.pattern.permute.xlu0 0
  %985 = vperm.xlu0 %984, %v975
  %v986 = vpop.permute.xlu0 %985
  %989 = vset.pattern.permute.xlu0 0
  %990 = vperm.xlu0 %989, %v976
  %v991 = vpop.permute.xlu0 %990
  %994 = vset.pattern.permute.xlu0 0
  %995 = vperm.xlu0 %994, %v977
  %v996 = vpop.permute.xlu0 %995
  %vm998 = vcmask 130048
  %v1000 = vsel %vm998, %v970, 0
  %v1003 = vsel %vm998, %v971, 0
  %v1006 = vsel %vm998, %v972, 0
  %v1009 = vsel %vm998, %v973, 0
  %1011 = vmatpush.msra.mxu0 0.0
  %1012 = vmatpush.msra.mxu0 0.0
  %1013 = vmatpush.msra.mxu0 0.0
  %1014 = vmatpush.msra.mxu0 0.0
  %1015 = vmatpush.msra.mxu0 0.0
  %1016 = vmatpush.msra.mxu0 0.0
  %1017 = vmatpush.msra.mxu0 0.0
  %1018 = vmatpush.msra.mxu0 0.0
  %1019 = vmatpush.msra.mxu0 0.0
  %1020 = vmatpush.msra.mxu0 0.0
  %1021 = vmatpush.msra.mxu0 0.0
  %1022 = vmatpush.msra.mxu0 0.0
  %1023 = vmatpush.msra.mxu0 0.0
  %1024 = vmatpush.msra.mxu0 0.0
  %v1025 = vand.u32 %v968, 4294901760
  %1026 = vmatpush.msra.mxu0 %v1025
  %v1027 = vand.u32 %v966, 4294901760
  %1028 = vmatpush.msra.mxu0 %v1027
  %v1029 = vand.u32 %v1000, 4294901760
  %v1030 = vsub.f32 %v1000, %v1029
  %v1031 = vand.u32 %v1030, 4294901760
  %v1032 = vsub.f32 %v1030, %v1031
  %v1033 = vand.u32 %v1032, 4294901760
  %1034 = vmatmul.f32.gmra.mxu0 %v1033
  %v1035 = vpop.f32.mrf.mxu0
  %v1036 = vadd.f32 %v981, %v1035
  %v1037 = vand.u32 %v1003, 4294901760
  %v1038 = vsub.f32 %v1003, %v1037
  %v1039 = vand.u32 %v1038, 4294901760
  %v1040 = vsub.f32 %v1038, %v1039
  %v1041 = vand.u32 %v1040, 4294901760
  %1042 = vmatmul.f32.gmra.mxu0 %v1041
  %v1043 = vpop.f32.mrf.mxu0
  %v1044 = vadd.f32 %v986, %v1043
  %v1045 = vand.u32 %v1006, 4294901760
  %v1046 = vsub.f32 %v1006, %v1045
  %v1047 = vand.u32 %v1046, 4294901760
  %v1048 = vsub.f32 %v1046, %v1047
  %v1049 = vand.u32 %v1048, 4294901760
  %1050 = vmatmul.f32.gmra.mxu0 %v1049
  %v1051 = vpop.f32.mrf.mxu0
  %v1052 = vadd.f32 %v991, %v1051
  %v1053 = vand.u32 %v1009, 4294901760
  %v1054 = vsub.f32 %v1009, %v1053
  %v1055 = vand.u32 %v1054, 4294901760
  %v1056 = vsub.f32 %v1054, %v1055
  %v1057 = vand.u32 %v1056, 4294901760
  %1058 = vmatmul.f32.gmra.mxu0 %v1057
  %v1059 = vpop.f32.mrf.mxu0
  %v1060 = vadd.f32 %v996, %v1059
  %1061 = vdwg.mxu0
  %1062 = vmatpush.msra.mxu0 0.0
  %1063 = vmatpush.msra.mxu0 0.0
  %1064 = vmatpush.msra.mxu0 0.0
  %1065 = vmatpush.msra.mxu0 0.0
  %1066 = vmatpush.msra.mxu0 0.0
  %1067 = vmatpush.msra.mxu0 0.0
  %1068 = vmatpush.msra.mxu0 0.0
  %1069 = vmatpush.msra.mxu0 0.0
  %1070 = vmatpush.msra.mxu0 0.0
  %1071 = vmatpush.msra.mxu0 0.0
  %1072 = vmatpush.msra.mxu0 0.0
  %1073 = vmatpush.msra.mxu0 0.0
  %1074 = vmatpush.msra.mxu0 0.0
  %1075 = vmatpush.msra.mxu0 0.0
  %v1076 = vand.u32 %v968, 4294901760
  %v1077 = vsub.f32 %v968, %v1076
  %v1078 = vand.u32 %v1077, 4294901760
  %v1079 = vsub.f32 %v1077, %v1078
  %v1080 = vand.u32 %v1079, 4294901760
  %1081 = vmatpush.msra.mxu0 %v1080
  %v1082 = vand.u32 %v966, 4294901760
  %v1083 = vsub.f32 %v966, %v1082
  %v1084 = vand.u32 %v1083, 4294901760
  %v1085 = vsub.f32 %v1083, %v1084
  %v1086 = vand.u32 %v1085, 4294901760
  %1087 = vmatpush.msra.mxu0 %v1086
  %v1088 = vand.u32 %v1000, 4294901760
  %1089 = vmatmul.f32.gmra.mxu0 %v1088
  %v1090 = vpop.f32.mrf.mxu0
  %v1091 = vadd.f32 %v1036, %v1090
  %v1092 = vand.u32 %v1003, 4294901760
  %1093 = vmatmul.f32.gmra.mxu0 %v1092
  %v1094 = vpop.f32.mrf.mxu0
  %v1095 = vadd.f32 %v1044, %v1094
  %v1096 = vand.u32 %v1006, 4294901760
  %1097 = vmatmul.f32.gmra.mxu0 %v1096
  %v1098 = vpop.f32.mrf.mxu0
  %v1099 = vadd.f32 %v1052, %v1098
  %v1100 = vand.u32 %v1009, 4294901760
  %1101 = vmatmul.f32.gmra.mxu0 %v1100
  %v1102 = vpop.f32.mrf.mxu0
  %v1103 = vadd.f32 %v1060, %v1102
  %1104 = vdwg.mxu0
  %1105 = vmatpush.msra.mxu0 0.0
  %1106 = vmatpush.msra.mxu0 0.0
  %1107 = vmatpush.msra.mxu0 0.0
  %1108 = vmatpush.msra.mxu0 0.0
  %1109 = vmatpush.msra.mxu0 0.0
  %1110 = vmatpush.msra.mxu0 0.0
  %1111 = vmatpush.msra.mxu0 0.0
  %1112 = vmatpush.msra.mxu0 0.0
  %1113 = vmatpush.msra.mxu0 0.0
  %1114 = vmatpush.msra.mxu0 0.0
  %1115 = vmatpush.msra.mxu0 0.0
  %1116 = vmatpush.msra.mxu0 0.0
  %1117 = vmatpush.msra.mxu0 0.0
  %1118 = vmatpush.msra.mxu0 0.0
  %v1119 = vand.u32 %v968, 4294901760
  %v1120 = vsub.f32 %v968, %v1119
  %1121 = vmatpush.msra.mxu0 %v1120
  %v1122 = vand.u32 %v966, 4294901760
  %v1123 = vsub.f32 %v966, %v1122
  %1124 = vmatpush.msra.mxu0 %v1123
  %v1125 = vand.u32 %v1000, 4294901760
  %v1126 = vsub.f32 %v1000, %v1125
  %1127 = vmatmul.f32.gmra.mxu0 %v1126
  %v1128 = vpop.f32.mrf.mxu0
  %v1129 = vadd.f32 %v1091, %v1128
  %v1130 = vand.u32 %v1003, 4294901760
  %v1131 = vsub.f32 %v1003, %v1130
  %1132 = vmatmul.f32.gmra.mxu0 %v1131
  %v1133 = vpop.f32.mrf.mxu0
  %v1134 = vadd.f32 %v1095, %v1133
  %v1135 = vand.u32 %v1006, 4294901760
  %v1136 = vsub.f32 %v1006, %v1135
  %1137 = vmatmul.f32.gmra.mxu0 %v1136
  %v1138 = vpop.f32.mrf.mxu0
  %v1139 = vadd.f32 %v1099, %v1138
  %v1140 = vand.u32 %v1009, 4294901760
  %v1141 = vsub.f32 %v1009, %v1140
  %1142 = vmatmul.f32.gmra.mxu0 %v1141
  %v1143 = vpop.f32.mrf.mxu0
  %v1144 = vadd.f32 %v1103, %v1143
  %1145 = vdwg.mxu0
  %1146 = vmatpush.msra.mxu0 0.0
  %1147 = vmatpush.msra.mxu0 0.0
  %1148 = vmatpush.msra.mxu0 0.0
  %1149 = vmatpush.msra.mxu0 0.0
  %1150 = vmatpush.msra.mxu0 0.0
  %1151 = vmatpush.msra.mxu0 0.0
  %1152 = vmatpush.msra.mxu0 0.0
  %1153 = vmatpush.msra.mxu0 0.0
  %1154 = vmatpush.msra.mxu0 0.0
  %1155 = vmatpush.msra.mxu0 0.0
  %1156 = vmatpush.msra.mxu0 0.0
  %1157 = vmatpush.msra.mxu0 0.0
  %1158 = vmatpush.msra.mxu0 0.0
  %1159 = vmatpush.msra.mxu0 0.0
  %v1160 = vand.u32 %v968, 4294901760
  %1161 = vmatpush.msra.mxu0 %v1160
  %v1162 = vand.u32 %v966, 4294901760
  %1163 = vmatpush.msra.mxu0 %v1162
  %v1164 = vand.u32 %v1000, 4294901760
  %v1165 = vsub.f32 %v1000, %v1164
  %v1166 = vand.u32 %v1165, 4294901760
  %1167 = vmatmul.f32.gmra.mxu0 %v1166
  %v1168 = vpop.f32.mrf.mxu0
  %v1169 = vadd.f32 %v1129, %v1168
  %v1170 = vand.u32 %v1003, 4294901760
  %v1171 = vsub.f32 %v1003, %v1170
  %v1172 = vand.u32 %v1171, 4294901760
  %1173 = vmatmul.f32.gmra.mxu0 %v1172
  %v1174 = vpop.f32.mrf.mxu0
  %v1175 = vadd.f32 %v1134, %v1174
  %v1176 = vand.u32 %v1006, 4294901760
  %v1177 = vsub.f32 %v1006, %v1176
  %v1178 = vand.u32 %v1177, 4294901760
  %1179 = vmatmul.f32.gmra.mxu0 %v1178
  %v1180 = vpop.f32.mrf.mxu0
  %v1181 = vadd.f32 %v1139, %v1180
  %v1182 = vand.u32 %v1009, 4294901760
  %v1183 = vsub.f32 %v1009, %v1182
  %v1184 = vand.u32 %v1183, 4294901760
  %1185 = vmatmul.f32.gmra.mxu0 %v1184
  %v1186 = vpop.f32.mrf.mxu0
  %v1187 = vadd.f32 %v1144, %v1186
  %1188 = vdwg.mxu0
  %1189 = vmatpush.msra.mxu0 0.0
  %1190 = vmatpush.msra.mxu0 0.0
  %1191 = vmatpush.msra.mxu0 0.0
  %1192 = vmatpush.msra.mxu0 0.0
  %1193 = vmatpush.msra.mxu0 0.0
  %1194 = vmatpush.msra.mxu0 0.0
  %1195 = vmatpush.msra.mxu0 0.0
  %1196 = vmatpush.msra.mxu0 0.0
  %1197 = vmatpush.msra.mxu0 0.0
  %1198 = vmatpush.msra.mxu0 0.0
  %1199 = vmatpush.msra.mxu0 0.0
  %1200 = vmatpush.msra.mxu0 0.0
  %1201 = vmatpush.msra.mxu0 0.0
  %1202 = vmatpush.msra.mxu0 0.0
  %v1203 = vand.u32 %v968, 4294901760
  %v1204 = vsub.f32 %v968, %v1203
  %v1205 = vand.u32 %v1204, 4294901760
  %1206 = vmatpush.msra.mxu0 %v1205
  %v1207 = vand.u32 %v966, 4294901760
  %v1208 = vsub.f32 %v966, %v1207
  %v1209 = vand.u32 %v1208, 4294901760
  %1210 = vmatpush.msra.mxu0 %v1209
  %v1211 = vand.u32 %v1000, 4294901760
  %1212 = vmatmul.f32.gmra.mxu0 %v1211
  %v1213 = vpop.f32.mrf.mxu0
  %v1214 = vadd.f32 %v1169, %v1213
  %v1215 = vand.u32 %v1003, 4294901760
  %1216 = vmatmul.f32.gmra.mxu0 %v1215
  %v1217 = vpop.f32.mrf.mxu0
  %v1218 = vadd.f32 %v1175, %v1217
  %v1219 = vand.u32 %v1006, 4294901760
  %1220 = vmatmul.f32.gmra.mxu0 %v1219
  %v1221 = vpop.f32.mrf.mxu0
  %v1222 = vadd.f32 %v1181, %v1221
  %v1223 = vand.u32 %v1009, 4294901760
  %1224 = vmatmul.f32.gmra.mxu0 %v1223
  %v1225 = vpop.f32.mrf.mxu0
  %v1226 = vadd.f32 %v1187, %v1225
  %1227 = vdwg.mxu0
  %1228 = vmatpush.msra.mxu0 0.0
  %1229 = vmatpush.msra.mxu0 0.0
  %1230 = vmatpush.msra.mxu0 0.0
  %1231 = vmatpush.msra.mxu0 0.0
  %1232 = vmatpush.msra.mxu0 0.0
  %1233 = vmatpush.msra.mxu0 0.0
  %1234 = vmatpush.msra.mxu0 0.0
  %1235 = vmatpush.msra.mxu0 0.0
  %1236 = vmatpush.msra.mxu0 0.0
  %1237 = vmatpush.msra.mxu0 0.0
  %1238 = vmatpush.msra.mxu0 0.0
  %1239 = vmatpush.msra.mxu0 0.0
  %1240 = vmatpush.msra.mxu0 0.0
  %1241 = vmatpush.msra.mxu0 0.0
  %v1242 = vand.u32 %v968, 4294901760
  %1243 = vmatpush.msra.mxu0 %v1242
  %v1244 = vand.u32 %v966, 4294901760
  %1245 = vmatpush.msra.mxu0 %v1244
  %v1246 = vand.u32 %v1000, 4294901760
  %1247 = vmatmul.f32.gmra.mxu0 %v1246
  %v1248 = vpop.f32.mrf.mxu0
  %v1249 = vadd.f32 %v1214, %v1248
  %v1250 = vand.u32 %v1003, 4294901760
  %1251 = vmatmul.f32.gmra.mxu0 %v1250
  %v1252 = vpop.f32.mrf.mxu0
  %v1253 = vadd.f32 %v1218, %v1252
  %v1254 = vand.u32 %v1006, 4294901760
  %1255 = vmatmul.f32.gmra.mxu0 %v1254
  %v1256 = vpop.f32.mrf.mxu0
  %v1257 = vadd.f32 %v1222, %v1256
  %v1258 = vand.u32 %v1009, 4294901760
  %1259 = vmatmul.f32.gmra.mxu0 %v1258
  %v1260 = vpop.f32.mrf.mxu0
  %v1261 = vadd.f32 %v1226, %v1260
  %1262 = vdwg.mxu0
  %1263 = vmatpush.msra.mxu0 0.0
  %1264 = vmatpush.msra.mxu0 0.0
  %1265 = vmatpush.msra.mxu0 0.0
  %1266 = vmatpush.msra.mxu0 0.0
  %1267 = vmatpush.msra.mxu0 0.0
  %1268 = vmatpush.msra.mxu0 0.0
  %1269 = vmatpush.msra.mxu0 0.0
  %1270 = vmatpush.msra.mxu0 0.0
  %1271 = vmatpush.msra.mxu0 0.0
  %1272 = vmatpush.msra.mxu0 0.0
  %1273 = vmatpush.msra.mxu0 0.0
  %1274 = vmatpush.msra.mxu0 0.0
  %1275 = vmatpush.msra.mxu0 0.0
  %1276 = vmatpush.msra.mxu0 0.0
  %v1277 = vand.u32 %v969, 4294901760
  %1278 = vmatpush.msra.mxu0 %v1277
  %v1279 = vand.u32 %v967, 4294901760
  %1280 = vmatpush.msra.mxu0 %v1279
  %v1281 = vand.u32 %v1000, 4294901760
  %v1282 = vsub.f32 %v1000, %v1281
  %v1283 = vand.u32 %v1282, 4294901760
  %v1284 = vsub.f32 %v1282, %v1283
  %v1285 = vand.u32 %v1284, 4294901760
  %1286 = vmatmul.f32.gmra.mxu0 %v1285
  %v1287 = vpop.f32.mrf.mxu0
  %v1288 = vadd.f32 %v981, %v1287
  %v1289 = vand.u32 %v1003, 4294901760
  %v1290 = vsub.f32 %v1003, %v1289
  %v1291 = vand.u32 %v1290, 4294901760
  %v1292 = vsub.f32 %v1290, %v1291
  %v1293 = vand.u32 %v1292, 4294901760
  %1294 = vmatmul.f32.gmra.mxu0 %v1293
  %v1295 = vpop.f32.mrf.mxu0
  %v1296 = vadd.f32 %v986, %v1295
  %v1297 = vand.u32 %v1006, 4294901760
  %v1298 = vsub.f32 %v1006, %v1297
  %v1299 = vand.u32 %v1298, 4294901760
  %v1300 = vsub.f32 %v1298, %v1299
  %v1301 = vand.u32 %v1300, 4294901760
  %1302 = vmatmul.f32.gmra.mxu0 %v1301
  %v1303 = vpop.f32.mrf.mxu0
  %v1304 = vadd.f32 %v991, %v1303
  %v1305 = vand.u32 %v1009, 4294901760
  %v1306 = vsub.f32 %v1009, %v1305
  %v1307 = vand.u32 %v1306, 4294901760
  %v1308 = vsub.f32 %v1306, %v1307
  %v1309 = vand.u32 %v1308, 4294901760
  %1310 = vmatmul.f32.gmra.mxu0 %v1309
  %v1311 = vpop.f32.mrf.mxu0
  %v1312 = vadd.f32 %v996, %v1311
  %1313 = vdwg.mxu0
  %1314 = vmatpush.msra.mxu0 0.0
  %1315 = vmatpush.msra.mxu0 0.0
  %1316 = vmatpush.msra.mxu0 0.0
  %1317 = vmatpush.msra.mxu0 0.0
  %1318 = vmatpush.msra.mxu0 0.0
  %1319 = vmatpush.msra.mxu0 0.0
  %1320 = vmatpush.msra.mxu0 0.0
  %1321 = vmatpush.msra.mxu0 0.0
  %1322 = vmatpush.msra.mxu0 0.0
  %1323 = vmatpush.msra.mxu0 0.0
  %1324 = vmatpush.msra.mxu0 0.0
  %1325 = vmatpush.msra.mxu0 0.0
  %1326 = vmatpush.msra.mxu0 0.0
  %1327 = vmatpush.msra.mxu0 0.0
  %v1328 = vand.u32 %v969, 4294901760
  %v1329 = vsub.f32 %v969, %v1328
  %v1330 = vand.u32 %v1329, 4294901760
  %v1331 = vsub.f32 %v1329, %v1330
  %v1332 = vand.u32 %v1331, 4294901760
  %1333 = vmatpush.msra.mxu0 %v1332
  %v1334 = vand.u32 %v967, 4294901760
  %v1335 = vsub.f32 %v967, %v1334
  %v1336 = vand.u32 %v1335, 4294901760
  %v1337 = vsub.f32 %v1335, %v1336
  %v1338 = vand.u32 %v1337, 4294901760
  %1339 = vmatpush.msra.mxu0 %v1338
  %v1340 = vand.u32 %v1000, 4294901760
  %1341 = vmatmul.f32.gmra.mxu0 %v1340
  %v1342 = vpop.f32.mrf.mxu0
  %v1343 = vadd.f32 %v1288, %v1342
  %v1344 = vand.u32 %v1003, 4294901760
  %1345 = vmatmul.f32.gmra.mxu0 %v1344
  %v1346 = vpop.f32.mrf.mxu0
  %v1347 = vadd.f32 %v1296, %v1346
  %v1348 = vand.u32 %v1006, 4294901760
  %1349 = vmatmul.f32.gmra.mxu0 %v1348
  %v1350 = vpop.f32.mrf.mxu0
  %v1351 = vadd.f32 %v1304, %v1350
  %v1352 = vand.u32 %v1009, 4294901760
  %1353 = vmatmul.f32.gmra.mxu0 %v1352
  %v1354 = vpop.f32.mrf.mxu0
  %v1355 = vadd.f32 %v1312, %v1354
  %1356 = vdwg.mxu0
  %1357 = vmatpush.msra.mxu0 0.0
  %1358 = vmatpush.msra.mxu0 0.0
  %1359 = vmatpush.msra.mxu0 0.0
  %1360 = vmatpush.msra.mxu0 0.0
  %1361 = vmatpush.msra.mxu0 0.0
  %1362 = vmatpush.msra.mxu0 0.0
  %1363 = vmatpush.msra.mxu0 0.0
  %1364 = vmatpush.msra.mxu0 0.0
  %1365 = vmatpush.msra.mxu0 0.0
  %1366 = vmatpush.msra.mxu0 0.0
  %1367 = vmatpush.msra.mxu0 0.0
  %1368 = vmatpush.msra.mxu0 0.0
  %1369 = vmatpush.msra.mxu0 0.0
  %1370 = vmatpush.msra.mxu0 0.0
  %v1371 = vand.u32 %v969, 4294901760
  %v1372 = vsub.f32 %v969, %v1371
  %1373 = vmatpush.msra.mxu0 %v1372
  %v1374 = vand.u32 %v967, 4294901760
  %v1375 = vsub.f32 %v967, %v1374
  %1376 = vmatpush.msra.mxu0 %v1375
  %v1377 = vand.u32 %v1000, 4294901760
  %v1378 = vsub.f32 %v1000, %v1377
  %1379 = vmatmul.f32.gmra.mxu0 %v1378
  %v1380 = vpop.f32.mrf.mxu0
  %v1381 = vadd.f32 %v1343, %v1380
  %v1382 = vand.u32 %v1003, 4294901760
  %v1383 = vsub.f32 %v1003, %v1382
  %1384 = vmatmul.f32.gmra.mxu0 %v1383
  %v1385 = vpop.f32.mrf.mxu0
  %v1386 = vadd.f32 %v1347, %v1385
  %v1387 = vand.u32 %v1006, 4294901760
  %v1388 = vsub.f32 %v1006, %v1387
  %1389 = vmatmul.f32.gmra.mxu0 %v1388
  %v1390 = vpop.f32.mrf.mxu0
  %v1391 = vadd.f32 %v1351, %v1390
  %v1392 = vand.u32 %v1009, 4294901760
  %v1393 = vsub.f32 %v1009, %v1392
  %1394 = vmatmul.f32.gmra.mxu0 %v1393
  %v1395 = vpop.f32.mrf.mxu0
  %v1396 = vadd.f32 %v1355, %v1395
  %1397 = vdwg.mxu0
  %1398 = vmatpush.msra.mxu0 0.0
  %1399 = vmatpush.msra.mxu0 0.0
  %1400 = vmatpush.msra.mxu0 0.0
  %1401 = vmatpush.msra.mxu0 0.0
  %1402 = vmatpush.msra.mxu0 0.0
  %1403 = vmatpush.msra.mxu0 0.0
  %1404 = vmatpush.msra.mxu0 0.0
  %1405 = vmatpush.msra.mxu0 0.0
  %1406 = vmatpush.msra.mxu0 0.0
  %1407 = vmatpush.msra.mxu0 0.0
  %1408 = vmatpush.msra.mxu0 0.0
  %1409 = vmatpush.msra.mxu0 0.0
  %1410 = vmatpush.msra.mxu0 0.0
  %1411 = vmatpush.msra.mxu0 0.0
  %v1412 = vand.u32 %v969, 4294901760
  %1413 = vmatpush.msra.mxu0 %v1412
  %v1414 = vand.u32 %v967, 4294901760
  %1415 = vmatpush.msra.mxu0 %v1414
  %v1416 = vand.u32 %v1000, 4294901760
  %v1417 = vsub.f32 %v1000, %v1416
  %v1418 = vand.u32 %v1417, 4294901760
  %1419 = vmatmul.f32.gmra.mxu0 %v1418
  %v1420 = vpop.f32.mrf.mxu0
  %v1421 = vadd.f32 %v1381, %v1420
  %v1422 = vand.u32 %v1003, 4294901760
  %v1423 = vsub.f32 %v1003, %v1422
  %v1424 = vand.u32 %v1423, 4294901760
  %1425 = vmatmul.f32.gmra.mxu0 %v1424
  %v1426 = vpop.f32.mrf.mxu0
  %v1427 = vadd.f32 %v1386, %v1426
  %v1428 = vand.u32 %v1006, 4294901760
  %v1429 = vsub.f32 %v1006, %v1428
  %v1430 = vand.u32 %v1429, 4294901760
  %1431 = vmatmul.f32.gmra.mxu0 %v1430
  %v1432 = vpop.f32.mrf.mxu0
  %v1433 = vadd.f32 %v1391, %v1432
  %v1434 = vand.u32 %v1009, 4294901760
  %v1435 = vsub.f32 %v1009, %v1434
  %v1436 = vand.u32 %v1435, 4294901760
  %1437 = vmatmul.f32.gmra.mxu0 %v1436
  %v1438 = vpop.f32.mrf.mxu0
  %v1439 = vadd.f32 %v1396, %v1438
  %1440 = vdwg.mxu0
  %1441 = vmatpush.msra.mxu0 0.0
  %1442 = vmatpush.msra.mxu0 0.0
  %1443 = vmatpush.msra.mxu0 0.0
  %1444 = vmatpush.msra.mxu0 0.0
  %1445 = vmatpush.msra.mxu0 0.0
  %1446 = vmatpush.msra.mxu0 0.0
  %1447 = vmatpush.msra.mxu0 0.0
  %1448 = vmatpush.msra.mxu0 0.0
  %1449 = vmatpush.msra.mxu0 0.0
  %1450 = vmatpush.msra.mxu0 0.0
  %1451 = vmatpush.msra.mxu0 0.0
  %1452 = vmatpush.msra.mxu0 0.0
  %1453 = vmatpush.msra.mxu0 0.0
  %1454 = vmatpush.msra.mxu0 0.0
  %v1455 = vand.u32 %v969, 4294901760
  %v1456 = vsub.f32 %v969, %v1455
  %v1457 = vand.u32 %v1456, 4294901760
  %1458 = vmatpush.msra.mxu0 %v1457
  %v1459 = vand.u32 %v967, 4294901760
  %v1460 = vsub.f32 %v967, %v1459
  %v1461 = vand.u32 %v1460, 4294901760
  %1462 = vmatpush.msra.mxu0 %v1461
  %v1463 = vand.u32 %v1000, 4294901760
  %1464 = vmatmul.f32.gmra.mxu0 %v1463
  %v1465 = vpop.f32.mrf.mxu0
  %v1466 = vadd.f32 %v1421, %v1465
  %v1467 = vand.u32 %v1003, 4294901760
  %1468 = vmatmul.f32.gmra.mxu0 %v1467
  %v1469 = vpop.f32.mrf.mxu0
  %v1470 = vadd.f32 %v1427, %v1469
  %v1471 = vand.u32 %v1006, 4294901760
  %1472 = vmatmul.f32.gmra.mxu0 %v1471
  %v1473 = vpop.f32.mrf.mxu0
  %v1474 = vadd.f32 %v1433, %v1473
  %v1475 = vand.u32 %v1009, 4294901760
  %1476 = vmatmul.f32.gmra.mxu0 %v1475
  %v1477 = vpop.f32.mrf.mxu0
  %v1478 = vadd.f32 %v1439, %v1477
  %1479 = vdwg.mxu0
  %1480 = vmatpush.msra.mxu0 0.0
  %1481 = vmatpush.msra.mxu0 0.0
  %1482 = vmatpush.msra.mxu0 0.0
  %1483 = vmatpush.msra.mxu0 0.0
  %1484 = vmatpush.msra.mxu0 0.0
  %1485 = vmatpush.msra.mxu0 0.0
  %1486 = vmatpush.msra.mxu0 0.0
  %1487 = vmatpush.msra.mxu0 0.0
  %1488 = vmatpush.msra.mxu0 0.0
  %1489 = vmatpush.msra.mxu0 0.0
  %1490 = vmatpush.msra.mxu0 0.0
  %1491 = vmatpush.msra.mxu0 0.0
  %1492 = vmatpush.msra.mxu0 0.0
  %1493 = vmatpush.msra.mxu0 0.0
  %v1494 = vand.u32 %v969, 4294901760
  %1495 = vmatpush.msra.mxu0 %v1494
  %v1496 = vand.u32 %v967, 4294901760
  %1497 = vmatpush.msra.mxu0 %v1496
  %v1498 = vand.u32 %v1000, 4294901760
  %1499 = vmatmul.f32.gmra.mxu0 %v1498
  %v1500 = vpop.f32.mrf.mxu0
  %v1501 = vadd.f32 %v1466, %v1500
  %v1502 = vand.u32 %v1003, 4294901760
  %1503 = vmatmul.f32.gmra.mxu0 %v1502
  %v1504 = vpop.f32.mrf.mxu0
  %v1505 = vadd.f32 %v1470, %v1504
  %v1506 = vand.u32 %v1006, 4294901760
  %1507 = vmatmul.f32.gmra.mxu0 %v1506
  %v1508 = vpop.f32.mrf.mxu0
  %v1509 = vadd.f32 %v1474, %v1508
  %v1510 = vand.u32 %v1009, 4294901760
  %1511 = vmatmul.f32.gmra.mxu0 %v1510
  %v1512 = vpop.f32.mrf.mxu0
  %v1513 = vadd.f32 %v1478, %v1512
  %1514 = vdwg.mxu0
  %1515 = vst [vmem:[%s6] sm:$0xff] %v1257
  %1516 = vst [vmem:[%s6 + $0x8] sm:$0xff] %v1509
  %1517 = vst [vmem:[%s6 + $0x10] sm:$0xff] %v1261
  %1518 = vst [vmem:[%s6 + $0x18] sm:$0xff] %v1513
  %v1519 = vadd.f32 %v1249, %v25
  %v1520 = vadd.f32 %v1501, %v26
  %v1521 = vadd.f32 %v1253, %v27
  %v1522 = vadd.f32 %v1505, %v28
  %vm1523 = vcmp.lt.s32.totalorder %v54, 4
  %vm1524 = vcmp.lt.s32.totalorder %v55, 4
  %1525 = vrot.lane.b32.xlu0 %v1519, 4
  %v1526 = vpop.permute.xlu0 %1525
  %1527 = vrot.lane.b32.xlu0 %v1521, 4
  %v1528 = vpop.permute.xlu0 %1527
  %1529 = vrot.lane.b32.xlu0 %v1520, 4
  %v1530 = vpop.permute.xlu0 %1529
  %1531 = vrot.lane.b32.xlu0 %v1522, 4
  %v1532 = vpop.permute.xlu0 %1531
  %vm1533 = vcmp.lt.s32.totalorder %v30, 4
  %v1534 = vsel %vm1533, %v1526, %v1530
  %v1535 = vsel %vm1533, %v1528, %v1532
  %v1536 = vsel %vm1533, %v1530, %v1526
  %v1537 = vsel %vm1533, %v1532, %v1528
  %v1538 = vsel %vm1523, 0.0, %v1536
  %v1539 = vsel %vm1524, 0.0, %v1534
  %v1540 = vsel %vm1523, 0.0, %v1537
  %v1541 = vsel %vm1524, 0.0, %v1535
  %1542 = vrot.lane.b32.xlu0 %v1519, 2
  %v1543 = vpop.permute.xlu0 %1542
  %1544 = vrot.lane.b32.xlu0 %v1521, 2
  %v1545 = vpop.permute.xlu0 %1544
  %1546 = vrot.lane.b32.xlu0 %v1520, 2
  %v1547 = vpop.permute.xlu0 %1546
  %1548 = vrot.lane.b32.xlu0 %v1522, 2
  %v1549 = vpop.permute.xlu0 %1548
  %v1550 = vsel %vm66, %v1543, %v1547
  %v1551 = vsel %vm66, %v1545, %v1549
  %v1552 = vsel %vm66, %v1547, %v1543
  %v1553 = vsel %vm66, %v1549, %v1545
  %v1554 = vsel %vm56, 0.0, %v1552
  %v1555 = vsel %vm57, 0.0, %v1550
  %v1556 = vsel %vm56, 0.0, %v1553
  %v1557 = vsel %vm57, 0.0, %v1551
  %s1558 = scalar_lea.vmem %s1, 32
  %v1559 = vld [vmem:[%s1558] sm:$0xff]
  %v1560 = vld [vmem:[%s1558 + $0x8] sm:$0xff]
  %v1561 = vld [vmem:[%s1558 + $0x10] sm:$0xff]
  %v1562 = vld [vmem:[%s1558 + $0x18] sm:$0xff]
  %v1564 = vsel %vm98, %v1559, 0
  %v1567 = vsel %vm98, %v1560, 0
  %v1570 = vsel %vm98, %v1561, 0
  %v1573 = vsel %vm98, %v1562, 0
  %1575 = vmatpush.msra.mxu0 0.0
  %1576 = vmatpush.msra.mxu0 0.0
  %1577 = vmatpush.msra.mxu0 0.0
  %1578 = vmatpush.msra.mxu0 0.0
  %1579 = vmatpush.msra.mxu0 0.0
  %1580 = vmatpush.msra.mxu0 0.0
  %1581 = vmatpush.msra.mxu0 0.0
  %1582 = vmatpush.msra.mxu0 0.0
  %1583 = vmatpush.msra.mxu0 0.0
  %1584 = vmatpush.msra.mxu0 0.0
  %v1585 = vand.u32 %v1521, 4294901760
  %1586 = vmatpush.msra.mxu0 %v1585
  %v1587 = vand.u32 %v1519, 4294901760
  %1588 = vmatpush.msra.mxu0 %v1587
  %v1589 = vand.u32 %v1556, 4294901760
  %1590 = vmatpush.msra.mxu0 %v1589
  %v1591 = vand.u32 %v1554, 4294901760
  %1592 = vmatpush.msra.mxu0 %v1591
  %v1593 = vand.u32 %v1540, 4294901760
  %1594 = vmatpush.msra.mxu0 %v1593
  %v1595 = vand.u32 %v1538, 4294901760
  %1596 = vmatpush.msra.mxu0 %v1595
  %v1597 = vand.u32 %v1564, 4294901760
  %v1598 = vsub.f32 %v1564, %v1597
  %v1599 = vand.u32 %v1598, 4294901760
  %v1600 = vsub.f32 %v1598, %v1599
  %v1601 = vand.u32 %v1600, 4294901760
  %1602 = vmatmul.f32.gmra.mxu0 %v1601
  %v1603 = vpop.f32.mrf.mxu0
  %v1604 = vadd.f32 0.0, %v1603
  %v1605 = vand.u32 %v1567, 4294901760
  %v1606 = vsub.f32 %v1567, %v1605
  %v1607 = vand.u32 %v1606, 4294901760
  %v1608 = vsub.f32 %v1606, %v1607
  %v1609 = vand.u32 %v1608, 4294901760
  %1610 = vmatmul.f32.gmra.mxu0 %v1609
  %v1611 = vpop.f32.mrf.mxu0
  %v1612 = vadd.f32 0.0, %v1611
  %v1613 = vand.u32 %v1570, 4294901760
  %v1614 = vsub.f32 %v1570, %v1613
  %v1615 = vand.u32 %v1614, 4294901760
  %v1616 = vsub.f32 %v1614, %v1615
  %v1617 = vand.u32 %v1616, 4294901760
  %1618 = vmatmul.f32.gmra.mxu0 %v1617
  %v1619 = vpop.f32.mrf.mxu0
  %v1620 = vadd.f32 0.0, %v1619
  %v1621 = vand.u32 %v1573, 4294901760
  %v1622 = vsub.f32 %v1573, %v1621
  %v1623 = vand.u32 %v1622, 4294901760
  %v1624 = vsub.f32 %v1622, %v1623
  %v1625 = vand.u32 %v1624, 4294901760
  %1626 = vmatmul.f32.gmra.mxu0 %v1625
  %v1627 = vpop.f32.mrf.mxu0
  %v1628 = vadd.f32 0.0, %v1627
  %1629 = vdwg.mxu0
  %1630 = vmatpush.msra.mxu0 0.0
  %1631 = vmatpush.msra.mxu0 0.0
  %1632 = vmatpush.msra.mxu0 0.0
  %1633 = vmatpush.msra.mxu0 0.0
  %1634 = vmatpush.msra.mxu0 0.0
  %1635 = vmatpush.msra.mxu0 0.0
  %1636 = vmatpush.msra.mxu0 0.0
  %1637 = vmatpush.msra.mxu0 0.0
  %1638 = vmatpush.msra.mxu0 0.0
  %1639 = vmatpush.msra.mxu0 0.0
  %v1640 = vand.u32 %v1521, 4294901760
  %v1641 = vsub.f32 %v1521, %v1640
  %v1642 = vand.u32 %v1641, 4294901760
  %v1643 = vsub.f32 %v1641, %v1642
  %v1644 = vand.u32 %v1643, 4294901760
  %1645 = vmatpush.msra.mxu0 %v1644
  %v1646 = vand.u32 %v1519, 4294901760
  %v1647 = vsub.f32 %v1519, %v1646
  %v1648 = vand.u32 %v1647, 4294901760
  %v1649 = vsub.f32 %v1647, %v1648
  %v1650 = vand.u32 %v1649, 4294901760
  %1651 = vmatpush.msra.mxu0 %v1650
  %v1652 = vand.u32 %v1556, 4294901760
  %v1653 = vsub.f32 %v1556, %v1652
  %v1654 = vand.u32 %v1653, 4294901760
  %v1655 = vsub.f32 %v1653, %v1654
  %v1656 = vand.u32 %v1655, 4294901760
  %1657 = vmatpush.msra.mxu0 %v1656
  %v1658 = vand.u32 %v1554, 4294901760
  %v1659 = vsub.f32 %v1554, %v1658
  %v1660 = vand.u32 %v1659, 4294901760
  %v1661 = vsub.f32 %v1659, %v1660
  %v1662 = vand.u32 %v1661, 4294901760
  %1663 = vmatpush.msra.mxu0 %v1662
  %v1664 = vand.u32 %v1540, 4294901760
  %v1665 = vsub.f32 %v1540, %v1664
  %v1666 = vand.u32 %v1665, 4294901760
  %v1667 = vsub.f32 %v1665, %v1666
  %v1668 = vand.u32 %v1667, 4294901760
  %1669 = vmatpush.msra.mxu0 %v1668
  %v1670 = vand.u32 %v1538, 4294901760
  %v1671 = vsub.f32 %v1538, %v1670
  %v1672 = vand.u32 %v1671, 4294901760
  %v1673 = vsub.f32 %v1671, %v1672
  %v1674 = vand.u32 %v1673, 4294901760
  %1675 = vmatpush.msra.mxu0 %v1674
  %v1676 = vand.u32 %v1564, 4294901760
  %1677 = vmatmul.f32.gmra.mxu0 %v1676
  %v1678 = vpop.f32.mrf.mxu0
  %v1679 = vadd.f32 %v1604, %v1678
  %v1680 = vand.u32 %v1567, 4294901760
  %1681 = vmatmul.f32.gmra.mxu0 %v1680
  %v1682 = vpop.f32.mrf.mxu0
  %v1683 = vadd.f32 %v1612, %v1682
  %v1684 = vand.u32 %v1570, 4294901760
  %1685 = vmatmul.f32.gmra.mxu0 %v1684
  %v1686 = vpop.f32.mrf.mxu0
  %v1687 = vadd.f32 %v1620, %v1686
  %v1688 = vand.u32 %v1573, 4294901760
  %1689 = vmatmul.f32.gmra.mxu0 %v1688
  %v1690 = vpop.f32.mrf.mxu0
  %v1691 = vadd.f32 %v1628, %v1690
  %1692 = vdwg.mxu0
  %1693 = vmatpush.msra.mxu0 0.0
  %1694 = vmatpush.msra.mxu0 0.0
  %1695 = vmatpush.msra.mxu0 0.0
  %1696 = vmatpush.msra.mxu0 0.0
  %1697 = vmatpush.msra.mxu0 0.0
  %1698 = vmatpush.msra.mxu0 0.0
  %1699 = vmatpush.msra.mxu0 0.0
  %1700 = vmatpush.msra.mxu0 0.0
  %1701 = vmatpush.msra.mxu0 0.0
  %1702 = vmatpush.msra.mxu0 0.0
  %v1703 = vand.u32 %v1521, 4294901760
  %v1704 = vsub.f32 %v1521, %v1703
  %1705 = vmatpush.msra.mxu0 %v1704
  %v1706 = vand.u32 %v1519, 4294901760
  %v1707 = vsub.f32 %v1519, %v1706
  %1708 = vmatpush.msra.mxu0 %v1707
  %v1709 = vand.u32 %v1556, 4294901760
  %v1710 = vsub.f32 %v1556, %v1709
  %1711 = vmatpush.msra.mxu0 %v1710
  %v1712 = vand.u32 %v1554, 4294901760
  %v1713 = vsub.f32 %v1554, %v1712
  %1714 = vmatpush.msra.mxu0 %v1713
  %v1715 = vand.u32 %v1540, 4294901760
  %v1716 = vsub.f32 %v1540, %v1715
  %1717 = vmatpush.msra.mxu0 %v1716
  %v1718 = vand.u32 %v1538, 4294901760
  %v1719 = vsub.f32 %v1538, %v1718
  %1720 = vmatpush.msra.mxu0 %v1719
  %v1721 = vand.u32 %v1564, 4294901760
  %v1722 = vsub.f32 %v1564, %v1721
  %1723 = vmatmul.f32.gmra.mxu0 %v1722
  %v1724 = vpop.f32.mrf.mxu0
  %v1725 = vadd.f32 %v1679, %v1724
  %v1726 = vand.u32 %v1567, 4294901760
  %v1727 = vsub.f32 %v1567, %v1726
  %1728 = vmatmul.f32.gmra.mxu0 %v1727
  %v1729 = vpop.f32.mrf.mxu0
  %v1730 = vadd.f32 %v1683, %v1729
  %v1731 = vand.u32 %v1570, 4294901760
  %v1732 = vsub.f32 %v1570, %v1731
  %1733 = vmatmul.f32.gmra.mxu0 %v1732
  %v1734 = vpop.f32.mrf.mxu0
  %v1735 = vadd.f32 %v1687, %v1734
  %v1736 = vand.u32 %v1573, 4294901760
  %v1737 = vsub.f32 %v1573, %v1736
  %1738 = vmatmul.f32.gmra.mxu0 %v1737
  %v1739 = vpop.f32.mrf.mxu0
  %v1740 = vadd.f32 %v1691, %v1739
  %1741 = vdwg.mxu0
  %1742 = vmatpush.msra.mxu0 0.0
  %1743 = vmatpush.msra.mxu0 0.0
  %1744 = vmatpush.msra.mxu0 0.0
  %1745 = vmatpush.msra.mxu0 0.0
  %1746 = vmatpush.msra.mxu0 0.0
  %1747 = vmatpush.msra.mxu0 0.0
  %1748 = vmatpush.msra.mxu0 0.0
  %1749 = vmatpush.msra.mxu0 0.0
  %1750 = vmatpush.msra.mxu0 0.0
  %1751 = vmatpush.msra.mxu0 0.0
  %v1752 = vand.u32 %v1521, 4294901760
  %1753 = vmatpush.msra.mxu0 %v1752
  %v1754 = vand.u32 %v1519, 4294901760
  %1755 = vmatpush.msra.mxu0 %v1754
  %v1756 = vand.u32 %v1556, 4294901760
  %1757 = vmatpush.msra.mxu0 %v1756
  %v1758 = vand.u32 %v1554, 4294901760
  %1759 = vmatpush.msra.mxu0 %v1758
  %v1760 = vand.u32 %v1540, 4294901760
  %1761 = vmatpush.msra.mxu0 %v1760
  %v1762 = vand.u32 %v1538, 4294901760
  %1763 = vmatpush.msra.mxu0 %v1762
  %v1764 = vand.u32 %v1564, 4294901760
  %v1765 = vsub.f32 %v1564, %v1764
  %v1766 = vand.u32 %v1765, 4294901760
  %1767 = vmatmul.f32.gmra.mxu0 %v1766
  %v1768 = vpop.f32.mrf.mxu0
  %v1769 = vadd.f32 %v1725, %v1768
  %v1770 = vand.u32 %v1567, 4294901760
  %v1771 = vsub.f32 %v1567, %v1770
  %v1772 = vand.u32 %v1771, 4294901760
  %1773 = vmatmul.f32.gmra.mxu0 %v1772
  %v1774 = vpop.f32.mrf.mxu0
  %v1775 = vadd.f32 %v1730, %v1774
  %v1776 = vand.u32 %v1570, 4294901760
  %v1777 = vsub.f32 %v1570, %v1776
  %v1778 = vand.u32 %v1777, 4294901760
  %1779 = vmatmul.f32.gmra.mxu0 %v1778
  %v1780 = vpop.f32.mrf.mxu0
  %v1781 = vadd.f32 %v1735, %v1780
  %v1782 = vand.u32 %v1573, 4294901760
  %v1783 = vsub.f32 %v1573, %v1782
  %v1784 = vand.u32 %v1783, 4294901760
  %1785 = vmatmul.f32.gmra.mxu0 %v1784
  %v1786 = vpop.f32.mrf.mxu0
  %v1787 = vadd.f32 %v1740, %v1786
  %1788 = vdwg.mxu0
  %1789 = vmatpush.msra.mxu0 0.0
  %1790 = vmatpush.msra.mxu0 0.0
  %1791 = vmatpush.msra.mxu0 0.0
  %1792 = vmatpush.msra.mxu0 0.0
  %1793 = vmatpush.msra.mxu0 0.0
  %1794 = vmatpush.msra.mxu0 0.0
  %1795 = vmatpush.msra.mxu0 0.0
  %1796 = vmatpush.msra.mxu0 0.0
  %1797 = vmatpush.msra.mxu0 0.0
  %1798 = vmatpush.msra.mxu0 0.0
  %v1799 = vand.u32 %v1521, 4294901760
  %v1800 = vsub.f32 %v1521, %v1799
  %v1801 = vand.u32 %v1800, 4294901760
  %1802 = vmatpush.msra.mxu0 %v1801
  %v1803 = vand.u32 %v1519, 4294901760
  %v1804 = vsub.f32 %v1519, %v1803
  %v1805 = vand.u32 %v1804, 4294901760
  %1806 = vmatpush.msra.mxu0 %v1805
  %v1807 = vand.u32 %v1556, 4294901760
  %v1808 = vsub.f32 %v1556, %v1807
  %v1809 = vand.u32 %v1808, 4294901760
  %1810 = vmatpush.msra.mxu0 %v1809
  %v1811 = vand.u32 %v1554, 4294901760
  %v1812 = vsub.f32 %v1554, %v1811
  %v1813 = vand.u32 %v1812, 4294901760
  %1814 = vmatpush.msra.mxu0 %v1813
  %v1815 = vand.u32 %v1540, 4294901760
  %v1816 = vsub.f32 %v1540, %v1815
  %v1817 = vand.u32 %v1816, 4294901760
  %1818 = vmatpush.msra.mxu0 %v1817
  %v1819 = vand.u32 %v1538, 4294901760
  %v1820 = vsub.f32 %v1538, %v1819
  %v1821 = vand.u32 %v1820, 4294901760
  %1822 = vmatpush.msra.mxu0 %v1821
  %v1823 = vand.u32 %v1564, 4294901760
  %1824 = vmatmul.f32.gmra.mxu0 %v1823
  %v1825 = vpop.f32.mrf.mxu0
  %v1826 = vadd.f32 %v1769, %v1825
  %v1827 = vand.u32 %v1567, 4294901760
  %1828 = vmatmul.f32.gmra.mxu0 %v1827
  %v1829 = vpop.f32.mrf.mxu0
  %v1830 = vadd.f32 %v1775, %v1829
  %v1831 = vand.u32 %v1570, 4294901760
  %1832 = vmatmul.f32.gmra.mxu0 %v1831
  %v1833 = vpop.f32.mrf.mxu0
  %v1834 = vadd.f32 %v1781, %v1833
  %v1835 = vand.u32 %v1573, 4294901760
  %1836 = vmatmul.f32.gmra.mxu0 %v1835
  %v1837 = vpop.f32.mrf.mxu0
  %v1838 = vadd.f32 %v1787, %v1837
  %1839 = vdwg.mxu0
  %1840 = vmatpush.msra.mxu0 0.0
  %1841 = vmatpush.msra.mxu0 0.0
  %1842 = vmatpush.msra.mxu0 0.0
  %1843 = vmatpush.msra.mxu0 0.0
  %1844 = vmatpush.msra.mxu0 0.0
  %1845 = vmatpush.msra.mxu0 0.0
  %1846 = vmatpush.msra.mxu0 0.0
  %1847 = vmatpush.msra.mxu0 0.0
  %1848 = vmatpush.msra.mxu0 0.0
  %1849 = vmatpush.msra.mxu0 0.0
  %v1850 = vand.u32 %v1521, 4294901760
  %1851 = vmatpush.msra.mxu0 %v1850
  %v1852 = vand.u32 %v1519, 4294901760
  %1853 = vmatpush.msra.mxu0 %v1852
  %v1854 = vand.u32 %v1556, 4294901760
  %1855 = vmatpush.msra.mxu0 %v1854
  %v1856 = vand.u32 %v1554, 4294901760
  %1857 = vmatpush.msra.mxu0 %v1856
  %v1858 = vand.u32 %v1540, 4294901760
  %1859 = vmatpush.msra.mxu0 %v1858
  %v1860 = vand.u32 %v1538, 4294901760
  %1861 = vmatpush.msra.mxu0 %v1860
  %v1862 = vand.u32 %v1564, 4294901760
  %1863 = vmatmul.f32.gmra.mxu0 %v1862
  %v1864 = vpop.f32.mrf.mxu0
  %v1865 = vadd.f32 %v1826, %v1864
  %v1866 = vand.u32 %v1567, 4294901760
  %1867 = vmatmul.f32.gmra.mxu0 %v1866
  %v1868 = vpop.f32.mrf.mxu0
  %v1869 = vadd.f32 %v1830, %v1868
  %v1870 = vand.u32 %v1570, 4294901760
  %1871 = vmatmul.f32.gmra.mxu0 %v1870
  %v1872 = vpop.f32.mrf.mxu0
  %v1873 = vadd.f32 %v1834, %v1872
  %v1874 = vand.u32 %v1573, 4294901760
  %1875 = vmatmul.f32.gmra.mxu0 %v1874
  %v1876 = vpop.f32.mrf.mxu0
  %v1877 = vadd.f32 %v1838, %v1876
  %1878 = vdwg.mxu0
  %1879 = vmatpush.msra.mxu0 0.0
  %1880 = vmatpush.msra.mxu0 0.0
  %1881 = vmatpush.msra.mxu0 0.0
  %1882 = vmatpush.msra.mxu0 0.0
  %1883 = vmatpush.msra.mxu0 0.0
  %1884 = vmatpush.msra.mxu0 0.0
  %1885 = vmatpush.msra.mxu0 0.0
  %1886 = vmatpush.msra.mxu0 0.0
  %1887 = vmatpush.msra.mxu0 0.0
  %1888 = vmatpush.msra.mxu0 0.0
  %v1889 = vand.u32 %v1522, 4294901760
  %1890 = vmatpush.msra.mxu0 %v1889
  %v1891 = vand.u32 %v1520, 4294901760
  %1892 = vmatpush.msra.mxu0 %v1891
  %v1893 = vand.u32 %v1557, 4294901760
  %1894 = vmatpush.msra.mxu0 %v1893
  %v1895 = vand.u32 %v1555, 4294901760
  %1896 = vmatpush.msra.mxu0 %v1895
  %v1897 = vand.u32 %v1541, 4294901760
  %1898 = vmatpush.msra.mxu0 %v1897
  %v1899 = vand.u32 %v1539, 4294901760
  %1900 = vmatpush.msra.mxu0 %v1899
  %v1901 = vand.u32 %v1564, 4294901760
  %v1902 = vsub.f32 %v1564, %v1901
  %v1903 = vand.u32 %v1902, 4294901760
  %v1904 = vsub.f32 %v1902, %v1903
  %v1905 = vand.u32 %v1904, 4294901760
  %1906 = vmatmul.f32.gmra.mxu0 %v1905
  %v1907 = vpop.f32.mrf.mxu0
  %v1908 = vadd.f32 0.0, %v1907
  %v1909 = vand.u32 %v1567, 4294901760
  %v1910 = vsub.f32 %v1567, %v1909
  %v1911 = vand.u32 %v1910, 4294901760
  %v1912 = vsub.f32 %v1910, %v1911
  %v1913 = vand.u32 %v1912, 4294901760
  %1914 = vmatmul.f32.gmra.mxu0 %v1913
  %v1915 = vpop.f32.mrf.mxu0
  %v1916 = vadd.f32 0.0, %v1915
  %v1917 = vand.u32 %v1570, 4294901760
  %v1918 = vsub.f32 %v1570, %v1917
  %v1919 = vand.u32 %v1918, 4294901760
  %v1920 = vsub.f32 %v1918, %v1919
  %v1921 = vand.u32 %v1920, 4294901760
  %1922 = vmatmul.f32.gmra.mxu0 %v1921
  %v1923 = vpop.f32.mrf.mxu0
  %v1924 = vadd.f32 0.0, %v1923
  %v1925 = vand.u32 %v1573, 4294901760
  %v1926 = vsub.f32 %v1573, %v1925
  %v1927 = vand.u32 %v1926, 4294901760
  %v1928 = vsub.f32 %v1926, %v1927
  %v1929 = vand.u32 %v1928, 4294901760
  %1930 = vmatmul.f32.gmra.mxu0 %v1929
  %v1931 = vpop.f32.mrf.mxu0
  %v1932 = vadd.f32 0.0, %v1931
  %1933 = vdwg.mxu0
  %1934 = vmatpush.msra.mxu0 0.0
  %1935 = vmatpush.msra.mxu0 0.0
  %1936 = vmatpush.msra.mxu0 0.0
  %1937 = vmatpush.msra.mxu0 0.0
  %1938 = vmatpush.msra.mxu0 0.0
  %1939 = vmatpush.msra.mxu0 0.0
  %1940 = vmatpush.msra.mxu0 0.0
  %1941 = vmatpush.msra.mxu0 0.0
  %1942 = vmatpush.msra.mxu0 0.0
  %1943 = vmatpush.msra.mxu0 0.0
  %v1944 = vand.u32 %v1522, 4294901760
  %v1945 = vsub.f32 %v1522, %v1944
  %v1946 = vand.u32 %v1945, 4294901760
  %v1947 = vsub.f32 %v1945, %v1946
  %v1948 = vand.u32 %v1947, 4294901760
  %1949 = vmatpush.msra.mxu0 %v1948
  %v1950 = vand.u32 %v1520, 4294901760
  %v1951 = vsub.f32 %v1520, %v1950
  %v1952 = vand.u32 %v1951, 4294901760
  %v1953 = vsub.f32 %v1951, %v1952
  %v1954 = vand.u32 %v1953, 4294901760
  %1955 = vmatpush.msra.mxu0 %v1954
  %v1956 = vand.u32 %v1557, 4294901760
  %v1957 = vsub.f32 %v1557, %v1956
  %v1958 = vand.u32 %v1957, 4294901760
  %v1959 = vsub.f32 %v1957, %v1958
  %v1960 = vand.u32 %v1959, 4294901760
  %1961 = vmatpush.msra.mxu0 %v1960
  %v1962 = vand.u32 %v1555, 4294901760
  %v1963 = vsub.f32 %v1555, %v1962
  %v1964 = vand.u32 %v1963, 4294901760
  %v1965 = vsub.f32 %v1963, %v1964
  %v1966 = vand.u32 %v1965, 4294901760
  %1967 = vmatpush.msra.mxu0 %v1966
  %v1968 = vand.u32 %v1541, 4294901760
  %v1969 = vsub.f32 %v1541, %v1968
  %v1970 = vand.u32 %v1969, 4294901760
  %v1971 = vsub.f32 %v1969, %v1970
  %v1972 = vand.u32 %v1971, 4294901760
  %1973 = vmatpush.msra.mxu0 %v1972
  %v1974 = vand.u32 %v1539, 4294901760
  %v1975 = vsub.f32 %v1539, %v1974
  %v1976 = vand.u32 %v1975, 4294901760
  %v1977 = vsub.f32 %v1975, %v1976
  %v1978 = vand.u32 %v1977, 4294901760
  %1979 = vmatpush.msra.mxu0 %v1978
  %v1980 = vand.u32 %v1564, 4294901760
  %1981 = vmatmul.f32.gmra.mxu0 %v1980
  %v1982 = vpop.f32.mrf.mxu0
  %v1983 = vadd.f32 %v1908, %v1982
  %v1984 = vand.u32 %v1567, 4294901760
  %1985 = vmatmul.f32.gmra.mxu0 %v1984
  %v1986 = vpop.f32.mrf.mxu0
  %v1987 = vadd.f32 %v1916, %v1986
  %v1988 = vand.u32 %v1570, 4294901760
  %1989 = vmatmul.f32.gmra.mxu0 %v1988
  %v1990 = vpop.f32.mrf.mxu0
  %v1991 = vadd.f32 %v1924, %v1990
  %v1992 = vand.u32 %v1573, 4294901760
  %1993 = vmatmul.f32.gmra.mxu0 %v1992
  %v1994 = vpop.f32.mrf.mxu0
  %v1995 = vadd.f32 %v1932, %v1994
  %1996 = vdwg.mxu0
  %1997 = vmatpush.msra.mxu0 0.0
  %1998 = vmatpush.msra.mxu0 0.0
  %1999 = vmatpush.msra.mxu0 0.0
  %2000 = vmatpush.msra.mxu0 0.0
  %2001 = vmatpush.msra.mxu0 0.0
  %2002 = vmatpush.msra.mxu0 0.0
  %2003 = vmatpush.msra.mxu0 0.0
  %2004 = vmatpush.msra.mxu0 0.0
  %2005 = vmatpush.msra.mxu0 0.0
  %2006 = vmatpush.msra.mxu0 0.0
  %v2007 = vand.u32 %v1522, 4294901760
  %v2008 = vsub.f32 %v1522, %v2007
  %2009 = vmatpush.msra.mxu0 %v2008
  %v2010 = vand.u32 %v1520, 4294901760
  %v2011 = vsub.f32 %v1520, %v2010
  %2012 = vmatpush.msra.mxu0 %v2011
  %v2013 = vand.u32 %v1557, 4294901760
  %v2014 = vsub.f32 %v1557, %v2013
  %2015 = vmatpush.msra.mxu0 %v2014
  %v2016 = vand.u32 %v1555, 4294901760
  %v2017 = vsub.f32 %v1555, %v2016
  %2018 = vmatpush.msra.mxu0 %v2017
  %v2019 = vand.u32 %v1541, 4294901760
  %v2020 = vsub.f32 %v1541, %v2019
  %2021 = vmatpush.msra.mxu0 %v2020
  %v2022 = vand.u32 %v1539, 4294901760
  %v2023 = vsub.f32 %v1539, %v2022
  %2024 = vmatpush.msra.mxu0 %v2023
  %v2025 = vand.u32 %v1564, 4294901760
  %v2026 = vsub.f32 %v1564, %v2025
  %2027 = vmatmul.f32.gmra.mxu0 %v2026
  %v2028 = vpop.f32.mrf.mxu0
  %v2029 = vadd.f32 %v1983, %v2028
  %v2030 = vand.u32 %v1567, 4294901760
  %v2031 = vsub.f32 %v1567, %v2030
  %2032 = vmatmul.f32.gmra.mxu0 %v2031
  %v2033 = vpop.f32.mrf.mxu0
  %v2034 = vadd.f32 %v1987, %v2033
  %v2035 = vand.u32 %v1570, 4294901760
  %v2036 = vsub.f32 %v1570, %v2035
  %2037 = vmatmul.f32.gmra.mxu0 %v2036
  %v2038 = vpop.f32.mrf.mxu0
  %v2039 = vadd.f32 %v1991, %v2038
  %v2040 = vand.u32 %v1573, 4294901760
  %v2041 = vsub.f32 %v1573, %v2040
  %2042 = vmatmul.f32.gmra.mxu0 %v2041
  %v2043 = vpop.f32.mrf.mxu0
  %v2044 = vadd.f32 %v1995, %v2043
  %2045 = vdwg.mxu0
  %2046 = vmatpush.msra.mxu0 0.0
  %2047 = vmatpush.msra.mxu0 0.0
  %2048 = vmatpush.msra.mxu0 0.0
  %2049 = vmatpush.msra.mxu0 0.0
  %2050 = vmatpush.msra.mxu0 0.0
  %2051 = vmatpush.msra.mxu0 0.0
  %2052 = vmatpush.msra.mxu0 0.0
  %2053 = vmatpush.msra.mxu0 0.0
  %2054 = vmatpush.msra.mxu0 0.0
  %2055 = vmatpush.msra.mxu0 0.0
  %v2056 = vand.u32 %v1522, 4294901760
  %2057 = vmatpush.msra.mxu0 %v2056
  %v2058 = vand.u32 %v1520, 4294901760
  %2059 = vmatpush.msra.mxu0 %v2058
  %v2060 = vand.u32 %v1557, 4294901760
  %2061 = vmatpush.msra.mxu0 %v2060
  %v2062 = vand.u32 %v1555, 4294901760
  %2063 = vmatpush.msra.mxu0 %v2062
  %v2064 = vand.u32 %v1541, 4294901760
  %2065 = vmatpush.msra.mxu0 %v2064
  %v2066 = vand.u32 %v1539, 4294901760
  %2067 = vmatpush.msra.mxu0 %v2066
  %v2068 = vand.u32 %v1564, 4294901760
  %v2069 = vsub.f32 %v1564, %v2068
  %v2070 = vand.u32 %v2069, 4294901760
  %2071 = vmatmul.f32.gmra.mxu0 %v2070
  %v2072 = vpop.f32.mrf.mxu0
  %v2073 = vadd.f32 %v2029, %v2072
  %v2074 = vand.u32 %v1567, 4294901760
  %v2075 = vsub.f32 %v1567, %v2074
  %v2076 = vand.u32 %v2075, 4294901760
  %2077 = vmatmul.f32.gmra.mxu0 %v2076
  %v2078 = vpop.f32.mrf.mxu0
  %v2079 = vadd.f32 %v2034, %v2078
  %v2080 = vand.u32 %v1570, 4294901760
  %v2081 = vsub.f32 %v1570, %v2080
  %v2082 = vand.u32 %v2081, 4294901760
  %2083 = vmatmul.f32.gmra.mxu0 %v2082
  %v2084 = vpop.f32.mrf.mxu0
  %v2085 = vadd.f32 %v2039, %v2084
  %v2086 = vand.u32 %v1573, 4294901760
  %v2087 = vsub.f32 %v1573, %v2086
  %v2088 = vand.u32 %v2087, 4294901760
  %2089 = vmatmul.f32.gmra.mxu0 %v2088
  %v2090 = vpop.f32.mrf.mxu0
  %v2091 = vadd.f32 %v2044, %v2090
  %2092 = vdwg.mxu0
  %2093 = vmatpush.msra.mxu0 0.0
  %2094 = vmatpush.msra.mxu0 0.0
  %2095 = vmatpush.msra.mxu0 0.0
  %2096 = vmatpush.msra.mxu0 0.0
  %2097 = vmatpush.msra.mxu0 0.0
  %2098 = vmatpush.msra.mxu0 0.0
  %2099 = vmatpush.msra.mxu0 0.0
  %2100 = vmatpush.msra.mxu0 0.0
  %2101 = vmatpush.msra.mxu0 0.0
  %2102 = vmatpush.msra.mxu0 0.0
  %v2103 = vand.u32 %v1522, 4294901760
  %v2104 = vsub.f32 %v1522, %v2103
  %v2105 = vand.u32 %v2104, 4294901760
  %2106 = vmatpush.msra.mxu0 %v2105
  %v2107 = vand.u32 %v1520, 4294901760
  %v2108 = vsub.f32 %v1520, %v2107
  %v2109 = vand.u32 %v2108, 4294901760
  %2110 = vmatpush.msra.mxu0 %v2109
  %v2111 = vand.u32 %v1557, 4294901760
  %v2112 = vsub.f32 %v1557, %v2111
  %v2113 = vand.u32 %v2112, 4294901760
  %2114 = vmatpush.msra.mxu0 %v2113
  %v2115 = vand.u32 %v1555, 4294901760
  %v2116 = vsub.f32 %v1555, %v2115
  %v2117 = vand.u32 %v2116, 4294901760
  %2118 = vmatpush.msra.mxu0 %v2117
  %v2119 = vand.u32 %v1541, 4294901760
  %v2120 = vsub.f32 %v1541, %v2119
  %v2121 = vand.u32 %v2120, 4294901760
  %2122 = vmatpush.msra.mxu0 %v2121
  %v2123 = vand.u32 %v1539, 4294901760
  %v2124 = vsub.f32 %v1539, %v2123
  %v2125 = vand.u32 %v2124, 4294901760
  %2126 = vmatpush.msra.mxu0 %v2125
  %v2127 = vand.u32 %v1564, 4294901760
  %2128 = vmatmul.f32.gmra.mxu0 %v2127
  %v2129 = vpop.f32.mrf.mxu0
  %v2130 = vadd.f32 %v2073, %v2129
  %v2131 = vand.u32 %v1567, 4294901760
  %2132 = vmatmul.f32.gmra.mxu0 %v2131
  %v2133 = vpop.f32.mrf.mxu0
  %v2134 = vadd.f32 %v2079, %v2133
  %v2135 = vand.u32 %v1570, 4294901760
  %2136 = vmatmul.f32.gmra.mxu0 %v2135
  %v2137 = vpop.f32.mrf.mxu0
  %v2138 = vadd.f32 %v2085, %v2137
  %v2139 = vand.u32 %v1573, 4294901760
  %2140 = vmatmul.f32.gmra.mxu0 %v2139
  %v2141 = vpop.f32.mrf.mxu0
  %v2142 = vadd.f32 %v2091, %v2141
  %2143 = vdwg.mxu0
  %2144 = vmatpush.msra.mxu0 0.0
  %2145 = vmatpush.msra.mxu0 0.0
  %2146 = vmatpush.msra.mxu0 0.0
  %2147 = vmatpush.msra.mxu0 0.0
  %2148 = vmatpush.msra.mxu0 0.0
  %2149 = vmatpush.msra.mxu0 0.0
  %2150 = vmatpush.msra.mxu0 0.0
  %2151 = vmatpush.msra.mxu0 0.0
  %2152 = vmatpush.msra.mxu0 0.0
  %2153 = vmatpush.msra.mxu0 0.0
  %v2154 = vand.u32 %v1522, 4294901760
  %2155 = vmatpush.msra.mxu0 %v2154
  %v2156 = vand.u32 %v1520, 4294901760
  %2157 = vmatpush.msra.mxu0 %v2156
  %v2158 = vand.u32 %v1557, 4294901760
  %2159 = vmatpush.msra.mxu0 %v2158
  %v2160 = vand.u32 %v1555, 4294901760
  %2161 = vmatpush.msra.mxu0 %v2160
  %v2162 = vand.u32 %v1541, 4294901760
  %2163 = vmatpush.msra.mxu0 %v2162
  %v2164 = vand.u32 %v1539, 4294901760
  %2165 = vmatpush.msra.mxu0 %v2164
  %v2166 = vand.u32 %v1564, 4294901760
  %2167 = vmatmul.f32.gmra.mxu0 %v2166
  %v2168 = vpop.f32.mrf.mxu0
  %v2169 = vadd.f32 %v2130, %v2168
  %v2170 = vand.u32 %v1567, 4294901760
  %2171 = vmatmul.f32.gmra.mxu0 %v2170
  %v2172 = vpop.f32.mrf.mxu0
  %v2173 = vadd.f32 %v2134, %v2172
  %v2174 = vand.u32 %v1570, 4294901760
  %2175 = vmatmul.f32.gmra.mxu0 %v2174
  %v2176 = vpop.f32.mrf.mxu0
  %v2177 = vadd.f32 %v2138, %v2176
  %v2178 = vand.u32 %v1573, 4294901760
  %2179 = vmatmul.f32.gmra.mxu0 %v2178
  %v2180 = vpop.f32.mrf.mxu0
  %v2181 = vadd.f32 %v2142, %v2180
  %2182 = vdwg.mxu0
  %v2183 = vadd.f32 %v1865, %v2169
  %2184 = vadd.xlane.f32.xlu0 %v2183
  %v2185 = vpop.xlane.xlu0 %2184
  %v2186 = vadd.f32 %v1869, %v2173
  %2187 = vadd.xlane.f32.xlu0 %v2186
  %v2188 = vpop.xlane.xlu0 %2187
  %v2189 = vadd.f32 %v1873, %v2177
  %2190 = vadd.xlane.f32.xlu0 %v2189
  %v2191 = vpop.xlane.xlu0 %2190
  %v2192 = vadd.f32 %v1877, %v2181
  %2193 = vadd.xlane.f32.xlu0 %v2192
  %v2194 = vpop.xlane.xlu0 %2193
  %v2195 = vmul.f32 %v2185, %v737
  %v2196 = vmul.f32 %v2188, %v737
  %v2197 = vmul.f32 %v2191, %v737
  %v2198 = vmul.f32 %v2194, %v737
  %v2199 = vsub.f32 %v1865, %v2195
  %v2200 = vsub.f32 %v2169, %v2195
  %v2201 = vsub.f32 %v1869, %v2196
  %v2202 = vsub.f32 %v2173, %v2196
  %v2203 = vsub.f32 %v1873, %v2197
  %v2204 = vsub.f32 %v2177, %v2197
  %v2205 = vsub.f32 %v1877, %v2198
  %v2206 = vsub.f32 %v2181, %v2198
  %v2207 = vmul.f32 %v2199, %v2199
  %v2208 = vmul.f32 %v2200, %v2200
  %v2209 = vmul.f32 %v2201, %v2201
  %v2210 = vmul.f32 %v2202, %v2202
  %v2211 = vmul.f32 %v2203, %v2203
  %v2212 = vmul.f32 %v2204, %v2204
  %v2213 = vmul.f32 %v2205, %v2205
  %v2214 = vmul.f32 %v2206, %v2206
  %v2215 = vadd.f32 %v2207, %v2208
  %2216 = vadd.xlane.f32.xlu0 %v2215
  %v2217 = vpop.xlane.xlu0 %2216
  %v2218 = vadd.f32 %v2209, %v2210
  %2219 = vadd.xlane.f32.xlu0 %v2218
  %v2220 = vpop.xlane.xlu0 %2219
  %v2221 = vadd.f32 %v2211, %v2212
  %2222 = vadd.xlane.f32.xlu0 %v2221
  %v2223 = vpop.xlane.xlu0 %2222
  %v2224 = vadd.f32 %v2213, %v2214
  %2225 = vadd.xlane.f32.xlu0 %v2224
  %v2226 = vpop.xlane.xlu0 %2225
  %v2227 = vmul.f32 %v2217, %v737
  %v2228 = vmul.f32 %v2220, %v737
  %v2229 = vmul.f32 %v2223, %v737
  %v2230 = vmul.f32 %v2226, %v737
  %s2231 = scalar_lea.vmem %s2, 32
  %v2232 = vld [vmem:[%s2231] sm:$0xff]
  %v2233 = vld [vmem:[%s2231 + $0x8] sm:$0xff]
  %v2234 = vld [vmem:[%s2231 + $0x10] sm:$0xff]
  %v2235 = vld [vmem:[%s2231 + $0x18] sm:$0xff]
  %v2236 = vadd.f32 %v2227, 1e-05
  %v2237 = vadd.f32 %v2228, 1e-05
  %v2238 = vadd.f32 %v2229, 1e-05
  %v2239 = vadd.f32 %v2230, 1e-05
  %v2240 = vrsqrt.pop %v2236
  %v2241 = vmul.f32 %v2240, %v2236
  %v2242 = vmul.f32 %v2241, %v2240
  %v2243 = vmul.f32 0.5, %v2242
  %v2244 = vsub.f32 1.5, %v2243
  %v2245 = vmul.f32 %v2240, %v2244
  %vm2246 = vweird.f32 %v2236
  %vm2247 = vweird.f32 %v2240
  %vm2248 = vmor %vm2246, %vm2247
  %v2249 = vsel %vm2248, %v2240, %v2245
  %v2250 = vrsqrt.pop %v2237
  %v2251 = vmul.f32 %v2250, %v2237
  %v2252 = vmul.f32 %v2251, %v2250
  %v2253 = vmul.f32 0.5, %v2252
  %v2254 = vsub.f32 1.5, %v2253
  %v2255 = vmul.f32 %v2250, %v2254
  %vm2256 = vweird.f32 %v2237
  %vm2257 = vweird.f32 %v2250
  %vm2258 = vmor %vm2256, %vm2257
  %v2259 = vsel %vm2258, %v2250, %v2255
  %v2260 = vrsqrt.pop %v2238
  %v2261 = vmul.f32 %v2260, %v2238
  %v2262 = vmul.f32 %v2261, %v2260
  %v2263 = vmul.f32 0.5, %v2262
  %v2264 = vsub.f32 1.5, %v2263
  %v2265 = vmul.f32 %v2260, %v2264
  %vm2266 = vweird.f32 %v2238
  %vm2267 = vweird.f32 %v2260
  %vm2268 = vmor %vm2266, %vm2267
  %v2269 = vsel %vm2268, %v2260, %v2265
  %v2270 = vrsqrt.pop %v2239
  %v2271 = vmul.f32 %v2270, %v2239
  %v2272 = vmul.f32 %v2271, %v2270
  %v2273 = vmul.f32 0.5, %v2272
  %v2274 = vsub.f32 1.5, %v2273
  %v2275 = vmul.f32 %v2270, %v2274
  %vm2276 = vweird.f32 %v2239
  %vm2277 = vweird.f32 %v2270
  %vm2278 = vmor %vm2276, %vm2277
  %v2279 = vsel %vm2278, %v2270, %v2275
  %v2280 = vmul.f32 %v2232, %v2249
  %v2281 = vmul.f32 %v2233, %v2259
  %v2282 = vmul.f32 %v2234, %v2269
  %v2283 = vmul.f32 %v2235, %v2279
  %2285 = vset.pattern.permute.xlu0 0
  %2286 = vperm.xlu0 %2285, %v2280
  %v2287 = vpop.permute.xlu0 %2286
  %2290 = vset.pattern.permute.xlu0 0
  %2291 = vperm.xlu0 %2290, %v2281
  %v2292 = vpop.permute.xlu0 %2291
  %2295 = vset.pattern.permute.xlu0 0
  %2296 = vperm.xlu0 %2295, %v2282
  %v2297 = vpop.permute.xlu0 %2296
  %2300 = vset.pattern.permute.xlu0 0
  %2301 = vperm.xlu0 %2300, %v2283
  %v2302 = vpop.permute.xlu0 %2301
  %v2304 = vmul.f32 %v2199, %v2287
  %v2305 = vmul.f32 %v2200, %v2287
  %v2306 = vmul.f32 %v2201, %v2292
  %v2307 = vmul.f32 %v2202, %v2292
  %v2308 = vmul.f32 %v2203, %v2297
  %v2309 = vmul.f32 %v2204, %v2297
  %v2310 = vmul.f32 %v2205, %v2302
  %v2311 = vmul.f32 %v2206, %v2302
  %s2312 = scalar_lea.vmem %s3, 32
  %v2313 = vld [vmem:[%s2312] sm:$0xff]
  %v2314 = vld [vmem:[%s2312 + $0x8] sm:$0xff]
  %v2315 = vld [vmem:[%s2312 + $0x10] sm:$0xff]
  %v2316 = vld [vmem:[%s2312 + $0x18] sm:$0xff]
  %2318 = vset.pattern.permute.xlu0 0
  %2319 = vperm.xlu0 %2318, %v2313
  %v2320 = vpop.permute.xlu0 %2319
  %2323 = vset.pattern.permute.xlu0 0
  %2324 = vperm.xlu0 %2323, %v2314
  %v2325 = vpop.permute.xlu0 %2324
  %2328 = vset.pattern.permute.xlu0 0
  %2329 = vperm.xlu0 %2328, %v2315
  %v2330 = vpop.permute.xlu0 %2329
  %2333 = vset.pattern.permute.xlu0 0
  %2334 = vperm.xlu0 %2333, %v2316
  %v2335 = vpop.permute.xlu0 %2334
  %v2337 = vadd.f32 %v2304, %v2320
  %v2338 = vadd.f32 %v2305, %v2320
  %v2339 = vadd.f32 %v2306, %v2325
  %v2340 = vadd.f32 %v2307, %v2325
  %v2341 = vadd.f32 %v2308, %v2330
  %v2342 = vadd.f32 %v2309, %v2330
  %v2343 = vadd.f32 %v2310, %v2335
  %v2344 = vadd.f32 %v2311, %v2335
  %v2345 = vtanh.pop %v2337
  %v2346 = vtanh.pop %v2338
  %v2347 = vtanh.pop %v2339
  %v2348 = vtanh.pop %v2340
  %v2349 = vsub.f32 0.0, %v2341
  %v2350 = vsub.f32 0.0, %v2342
  %v2351 = vsub.f32 0.0, %v2343
  %v2352 = vsub.f32 0.0, %v2344
  %v2353 = vmul.f32 %v2349, 1.442695
  %v2354 = vpow.pop %v2353
  %v2355 = vmul.f32 %v2350, 1.442695
  %v2356 = vpow.pop %v2355
  %v2357 = vmul.f32 %v2351, 1.442695
  %v2358 = vpow.pop %v2357
  %v2359 = vmul.f32 %v2352, 1.442695
  %v2360 = vpow.pop %v2359
  %v2361 = vadd.f32 %v2354, 1.0
  %v2362 = vadd.f32 %v2356, 1.0
  %v2363 = vadd.f32 %v2358, 1.0
  %v2364 = vadd.f32 %v2360, 1.0
  %v2365 = vrcp.pop %v2361
  %v2366 = vmul.f32 %v2361, %v2365
  %v2367 = vsub.f32 1.0, %v2366
  %v2368 = vmul.f32 %v2365, %v2367
  %v2369 = vadd.f32 %v2365, %v2368
  %vm2370 = vweird.f32 %v2361
  %vm2371 = vweird.f32 %v2365
  %vm2372 = vmor %vm2370, %vm2371
  %v2373 = vsel %vm2372, %v2365, %v2369
  %v2374 = vand.u32 2147483647, %v2361
  %vm2375 = vcmp.eq.f32.partialorder %v2374, 8.507059e+37
  %v2376 = vand.u32 %v2361, 2147483648
  %v2377 = vor.u32 1.1754944e-38, %v2376
  %v2378 = vsel %vm2375, %v2377, %v2373
  %v2379 = vmul.f32 1.0, %v2378
  %v2380 = vrcp.pop %v2362
  %v2381 = vmul.f32 %v2362, %v2380
  %v2382 = vsub.f32 1.0, %v2381
  %v2383 = vmul.f32 %v2380, %v2382
  %v2384 = vadd.f32 %v2380, %v2383
  %vm2385 = vweird.f32 %v2362
  %vm2386 = vweird.f32 %v2380
  %vm2387 = vmor %vm2385, %vm2386
  %v2388 = vsel %vm2387, %v2380, %v2384
  %v2389 = vand.u32 2147483647, %v2362
  %vm2390 = vcmp.eq.f32.partialorder %v2389, 8.507059e+37
  %v2391 = vand.u32 %v2362, 2147483648
  %v2392 = vor.u32 1.1754944e-38, %v2391
  %v2393 = vsel %vm2390, %v2392, %v2388
  %v2394 = vmul.f32 1.0, %v2393
  %v2395 = vrcp.pop %v2363
  %v2396 = vmul.f32 %v2363, %v2395
  %v2397 = vsub.f32 1.0, %v2396
  %v2398 = vmul.f32 %v2395, %v2397
  %v2399 = vadd.f32 %v2395, %v2398
  %vm2400 = vweird.f32 %v2363
  %vm2401 = vweird.f32 %v2395
  %vm2402 = vmor %vm2400, %vm2401
  %v2403 = vsel %vm2402, %v2395, %v2399
  %v2404 = vand.u32 2147483647, %v2363
  %vm2405 = vcmp.eq.f32.partialorder %v2404, 8.507059e+37
  %v2406 = vand.u32 %v2363, 2147483648
  %v2407 = vor.u32 1.1754944e-38, %v2406
  %v2408 = vsel %vm2405, %v2407, %v2403
  %v2409 = vmul.f32 1.0, %v2408
  %v2410 = vrcp.pop %v2364
  %v2411 = vmul.f32 %v2364, %v2410
  %v2412 = vsub.f32 1.0, %v2411
  %v2413 = vmul.f32 %v2410, %v2412
  %v2414 = vadd.f32 %v2410, %v2413
  %vm2415 = vweird.f32 %v2364
  %vm2416 = vweird.f32 %v2410
  %vm2417 = vmor %vm2415, %vm2416
  %v2418 = vsel %vm2417, %v2410, %v2414
  %v2419 = vand.u32 2147483647, %v2364
  %vm2420 = vcmp.eq.f32.partialorder %v2419, 8.507059e+37
  %v2421 = vand.u32 %v2364, 2147483648
  %v2422 = vor.u32 1.1754944e-38, %v2421
  %v2423 = vsel %vm2420, %v2422, %v2418
  %v2424 = vmul.f32 1.0, %v2423
  %v2425 = vmul.f32 %v2345, %v2379
  %v2426 = vmul.f32 %v2346, %v2394
  %v2427 = vmul.f32 %v2347, %v2409
  %v2428 = vmul.f32 %v2348, %v2424
  %s2429 = scalar_lea.vmem %s4, 32
  %v2430 = vld [vmem:[%s2429] sm:$0xff]
  %v2431 = vld [vmem:[%s2429 + $0x8] sm:$0xff]
  %v2432 = vld [vmem:[%s2429 + $0x10] sm:$0xff]
  %v2433 = vld [vmem:[%s2429 + $0x18] sm:$0xff]
  %s2434 = scalar_lea.vmem %s5, 32
  %v2435 = vld [vmem:[%s2434] sm:$0xff]
  %v2436 = vld [vmem:[%s2434 + $0x8] sm:$0xff]
  %v2437 = vld [vmem:[%s2434 + $0x10] sm:$0xff]
  %v2438 = vld [vmem:[%s2434 + $0x18] sm:$0xff]
  %2440 = vset.pattern.permute.xlu0 0
  %2441 = vperm.xlu0 %2440, %v2435
  %v2442 = vpop.permute.xlu0 %2441
  %2445 = vset.pattern.permute.xlu0 0
  %2446 = vperm.xlu0 %2445, %v2436
  %v2447 = vpop.permute.xlu0 %2446
  %2450 = vset.pattern.permute.xlu0 0
  %2451 = vperm.xlu0 %2450, %v2437
  %v2452 = vpop.permute.xlu0 %2451
  %2455 = vset.pattern.permute.xlu0 0
  %2456 = vperm.xlu0 %2455, %v2438
  %v2457 = vpop.permute.xlu0 %2456
  %v2460 = vsel %vm998, %v2430, 0
  %v2463 = vsel %vm998, %v2431, 0
  %v2466 = vsel %vm998, %v2432, 0
  %v2469 = vsel %vm998, %v2433, 0
  %2471 = vmatpush.msra.mxu0 0.0
  %2472 = vmatpush.msra.mxu0 0.0
  %2473 = vmatpush.msra.mxu0 0.0
  %2474 = vmatpush.msra.mxu0 0.0
  %2475 = vmatpush.msra.mxu0 0.0
  %2476 = vmatpush.msra.mxu0 0.0
  %2477 = vmatpush.msra.mxu0 0.0
  %2478 = vmatpush.msra.mxu0 0.0
  %2479 = vmatpush.msra.mxu0 0.0
  %2480 = vmatpush.msra.mxu0 0.0
  %2481 = vmatpush.msra.mxu0 0.0
  %2482 = vmatpush.msra.mxu0 0.0
  %2483 = vmatpush.msra.mxu0 0.0
  %2484 = vmatpush.msra.mxu0 0.0
  %v2485 = vand.u32 %v2427, 4294901760
  %2486 = vmatpush.msra.mxu0 %v2485
  %v2487 = vand.u32 %v2425, 4294901760
  %2488 = vmatpush.msra.mxu0 %v2487
  %v2489 = vand.u32 %v2460, 4294901760
  %v2490 = vsub.f32 %v2460, %v2489
  %v2491 = vand.u32 %v2490, 4294901760
  %v2492 = vsub.f32 %v2490, %v2491
  %v2493 = vand.u32 %v2492, 4294901760
  %2494 = vmatmul.f32.gmra.mxu0 %v2493
  %v2495 = vpop.f32.mrf.mxu0
  %v2496 = vadd.f32 %v2442, %v2495
  %v2497 = vand.u32 %v2463, 4294901760
  %v2498 = vsub.f32 %v2463, %v2497
  %v2499 = vand.u32 %v2498, 4294901760
  %v2500 = vsub.f32 %v2498, %v2499
  %v2501 = vand.u32 %v2500, 4294901760
  %2502 = vmatmul.f32.gmra.mxu0 %v2501
  %v2503 = vpop.f32.mrf.mxu0
  %v2504 = vadd.f32 %v2447, %v2503
  %v2505 = vand.u32 %v2466, 4294901760
  %v2506 = vsub.f32 %v2466, %v2505
  %v2507 = vand.u32 %v2506, 4294901760
  %v2508 = vsub.f32 %v2506, %v2507
  %v2509 = vand.u32 %v2508, 4294901760
  %2510 = vmatmul.f32.gmra.mxu0 %v2509
  %v2511 = vpop.f32.mrf.mxu0
  %v2512 = vadd.f32 %v2452, %v2511
  %v2513 = vand.u32 %v2469, 4294901760
  %v2514 = vsub.f32 %v2469, %v2513
  %v2515 = vand.u32 %v2514, 4294901760
  %v2516 = vsub.f32 %v2514, %v2515
  %v2517 = vand.u32 %v2516, 4294901760
  %2518 = vmatmul.f32.gmra.mxu0 %v2517
  %v2519 = vpop.f32.mrf.mxu0
  %v2520 = vadd.f32 %v2457, %v2519
  %2521 = vdwg.mxu0
  %2522 = vmatpush.msra.mxu0 0.0
  %2523 = vmatpush.msra.mxu0 0.0
  %2524 = vmatpush.msra.mxu0 0.0
  %2525 = vmatpush.msra.mxu0 0.0
  %2526 = vmatpush.msra.mxu0 0.0
  %2527 = vmatpush.msra.mxu0 0.0
  %2528 = vmatpush.msra.mxu0 0.0
  %2529 = vmatpush.msra.mxu0 0.0
  %2530 = vmatpush.msra.mxu0 0.0
  %2531 = vmatpush.msra.mxu0 0.0
  %2532 = vmatpush.msra.mxu0 0.0
  %2533 = vmatpush.msra.mxu0 0.0
  %2534 = vmatpush.msra.mxu0 0.0
  %2535 = vmatpush.msra.mxu0 0.0
  %v2536 = vand.u32 %v2427, 4294901760
  %v2537 = vsub.f32 %v2427, %v2536
  %v2538 = vand.u32 %v2537, 4294901760
  %v2539 = vsub.f32 %v2537, %v2538
  %v2540 = vand.u32 %v2539, 4294901760
  %2541 = vmatpush.msra.mxu0 %v2540
  %v2542 = vand.u32 %v2425, 4294901760
  %v2543 = vsub.f32 %v2425, %v2542
  %v2544 = vand.u32 %v2543, 4294901760
  %v2545 = vsub.f32 %v2543, %v2544
  %v2546 = vand.u32 %v2545, 4294901760
  %2547 = vmatpush.msra.mxu0 %v2546
  %v2548 = vand.u32 %v2460, 4294901760
  %2549 = vmatmul.f32.gmra.mxu0 %v2548
  %v2550 = vpop.f32.mrf.mxu0
  %v2551 = vadd.f32 %v2496, %v2550
  %v2552 = vand.u32 %v2463, 4294901760
  %2553 = vmatmul.f32.gmra.mxu0 %v2552
  %v2554 = vpop.f32.mrf.mxu0
  %v2555 = vadd.f32 %v2504, %v2554
  %v2556 = vand.u32 %v2466, 4294901760
  %2557 = vmatmul.f32.gmra.mxu0 %v2556
  %v2558 = vpop.f32.mrf.mxu0
  %v2559 = vadd.f32 %v2512, %v2558
  %v2560 = vand.u32 %v2469, 4294901760
  %2561 = vmatmul.f32.gmra.mxu0 %v2560
  %v2562 = vpop.f32.mrf.mxu0
  %v2563 = vadd.f32 %v2520, %v2562
  %2564 = vdwg.mxu0
  %2565 = vmatpush.msra.mxu0 0.0
  %2566 = vmatpush.msra.mxu0 0.0
  %2567 = vmatpush.msra.mxu0 0.0
  %2568 = vmatpush.msra.mxu0 0.0
  %2569 = vmatpush.msra.mxu0 0.0
  %2570 = vmatpush.msra.mxu0 0.0
  %2571 = vmatpush.msra.mxu0 0.0
  %2572 = vmatpush.msra.mxu0 0.0
  %2573 = vmatpush.msra.mxu0 0.0
  %2574 = vmatpush.msra.mxu0 0.0
  %2575 = vmatpush.msra.mxu0 0.0
  %2576 = vmatpush.msra.mxu0 0.0
  %2577 = vmatpush.msra.mxu0 0.0
  %2578 = vmatpush.msra.mxu0 0.0
  %v2579 = vand.u32 %v2427, 4294901760
  %v2580 = vsub.f32 %v2427, %v2579
  %2581 = vmatpush.msra.mxu0 %v2580
  %v2582 = vand.u32 %v2425, 4294901760
  %v2583 = vsub.f32 %v2425, %v2582
  %2584 = vmatpush.msra.mxu0 %v2583
  %v2585 = vand.u32 %v2460, 4294901760
  %v2586 = vsub.f32 %v2460, %v2585
  %2587 = vmatmul.f32.gmra.mxu0 %v2586
  %v2588 = vpop.f32.mrf.mxu0
  %v2589 = vadd.f32 %v2551, %v2588
  %v2590 = vand.u32 %v2463, 4294901760
  %v2591 = vsub.f32 %v2463, %v2590
  %2592 = vmatmul.f32.gmra.mxu0 %v2591
  %v2593 = vpop.f32.mrf.mxu0
  %v2594 = vadd.f32 %v2555, %v2593
  %v2595 = vand.u32 %v2466, 4294901760
  %v2596 = vsub.f32 %v2466, %v2595
  %2597 = vmatmul.f32.gmra.mxu0 %v2596
  %v2598 = vpop.f32.mrf.mxu0
  %v2599 = vadd.f32 %v2559, %v2598
  %v2600 = vand.u32 %v2469, 4294901760
  %v2601 = vsub.f32 %v2469, %v2600
  %2602 = vmatmul.f32.gmra.mxu0 %v2601
  %v2603 = vpop.f32.mrf.mxu0
  %v2604 = vadd.f32 %v2563, %v2603
  %2605 = vdwg.mxu0
  %2606 = vmatpush.msra.mxu0 0.0
  %2607 = vmatpush.msra.mxu0 0.0
  %2608 = vmatpush.msra.mxu0 0.0
  %2609 = vmatpush.msra.mxu0 0.0
  %2610 = vmatpush.msra.mxu0 0.0
  %2611 = vmatpush.msra.mxu0 0.0
  %2612 = vmatpush.msra.mxu0 0.0
  %2613 = vmatpush.msra.mxu0 0.0
  %2614 = vmatpush.msra.mxu0 0.0
  %2615 = vmatpush.msra.mxu0 0.0
  %2616 = vmatpush.msra.mxu0 0.0
  %2617 = vmatpush.msra.mxu0 0.0
  %2618 = vmatpush.msra.mxu0 0.0
  %2619 = vmatpush.msra.mxu0 0.0
  %v2620 = vand.u32 %v2427, 4294901760
  %2621 = vmatpush.msra.mxu0 %v2620
  %v2622 = vand.u32 %v2425, 4294901760
  %2623 = vmatpush.msra.mxu0 %v2622
  %v2624 = vand.u32 %v2460, 4294901760
  %v2625 = vsub.f32 %v2460, %v2624
  %v2626 = vand.u32 %v2625, 4294901760
  %2627 = vmatmul.f32.gmra.mxu0 %v2626
  %v2628 = vpop.f32.mrf.mxu0
  %v2629 = vadd.f32 %v2589, %v2628
  %v2630 = vand.u32 %v2463, 4294901760
  %v2631 = vsub.f32 %v2463, %v2630
  %v2632 = vand.u32 %v2631, 4294901760
  %2633 = vmatmul.f32.gmra.mxu0 %v2632
  %v2634 = vpop.f32.mrf.mxu0
  %v2635 = vadd.f32 %v2594, %v2634
  %v2636 = vand.u32 %v2466, 4294901760
  %v2637 = vsub.f32 %v2466, %v2636
  %v2638 = vand.u32 %v2637, 4294901760
  %2639 = vmatmul.f32.gmra.mxu0 %v2638
  %v2640 = vpop.f32.mrf.mxu0
  %v2641 = vadd.f32 %v2599, %v2640
  %v2642 = vand.u32 %v2469, 4294901760
  %v2643 = vsub.f32 %v2469, %v2642
  %v2644 = vand.u32 %v2643, 4294901760
  %2645 = vmatmul.f32.gmra.mxu0 %v2644
  %v2646 = vpop.f32.mrf.mxu0
  %v2647 = vadd.f32 %v2604, %v2646
  %2648 = vdwg.mxu0
  %2649 = vmatpush.msra.mxu0 0.0
  %2650 = vmatpush.msra.mxu0 0.0
  %2651 = vmatpush.msra.mxu0 0.0
  %2652 = vmatpush.msra.mxu0 0.0
  %2653 = vmatpush.msra.mxu0 0.0
  %2654 = vmatpush.msra.mxu0 0.0
  %2655 = vmatpush.msra.mxu0 0.0
  %2656 = vmatpush.msra.mxu0 0.0
  %2657 = vmatpush.msra.mxu0 0.0
  %2658 = vmatpush.msra.mxu0 0.0
  %2659 = vmatpush.msra.mxu0 0.0
  %2660 = vmatpush.msra.mxu0 0.0
  %2661 = vmatpush.msra.mxu0 0.0
  %2662 = vmatpush.msra.mxu0 0.0
  %v2663 = vand.u32 %v2427, 4294901760
  %v2664 = vsub.f32 %v2427, %v2663
  %v2665 = vand.u32 %v2664, 4294901760
  %2666 = vmatpush.msra.mxu0 %v2665
  %v2667 = vand.u32 %v2425, 4294901760
  %v2668 = vsub.f32 %v2425, %v2667
  %v2669 = vand.u32 %v2668, 4294901760
  %2670 = vmatpush.msra.mxu0 %v2669
  %v2671 = vand.u32 %v2460, 4294901760
  %2672 = vmatmul.f32.gmra.mxu0 %v2671
  %v2673 = vpop.f32.mrf.mxu0
  %v2674 = vadd.f32 %v2629, %v2673
  %v2675 = vand.u32 %v2463, 4294901760
  %2676 = vmatmul.f32.gmra.mxu0 %v2675
  %v2677 = vpop.f32.mrf.mxu0
  %v2678 = vadd.f32 %v2635, %v2677
  %v2679 = vand.u32 %v2466, 4294901760
  %2680 = vmatmul.f32.gmra.mxu0 %v2679
  %v2681 = vpop.f32.mrf.mxu0
  %v2682 = vadd.f32 %v2641, %v2681
  %v2683 = vand.u32 %v2469, 4294901760
  %2684 = vmatmul.f32.gmra.mxu0 %v2683
  %v2685 = vpop.f32.mrf.mxu0
  %v2686 = vadd.f32 %v2647, %v2685
  %2687 = vdwg.mxu0
  %2688 = vmatpush.msra.mxu0 0.0
  %2689 = vmatpush.msra.mxu0 0.0
  %2690 = vmatpush.msra.mxu0 0.0
  %2691 = vmatpush.msra.mxu0 0.0
  %2692 = vmatpush.msra.mxu0 0.0
  %2693 = vmatpush.msra.mxu0 0.0
  %2694 = vmatpush.msra.mxu0 0.0
  %2695 = vmatpush.msra.mxu0 0.0
  %2696 = vmatpush.msra.mxu0 0.0
  %2697 = vmatpush.msra.mxu0 0.0
  %2698 = vmatpush.msra.mxu0 0.0
  %2699 = vmatpush.msra.mxu0 0.0
  %2700 = vmatpush.msra.mxu0 0.0
  %2701 = vmatpush.msra.mxu0 0.0
  %v2702 = vand.u32 %v2427, 4294901760
  %2703 = vmatpush.msra.mxu0 %v2702
  %v2704 = vand.u32 %v2425, 4294901760
  %2705 = vmatpush.msra.mxu0 %v2704
  %v2706 = vand.u32 %v2460, 4294901760
  %2707 = vmatmul.f32.gmra.mxu0 %v2706
  %v2708 = vpop.f32.mrf.mxu0
  %v2709 = vadd.f32 %v2674, %v2708
  %v2710 = vand.u32 %v2463, 4294901760
  %2711 = vmatmul.f32.gmra.mxu0 %v2710
  %v2712 = vpop.f32.mrf.mxu0
  %v2713 = vadd.f32 %v2678, %v2712
  %v2714 = vand.u32 %v2466, 4294901760
  %2715 = vmatmul.f32.gmra.mxu0 %v2714
  %v2716 = vpop.f32.mrf.mxu0
  %v2717 = vadd.f32 %v2682, %v2716
  %v2718 = vand.u32 %v2469, 4294901760
  %2719 = vmatmul.f32.gmra.mxu0 %v2718
  %v2720 = vpop.f32.mrf.mxu0
  %v2721 = vadd.f32 %v2686, %v2720
  %2722 = vdwg.mxu0
  %2723 = vmatpush.msra.mxu0 0.0
  %2724 = vmatpush.msra.mxu0 0.0
  %2725 = vmatpush.msra.mxu0 0.0
  %2726 = vmatpush.msra.mxu0 0.0
  %2727 = vmatpush.msra.mxu0 0.0
  %2728 = vmatpush.msra.mxu0 0.0
  %2729 = vmatpush.msra.mxu0 0.0
  %2730 = vmatpush.msra.mxu0 0.0
  %2731 = vmatpush.msra.mxu0 0.0
  %2732 = vmatpush.msra.mxu0 0.0
  %2733 = vmatpush.msra.mxu0 0.0
  %2734 = vmatpush.msra.mxu0 0.0
  %2735 = vmatpush.msra.mxu0 0.0
  %2736 = vmatpush.msra.mxu0 0.0
  %v2737 = vand.u32 %v2428, 4294901760
  %2738 = vmatpush.msra.mxu0 %v2737
  %v2739 = vand.u32 %v2426, 4294901760
  %2740 = vmatpush.msra.mxu0 %v2739
  %v2741 = vand.u32 %v2460, 4294901760
  %v2742 = vsub.f32 %v2460, %v2741
  %v2743 = vand.u32 %v2742, 4294901760
  %v2744 = vsub.f32 %v2742, %v2743
  %v2745 = vand.u32 %v2744, 4294901760
  %2746 = vmatmul.f32.gmra.mxu0 %v2745
  %v2747 = vpop.f32.mrf.mxu0
  %v2748 = vadd.f32 %v2442, %v2747
  %v2749 = vand.u32 %v2463, 4294901760
  %v2750 = vsub.f32 %v2463, %v2749
  %v2751 = vand.u32 %v2750, 4294901760
  %v2752 = vsub.f32 %v2750, %v2751
  %v2753 = vand.u32 %v2752, 4294901760
  %2754 = vmatmul.f32.gmra.mxu0 %v2753
  %v2755 = vpop.f32.mrf.mxu0
  %v2756 = vadd.f32 %v2447, %v2755
  %v2757 = vand.u32 %v2466, 4294901760
  %v2758 = vsub.f32 %v2466, %v2757
  %v2759 = vand.u32 %v2758, 4294901760
  %v2760 = vsub.f32 %v2758, %v2759
  %v2761 = vand.u32 %v2760, 4294901760
  %2762 = vmatmul.f32.gmra.mxu0 %v2761
  %v2763 = vpop.f32.mrf.mxu0
  %v2764 = vadd.f32 %v2452, %v2763
  %v2765 = vand.u32 %v2469, 4294901760
  %v2766 = vsub.f32 %v2469, %v2765
  %v2767 = vand.u32 %v2766, 4294901760
  %v2768 = vsub.f32 %v2766, %v2767
  %v2769 = vand.u32 %v2768, 4294901760
  %2770 = vmatmul.f32.gmra.mxu0 %v2769
  %v2771 = vpop.f32.mrf.mxu0
  %v2772 = vadd.f32 %v2457, %v2771
  %2773 = vdwg.mxu0
  %2774 = vmatpush.msra.mxu0 0.0
  %2775 = vmatpush.msra.mxu0 0.0
  %2776 = vmatpush.msra.mxu0 0.0
  %2777 = vmatpush.msra.mxu0 0.0
  %2778 = vmatpush.msra.mxu0 0.0
  %2779 = vmatpush.msra.mxu0 0.0
  %2780 = vmatpush.msra.mxu0 0.0
  %2781 = vmatpush.msra.mxu0 0.0
  %2782 = vmatpush.msra.mxu0 0.0
  %2783 = vmatpush.msra.mxu0 0.0
  %2784 = vmatpush.msra.mxu0 0.0
  %2785 = vmatpush.msra.mxu0 0.0
  %2786 = vmatpush.msra.mxu0 0.0
  %2787 = vmatpush.msra.mxu0 0.0
  %v2788 = vand.u32 %v2428, 4294901760
  %v2789 = vsub.f32 %v2428, %v2788
  %v2790 = vand.u32 %v2789, 4294901760
  %v2791 = vsub.f32 %v2789, %v2790
  %v2792 = vand.u32 %v2791, 4294901760
  %2793 = vmatpush.msra.mxu0 %v2792
  %v2794 = vand.u32 %v2426, 4294901760
  %v2795 = vsub.f32 %v2426, %v2794
  %v2796 = vand.u32 %v2795, 4294901760
  %v2797 = vsub.f32 %v2795, %v2796
  %v2798 = vand.u32 %v2797, 4294901760
  %2799 = vmatpush.msra.mxu0 %v2798
  %v2800 = vand.u32 %v2460, 4294901760
  %2801 = vmatmul.f32.gmra.mxu0 %v2800
  %v2802 = vpop.f32.mrf.mxu0
  %v2803 = vadd.f32 %v2748, %v2802
  %v2804 = vand.u32 %v2463, 4294901760
  %2805 = vmatmul.f32.gmra.mxu0 %v2804
  %v2806 = vpop.f32.mrf.mxu0
  %v2807 = vadd.f32 %v2756, %v2806
  %v2808 = vand.u32 %v2466, 4294901760
  %2809 = vmatmul.f32.gmra.mxu0 %v2808
  %v2810 = vpop.f32.mrf.mxu0
  %v2811 = vadd.f32 %v2764, %v2810
  %v2812 = vand.u32 %v2469, 4294901760
  %2813 = vmatmul.f32.gmra.mxu0 %v2812
  %v2814 = vpop.f32.mrf.mxu0
  %v2815 = vadd.f32 %v2772, %v2814
  %2816 = vdwg.mxu0
  %2817 = vmatpush.msra.mxu0 0.0
  %2818 = vmatpush.msra.mxu0 0.0
  %2819 = vmatpush.msra.mxu0 0.0
  %2820 = vmatpush.msra.mxu0 0.0
  %2821 = vmatpush.msra.mxu0 0.0
  %2822 = vmatpush.msra.mxu0 0.0
  %2823 = vmatpush.msra.mxu0 0.0
  %2824 = vmatpush.msra.mxu0 0.0
  %2825 = vmatpush.msra.mxu0 0.0
  %2826 = vmatpush.msra.mxu0 0.0
  %2827 = vmatpush.msra.mxu0 0.0
  %2828 = vmatpush.msra.mxu0 0.0
  %2829 = vmatpush.msra.mxu0 0.0
  %2830 = vmatpush.msra.mxu0 0.0
  %v2831 = vand.u32 %v2428, 4294901760
  %v2832 = vsub.f32 %v2428, %v2831
  %2833 = vmatpush.msra.mxu0 %v2832
  %v2834 = vand.u32 %v2426, 4294901760
  %v2835 = vsub.f32 %v2426, %v2834
  %2836 = vmatpush.msra.mxu0 %v2835
  %v2837 = vand.u32 %v2460, 4294901760
  %v2838 = vsub.f32 %v2460, %v2837
  %2839 = vmatmul.f32.gmra.mxu0 %v2838
  %v2840 = vpop.f32.mrf.mxu0
  %v2841 = vadd.f32 %v2803, %v2840
  %v2842 = vand.u32 %v2463, 4294901760
  %v2843 = vsub.f32 %v2463, %v2842
  %2844 = vmatmul.f32.gmra.mxu0 %v2843
  %v2845 = vpop.f32.mrf.mxu0
  %v2846 = vadd.f32 %v2807, %v2845
  %v2847 = vand.u32 %v2466, 4294901760
  %v2848 = vsub.f32 %v2466, %v2847
  %2849 = vmatmul.f32.gmra.mxu0 %v2848
  %v2850 = vpop.f32.mrf.mxu0
  %v2851 = vadd.f32 %v2811, %v2850
  %v2852 = vand.u32 %v2469, 4294901760
  %v2853 = vsub.f32 %v2469, %v2852
  %2854 = vmatmul.f32.gmra.mxu0 %v2853
  %v2855 = vpop.f32.mrf.mxu0
  %v2856 = vadd.f32 %v2815, %v2855
  %2857 = vdwg.mxu0
  %2858 = vmatpush.msra.mxu0 0.0
  %2859 = vmatpush.msra.mxu0 0.0
  %2860 = vmatpush.msra.mxu0 0.0
  %2861 = vmatpush.msra.mxu0 0.0
  %2862 = vmatpush.msra.mxu0 0.0
  %2863 = vmatpush.msra.mxu0 0.0
  %2864 = vmatpush.msra.mxu0 0.0
  %2865 = vmatpush.msra.mxu0 0.0
  %2866 = vmatpush.msra.mxu0 0.0
  %2867 = vmatpush.msra.mxu0 0.0
  %2868 = vmatpush.msra.mxu0 0.0
  %2869 = vmatpush.msra.mxu0 0.0
  %2870 = vmatpush.msra.mxu0 0.0
  %2871 = vmatpush.msra.mxu0 0.0
  %v2872 = vand.u32 %v2428, 4294901760
  %2873 = vmatpush.msra.mxu0 %v2872
  %v2874 = vand.u32 %v2426, 4294901760
  %2875 = vmatpush.msra.mxu0 %v2874
  %v2876 = vand.u32 %v2460, 4294901760
  %v2877 = vsub.f32 %v2460, %v2876
  %v2878 = vand.u32 %v2877, 4294901760
  %2879 = vmatmul.f32.gmra.mxu0 %v2878
  %v2880 = vpop.f32.mrf.mxu0
  %v2881 = vadd.f32 %v2841, %v2880
  %v2882 = vand.u32 %v2463, 4294901760
  %v2883 = vsub.f32 %v2463, %v2882
  %v2884 = vand.u32 %v2883, 4294901760
  %2885 = vmatmul.f32.gmra.mxu0 %v2884
  %v2886 = vpop.f32.mrf.mxu0
  %v2887 = vadd.f32 %v2846, %v2886
  %v2888 = vand.u32 %v2466, 4294901760
  %v2889 = vsub.f32 %v2466, %v2888
  %v2890 = vand.u32 %v2889, 4294901760
  %2891 = vmatmul.f32.gmra.mxu0 %v2890
  %v2892 = vpop.f32.mrf.mxu0
  %v2893 = vadd.f32 %v2851, %v2892
  %v2894 = vand.u32 %v2469, 4294901760
  %v2895 = vsub.f32 %v2469, %v2894
  %v2896 = vand.u32 %v2895, 4294901760
  %2897 = vmatmul.f32.gmra.mxu0 %v2896
  %v2898 = vpop.f32.mrf.mxu0
  %v2899 = vadd.f32 %v2856, %v2898
  %2900 = vdwg.mxu0
  %2901 = vmatpush.msra.mxu0 0.0
  %2902 = vmatpush.msra.mxu0 0.0
  %2903 = vmatpush.msra.mxu0 0.0
  %2904 = vmatpush.msra.mxu0 0.0
  %2905 = vmatpush.msra.mxu0 0.0
  %2906 = vmatpush.msra.mxu0 0.0
  %2907 = vmatpush.msra.mxu0 0.0
  %2908 = vmatpush.msra.mxu0 0.0
  %2909 = vmatpush.msra.mxu0 0.0
  %2910 = vmatpush.msra.mxu0 0.0
  %2911 = vmatpush.msra.mxu0 0.0
  %2912 = vmatpush.msra.mxu0 0.0
  %2913 = vmatpush.msra.mxu0 0.0
  %2914 = vmatpush.msra.mxu0 0.0
  %v2915 = vand.u32 %v2428, 4294901760
  %v2916 = vsub.f32 %v2428, %v2915
  %v2917 = vand.u32 %v2916, 4294901760
  %2918 = vmatpush.msra.mxu0 %v2917
  %v2919 = vand.u32 %v2426, 4294901760
  %v2920 = vsub.f32 %v2426, %v2919
  %v2921 = vand.u32 %v2920, 4294901760
  %2922 = vmatpush.msra.mxu0 %v2921
  %v2923 = vand.u32 %v2460, 4294901760
  %2924 = vmatmul.f32.gmra.mxu0 %v2923
  %v2925 = vpop.f32.mrf.mxu0
  %v2926 = vadd.f32 %v2881, %v2925
  %v2927 = vand.u32 %v2463, 4294901760
  %2928 = vmatmul.f32.gmra.mxu0 %v2927
  %v2929 = vpop.f32.mrf.mxu0
  %v2930 = vadd.f32 %v2887, %v2929
  %v2931 = vand.u32 %v2466, 4294901760
  %2932 = vmatmul.f32.gmra.mxu0 %v2931
  %v2933 = vpop.f32.mrf.mxu0
  %v2934 = vadd.f32 %v2893, %v2933
  %v2935 = vand.u32 %v2469, 4294901760
  %2936 = vmatmul.f32.gmra.mxu0 %v2935
  %v2937 = vpop.f32.mrf.mxu0
  %v2938 = vadd.f32 %v2899, %v2937
  %2939 = vdwg.mxu0
  %2940 = vmatpush.msra.mxu0 0.0
  %2941 = vmatpush.msra.mxu0 0.0
  %2942 = vmatpush.msra.mxu0 0.0
  %2943 = vmatpush.msra.mxu0 0.0
  %2944 = vmatpush.msra.mxu0 0.0
  %2945 = vmatpush.msra.mxu0 0.0
  %2946 = vmatpush.msra.mxu0 0.0
  %2947 = vmatpush.msra.mxu0 0.0
  %2948 = vmatpush.msra.mxu0 0.0
  %2949 = vmatpush.msra.mxu0 0.0
  %2950 = vmatpush.msra.mxu0 0.0
  %2951 = vmatpush.msra.mxu0 0.0
  %2952 = vmatpush.msra.mxu0 0.0
  %2953 = vmatpush.msra.mxu0 0.0
  %v2954 = vand.u32 %v2428, 4294901760
  %2955 = vmatpush.msra.mxu0 %v2954
  %v2956 = vand.u32 %v2426, 4294901760
  %2957 = vmatpush.msra.mxu0 %v2956
  %v2958 = vand.u32 %v2460, 4294901760
  %2959 = vmatmul.f32.gmra.mxu0 %v2958
  %v2960 = vpop.f32.mrf.mxu0
  %v2961 = vadd.f32 %v2926, %v2960
  %v2962 = vand.u32 %v2463, 4294901760
  %2963 = vmatmul.f32.gmra.mxu0 %v2962
  %v2964 = vpop.f32.mrf.mxu0
  %v2965 = vadd.f32 %v2930, %v2964
  %v2966 = vand.u32 %v2466, 4294901760
  %2967 = vmatmul.f32.gmra.mxu0 %v2966
  %v2968 = vpop.f32.mrf.mxu0
  %v2969 = vadd.f32 %v2934, %v2968
  %v2970 = vand.u32 %v2469, 4294901760
  %2971 = vmatmul.f32.gmra.mxu0 %v2970
  %v2972 = vpop.f32.mrf.mxu0
  %v2973 = vadd.f32 %v2938, %v2972
  %2974 = vdwg.mxu0
  %s2975 = scalar_lea.vmem %s6, 32
  %2976 = vst [vmem:[%s2975] sm:$0xff] %v2717
  %2977 = vst [vmem:[%s2975 + $0x8] sm:$0xff] %v2969
  %2978 = vst [vmem:[%s2975 + $0x10] sm:$0xff] %v2721
  %2979 = vst [vmem:[%s2975 + $0x18] sm:$0xff] %v2973
  %v2980 = vadd.f32 %v2709, %v1519
  %v2981 = vadd.f32 %v2961, %v1520
  %v2982 = vadd.f32 %v2713, %v1521
  %v2983 = vadd.f32 %v2965, %v1522
  %vm2984 = vcmp.lt.s32.totalorder %v54, 8
  %vm2985 = vcmp.lt.s32.totalorder %v55, 8
  %2986 = vrot.lane.b32.xlu0 %v2980, 8
  %v2987 = vpop.permute.xlu0 %2986
  %2988 = vrot.lane.b32.xlu0 %v2982, 8
  %v2989 = vpop.permute.xlu0 %2988
  %2990 = vrot.lane.b32.xlu0 %v2981, 8
  %v2991 = vpop.permute.xlu0 %2990
  %2992 = vrot.lane.b32.xlu0 %v2983, 8
  %v2993 = vpop.permute.xlu0 %2992
  %vm2994 = vcmp.lt.s32.totalorder %v30, 8
  %v2995 = vsel %vm2994, %v2987, %v2991
  %v2996 = vsel %vm2994, %v2989, %v2993
  %v2997 = vsel %vm2994, %v2991, %v2987
  %v2998 = vsel %vm2994, %v2993, %v2989
  %v2999 = vsel %vm2984, 0.0, %v2997
  %v3000 = vsel %vm2985, 0.0, %v2995
  %v3001 = vsel %vm2984, 0.0, %v2998
  %v3002 = vsel %vm2985, 0.0, %v2996
  %3003 = vrot.lane.b32.xlu0 %v2980, 4
  %v3004 = vpop.permute.xlu0 %3003
  %3005 = vrot.lane.b32.xlu0 %v2982, 4
  %v3006 = vpop.permute.xlu0 %3005
  %3007 = vrot.lane.b32.xlu0 %v2981, 4
  %v3008 = vpop.permute.xlu0 %3007
  %3009 = vrot.lane.b32.xlu0 %v2983, 4
  %v3010 = vpop.permute.xlu0 %3009
  %v3011 = vsel %vm1533, %v3004, %v3008
  %v3012 = vsel %vm1533, %v3006, %v3010
  %v3013 = vsel %vm1533, %v3008, %v3004
  %v3014 = vsel %vm1533, %v3010, %v3006
  %v3015 = vsel %vm1523, 0.0, %v3013
  %v3016 = vsel %vm1524, 0.0, %v3011
  %v3017 = vsel %vm1523, 0.0, %v3014
  %v3018 = vsel %vm1524, 0.0, %v3012
  %s3019 = scalar_lea.vmem %s1, 64
  %v3020 = vld [vmem:[%s3019] sm:$0xff]
  %v3021 = vld [vmem:[%s3019 + $0x8] sm:$0xff]
  %v3022 = vld [vmem:[%s3019 + $0x10] sm:$0xff]
  %v3023 = vld [vmem:[%s3019 + $0x18] sm:$0xff]
  %v3025 = vsel %vm98, %v3020, 0
  %v3028 = vsel %vm98, %v3021, 0
  %v3031 = vsel %vm98, %v3022, 0
  %v3034 = vsel %vm98, %v3023, 0
  %3036 = vmatpush.msra.mxu0 0.0
  %3037 = vmatpush.msra.mxu0 0.0
  %3038 = vmatpush.msra.mxu0 0.0
  %3039 = vmatpush.msra.mxu0 0.0
  %3040 = vmatpush.msra.mxu0 0.0
  %3041 = vmatpush.msra.mxu0 0.0
  %3042 = vmatpush.msra.mxu0 0.0
  %3043 = vmatpush.msra.mxu0 0.0
  %3044 = vmatpush.msra.mxu0 0.0
  %3045 = vmatpush.msra.mxu0 0.0
  %v3046 = vand.u32 %v2982, 4294901760
  %3047 = vmatpush.msra.mxu0 %v3046
  %v3048 = vand.u32 %v2980, 4294901760
  %3049 = vmatpush.msra.mxu0 %v3048
  %v3050 = vand.u32 %v3017, 4294901760
  %3051 = vmatpush.msra.mxu0 %v3050
  %v3052 = vand.u32 %v3015, 4294901760
  %3053 = vmatpush.msra.mxu0 %v3052
  %v3054 = vand.u32 %v3001, 4294901760
  %3055 = vmatpush.msra.mxu0 %v3054
  %v3056 = vand.u32 %v2999, 4294901760
  %3057 = vmatpush.msra.mxu0 %v3056
  %v3058 = vand.u32 %v3025, 4294901760
  %v3059 = vsub.f32 %v3025, %v3058
  %v3060 = vand.u32 %v3059, 4294901760
  %v3061 = vsub.f32 %v3059, %v3060
  %v3062 = vand.u32 %v3061, 4294901760
  %3063 = vmatmul.f32.gmra.mxu0 %v3062
  %v3064 = vpop.f32.mrf.mxu0
  %v3065 = vadd.f32 0.0, %v3064
  %v3066 = vand.u32 %v3028, 4294901760
  %v3067 = vsub.f32 %v3028, %v3066
  %v3068 = vand.u32 %v3067, 4294901760
  %v3069 = vsub.f32 %v3067, %v3068
  %v3070 = vand.u32 %v3069, 4294901760
  %3071 = vmatmul.f32.gmra.mxu0 %v3070
  %v3072 = vpop.f32.mrf.mxu0
  %v3073 = vadd.f32 0.0, %v3072
  %v3074 = vand.u32 %v3031, 4294901760
  %v3075 = vsub.f32 %v3031, %v3074
  %v3076 = vand.u32 %v3075, 4294901760
  %v3077 = vsub.f32 %v3075, %v3076
  %v3078 = vand.u32 %v3077, 4294901760
  %3079 = vmatmul.f32.gmra.mxu0 %v3078
  %v3080 = vpop.f32.mrf.mxu0
  %v3081 = vadd.f32 0.0, %v3080
  %v3082 = vand.u32 %v3034, 4294901760
  %v3083 = vsub.f32 %v3034, %v3082
  %v3084 = vand.u32 %v3083, 4294901760
  %v3085 = vsub.f32 %v3083, %v3084
  %v3086 = vand.u32 %v3085, 4294901760
  %3087 = vmatmul.f32.gmra.mxu0 %v3086
  %v3088 = vpop.f32.mrf.mxu0
  %v3089 = vadd.f32 0.0, %v3088
  %3090 = vdwg.mxu0
  %3091 = vmatpush.msra.mxu0 0.0
  %3092 = vmatpush.msra.mxu0 0.0
  %3093 = vmatpush.msra.mxu0 0.0
  %3094 = vmatpush.msra.mxu0 0.0
  %3095 = vmatpush.msra.mxu0 0.0
  %3096 = vmatpush.msra.mxu0 0.0
  %3097 = vmatpush.msra.mxu0 0.0
  %3098 = vmatpush.msra.mxu0 0.0
  %3099 = vmatpush.msra.mxu0 0.0
  %3100 = vmatpush.msra.mxu0 0.0
  %v3101 = vand.u32 %v2982, 4294901760
  %v3102 = vsub.f32 %v2982, %v3101
  %v3103 = vand.u32 %v3102, 4294901760
  %v3104 = vsub.f32 %v3102, %v3103
  %v3105 = vand.u32 %v3104, 4294901760
  %3106 = vmatpush.msra.mxu0 %v3105
  %v3107 = vand.u32 %v2980, 4294901760
  %v3108 = vsub.f32 %v2980, %v3107
  %v3109 = vand.u32 %v3108, 4294901760
  %v3110 = vsub.f32 %v3108, %v3109
  %v3111 = vand.u32 %v3110, 4294901760
  %3112 = vmatpush.msra.mxu0 %v3111
  %v3113 = vand.u32 %v3017, 4294901760
  %v3114 = vsub.f32 %v3017, %v3113
  %v3115 = vand.u32 %v3114, 4294901760
  %v3116 = vsub.f32 %v3114, %v3115
  %v3117 = vand.u32 %v3116, 4294901760
  %3118 = vmatpush.msra.mxu0 %v3117
  %v3119 = vand.u32 %v3015, 4294901760
  %v3120 = vsub.f32 %v3015, %v3119
  %v3121 = vand.u32 %v3120, 4294901760
  %v3122 = vsub.f32 %v3120, %v3121
  %v3123 = vand.u32 %v3122, 4294901760
  %3124 = vmatpush.msra.mxu0 %v3123
  %v3125 = vand.u32 %v3001, 4294901760
  %v3126 = vsub.f32 %v3001, %v3125
  %v3127 = vand.u32 %v3126, 4294901760
  %v3128 = vsub.f32 %v3126, %v3127
  %v3129 = vand.u32 %v3128, 4294901760
  %3130 = vmatpush.msra.mxu0 %v3129
  %v3131 = vand.u32 %v2999, 4294901760
  %v3132 = vsub.f32 %v2999, %v3131
  %v3133 = vand.u32 %v3132, 4294901760
  %v3134 = vsub.f32 %v3132, %v3133
  %v3135 = vand.u32 %v3134, 4294901760
  %3136 = vmatpush.msra.mxu0 %v3135
  %v3137 = vand.u32 %v3025, 4294901760
  %3138 = vmatmul.f32.gmra.mxu0 %v3137
  %v3139 = vpop.f32.mrf.mxu0
  %v3140 = vadd.f32 %v3065, %v3139
  %v3141 = vand.u32 %v3028, 4294901760
  %3142 = vmatmul.f32.gmra.mxu0 %v3141
  %v3143 = vpop.f32.mrf.mxu0
  %v3144 = vadd.f32 %v3073, %v3143
  %v3145 = vand.u32 %v3031, 4294901760
  %3146 = vmatmul.f32.gmra.mxu0 %v3145
  %v3147 = vpop.f32.mrf.mxu0
  %v3148 = vadd.f32 %v3081, %v3147
  %v3149 = vand.u32 %v3034, 4294901760
  %3150 = vmatmul.f32.gmra.mxu0 %v3149
  %v3151 = vpop.f32.mrf.mxu0
  %v3152 = vadd.f32 %v3089, %v3151
  %3153 = vdwg.mxu0
  %3154 = vmatpush.msra.mxu0 0.0
  %3155 = vmatpush.msra.mxu0 0.0
  %3156 = vmatpush.msra.mxu0 0.0
  %3157 = vmatpush.msra.mxu0 0.0
  %3158 = vmatpush.msra.mxu0 0.0
  %3159 = vmatpush.msra.mxu0 0.0
  %3160 = vmatpush.msra.mxu0 0.0
  %3161 = vmatpush.msra.mxu0 0.0
  %3162 = vmatpush.msra.mxu0 0.0
  %3163 = vmatpush.msra.mxu0 0.0
  %v3164 = vand.u32 %v2982, 4294901760
  %v3165 = vsub.f32 %v2982, %v3164
  %3166 = vmatpush.msra.mxu0 %v3165
  %v3167 = vand.u32 %v2980, 4294901760
  %v3168 = vsub.f32 %v2980, %v3167
  %3169 = vmatpush.msra.mxu0 %v3168
  %v3170 = vand.u32 %v3017, 4294901760
  %v3171 = vsub.f32 %v3017, %v3170
  %3172 = vmatpush.msra.mxu0 %v3171
  %v3173 = vand.u32 %v3015, 4294901760
  %v3174 = vsub.f32 %v3015, %v3173
  %3175 = vmatpush.msra.mxu0 %v3174
  %v3176 = vand.u32 %v3001, 4294901760
  %v3177 = vsub.f32 %v3001, %v3176
  %3178 = vmatpush.msra.mxu0 %v3177
  %v3179 = vand.u32 %v2999, 4294901760
  %v3180 = vsub.f32 %v2999, %v3179
  %3181 = vmatpush.msra.mxu0 %v3180
  %v3182 = vand.u32 %v3025, 4294901760
  %v3183 = vsub.f32 %v3025, %v3182
  %3184 = vmatmul.f32.gmra.mxu0 %v3183
  %v3185 = vpop.f32.mrf.mxu0
  %v3186 = vadd.f32 %v3140, %v3185
  %v3187 = vand.u32 %v3028, 4294901760
  %v3188 = vsub.f32 %v3028, %v3187
  %3189 = vmatmul.f32.gmra.mxu0 %v3188
  %v3190 = vpop.f32.mrf.mxu0
  %v3191 = vadd.f32 %v3144, %v3190
  %v3192 = vand.u32 %v3031, 4294901760
  %v3193 = vsub.f32 %v3031, %v3192
  %3194 = vmatmul.f32.gmra.mxu0 %v3193
  %v3195 = vpop.f32.mrf.mxu0
  %v3196 = vadd.f32 %v3148, %v3195
  %v3197 = vand.u32 %v3034, 4294901760
  %v3198 = vsub.f32 %v3034, %v3197
  %3199 = vmatmul.f32.gmra.mxu0 %v3198
  %v3200 = vpop.f32.mrf.mxu0
  %v3201 = vadd.f32 %v3152, %v3200
  %3202 = vdwg.mxu0
  %3203 = vmatpush.msra.mxu0 0.0
  %3204 = vmatpush.msra.mxu0 0.0
  %3205 = vmatpush.msra.mxu0 0.0
  %3206 = vmatpush.msra.mxu0 0.0
  %3207 = vmatpush.msra.mxu0 0.0
  %3208 = vmatpush.msra.mxu0 0.0
  %3209 = vmatpush.msra.mxu0 0.0
  %3210 = vmatpush.msra.mxu0 0.0
  %3211 = vmatpush.msra.mxu0 0.0
  %3212 = vmatpush.msra.mxu0 0.0
  %v3213 = vand.u32 %v2982, 4294901760
  %3214 = vmatpush.msra.mxu0 %v3213
  %v3215 = vand.u32 %v2980, 4294901760
  %3216 = vmatpush.msra.mxu0 %v3215
  %v3217 = vand.u32 %v3017, 4294901760
  %3218 = vmatpush.msra.mxu0 %v3217
  %v3219 = vand.u32 %v3015, 4294901760
  %3220 = vmatpush.msra.mxu0 %v3219
  %v3221 = vand.u32 %v3001, 4294901760
  %3222 = vmatpush.msra.mxu0 %v3221
  %v3223 = vand.u32 %v2999, 4294901760
  %3224 = vmatpush.msra.mxu0 %v3223
  %v3225 = vand.u32 %v3025, 4294901760
  %v3226 = vsub.f32 %v3025, %v3225
  %v3227 = vand.u32 %v3226, 4294901760
  %3228 = vmatmul.f32.gmra.mxu0 %v3227
  %v3229 = vpop.f32.mrf.mxu0
  %v3230 = vadd.f32 %v3186, %v3229
  %v3231 = vand.u32 %v3028, 4294901760
  %v3232 = vsub.f32 %v3028, %v3231
  %v3233 = vand.u32 %v3232, 4294901760
  %3234 = vmatmul.f32.gmra.mxu0 %v3233
  %v3235 = vpop.f32.mrf.mxu0
  %v3236 = vadd.f32 %v3191, %v3235
  %v3237 = vand.u32 %v3031, 4294901760
  %v3238 = vsub.f32 %v3031, %v3237
  %v3239 = vand.u32 %v3238, 4294901760
  %3240 = vmatmul.f32.gmra.mxu0 %v3239
  %v3241 = vpop.f32.mrf.mxu0
  %v3242 = vadd.f32 %v3196, %v3241
  %v3243 = vand.u32 %v3034, 4294901760
  %v3244 = vsub.f32 %v3034, %v3243
  %v3245 = vand.u32 %v3244, 4294901760
  %3246 = vmatmul.f32.gmra.mxu0 %v3245
  %v3247 = vpop.f32.mrf.mxu0
  %v3248 = vadd.f32 %v3201, %v3247
  %3249 = vdwg.mxu0
  %3250 = vmatpush.msra.mxu0 0.0
  %3251 = vmatpush.msra.mxu0 0.0
  %3252 = vmatpush.msra.mxu0 0.0
  %3253 = vmatpush.msra.mxu0 0.0
  %3254 = vmatpush.msra.mxu0 0.0
  %3255 = vmatpush.msra.mxu0 0.0
  %3256 = vmatpush.msra.mxu0 0.0
  %3257 = vmatpush.msra.mxu0 0.0
  %3258 = vmatpush.msra.mxu0 0.0
  %3259 = vmatpush.msra.mxu0 0.0
  %v3260 = vand.u32 %v2982, 4294901760
  %v3261 = vsub.f32 %v2982, %v3260
  %v3262 = vand.u32 %v3261, 4294901760
  %3263 = vmatpush.msra.mxu0 %v3262
  %v3264 = vand.u32 %v2980, 4294901760
  %v3265 = vsub.f32 %v2980, %v3264
  %v3266 = vand.u32 %v3265, 4294901760
  %3267 = vmatpush.msra.mxu0 %v3266
  %v3268 = vand.u32 %v3017, 4294901760
  %v3269 = vsub.f32 %v3017, %v3268
  %v3270 = vand.u32 %v3269, 4294901760
  %3271 = vmatpush.msra.mxu0 %v3270
  %v3272 = vand.u32 %v3015, 4294901760
  %v3273 = vsub.f32 %v3015, %v3272
  %v3274 = vand.u32 %v3273, 4294901760
  %3275 = vmatpush.msra.mxu0 %v3274
  %v3276 = vand.u32 %v3001, 4294901760
  %v3277 = vsub.f32 %v3001, %v3276
  %v3278 = vand.u32 %v3277, 4294901760
  %3279 = vmatpush.msra.mxu0 %v3278
  %v3280 = vand.u32 %v2999, 4294901760
  %v3281 = vsub.f32 %v2999, %v3280
  %v3282 = vand.u32 %v3281, 4294901760
  %3283 = vmatpush.msra.mxu0 %v3282
  %v3284 = vand.u32 %v3025, 4294901760
  %3285 = vmatmul.f32.gmra.mxu0 %v3284
  %v3286 = vpop.f32.mrf.mxu0
  %v3287 = vadd.f32 %v3230, %v3286
  %v3288 = vand.u32 %v3028, 4294901760
  %3289 = vmatmul.f32.gmra.mxu0 %v3288
  %v3290 = vpop.f32.mrf.mxu0
  %v3291 = vadd.f32 %v3236, %v3290
  %v3292 = vand.u32 %v3031, 4294901760
  %3293 = vmatmul.f32.gmra.mxu0 %v3292
  %v3294 = vpop.f32.mrf.mxu0
  %v3295 = vadd.f32 %v3242, %v3294
  %v3296 = vand.u32 %v3034, 4294901760
  %3297 = vmatmul.f32.gmra.mxu0 %v3296
  %v3298 = vpop.f32.mrf.mxu0
  %v3299 = vadd.f32 %v3248, %v3298
  %3300 = vdwg.mxu0
  %3301 = vmatpush.msra.mxu0 0.0
  %3302 = vmatpush.msra.mxu0 0.0
  %3303 = vmatpush.msra.mxu0 0.0
  %3304 = vmatpush.msra.mxu0 0.0
  %3305 = vmatpush.msra.mxu0 0.0
  %3306 = vmatpush.msra.mxu0 0.0
  %3307 = vmatpush.msra.mxu0 0.0
  %3308 = vmatpush.msra.mxu0 0.0
  %3309 = vmatpush.msra.mxu0 0.0
  %3310 = vmatpush.msra.mxu0 0.0
  %v3311 = vand.u32 %v2982, 4294901760
  %3312 = vmatpush.msra.mxu0 %v3311
  %v3313 = vand.u32 %v2980, 4294901760
  %3314 = vmatpush.msra.mxu0 %v3313
  %v3315 = vand.u32 %v3017, 4294901760
  %3316 = vmatpush.msra.mxu0 %v3315
  %v3317 = vand.u32 %v3015, 4294901760
  %3318 = vmatpush.msra.mxu0 %v3317
  %v3319 = vand.u32 %v3001, 4294901760
  %3320 = vmatpush.msra.mxu0 %v3319
  %v3321 = vand.u32 %v2999, 4294901760
  %3322 = vmatpush.msra.mxu0 %v3321
  %v3323 = vand.u32 %v3025, 4294901760
  %3324 = vmatmul.f32.gmra.mxu0 %v3323
  %v3325 = vpop.f32.mrf.mxu0
  %v3326 = vadd.f32 %v3287, %v3325
  %v3327 = vand.u32 %v3028, 4294901760
  %3328 = vmatmul.f32.gmra.mxu0 %v3327
  %v3329 = vpop.f32.mrf.mxu0
  %v3330 = vadd.f32 %v3291, %v3329
  %v3331 = vand.u32 %v3031, 4294901760
  %3332 = vmatmul.f32.gmra.mxu0 %v3331
  %v3333 = vpop.f32.mrf.mxu0
  %v3334 = vadd.f32 %v3295, %v3333
  %v3335 = vand.u32 %v3034, 4294901760
  %3336 = vmatmul.f32.gmra.mxu0 %v3335
  %v3337 = vpop.f32.mrf.mxu0
  %v3338 = vadd.f32 %v3299, %v3337
  %3339 = vdwg.mxu0
  %3340 = vmatpush.msra.mxu0 0.0
  %3341 = vmatpush.msra.mxu0 0.0
  %3342 = vmatpush.msra.mxu0 0.0
  %3343 = vmatpush.msra.mxu0 0.0
  %3344 = vmatpush.msra.mxu0 0.0
  %3345 = vmatpush.msra.mxu0 0.0
  %3346 = vmatpush.msra.mxu0 0.0
  %3347 = vmatpush.msra.mxu0 0.0
  %3348 = vmatpush.msra.mxu0 0.0
  %3349 = vmatpush.msra.mxu0 0.0
  %v3350 = vand.u32 %v2983, 4294901760
  %3351 = vmatpush.msra.mxu0 %v3350
  %v3352 = vand.u32 %v2981, 4294901760
  %3353 = vmatpush.msra.mxu0 %v3352
  %v3354 = vand.u32 %v3018, 4294901760
  %3355 = vmatpush.msra.mxu0 %v3354
  %v3356 = vand.u32 %v3016, 4294901760
  %3357 = vmatpush.msra.mxu0 %v3356
  %v3358 = vand.u32 %v3002, 4294901760
  %3359 = vmatpush.msra.mxu0 %v3358
  %v3360 = vand.u32 %v3000, 4294901760
  %3361 = vmatpush.msra.mxu0 %v3360
  %v3362 = vand.u32 %v3025, 4294901760
  %v3363 = vsub.f32 %v3025, %v3362
  %v3364 = vand.u32 %v3363, 4294901760
  %v3365 = vsub.f32 %v3363, %v3364
  %v3366 = vand.u32 %v3365, 4294901760
  %3367 = vmatmul.f32.gmra.mxu0 %v3366
  %v3368 = vpop.f32.mrf.mxu0
  %v3369 = vadd.f32 0.0, %v3368
  %v3370 = vand.u32 %v3028, 4294901760
  %v3371 = vsub.f32 %v3028, %v3370
  %v3372 = vand.u32 %v3371, 4294901760
  %v3373 = vsub.f32 %v3371, %v3372
  %v3374 = vand.u32 %v3373, 4294901760
  %3375 = vmatmul.f32.gmra.mxu0 %v3374
  %v3376 = vpop.f32.mrf.mxu0
  %v3377 = vadd.f32 0.0, %v3376
  %v3378 = vand.u32 %v3031, 4294901760
  %v3379 = vsub.f32 %v3031, %v3378
  %v3380 = vand.u32 %v3379, 4294901760
  %v3381 = vsub.f32 %v3379, %v3380
  %v3382 = vand.u32 %v3381, 4294901760
  %3383 = vmatmul.f32.gmra.mxu0 %v3382
  %v3384 = vpop.f32.mrf.mxu0
  %v3385 = vadd.f32 0.0, %v3384
  %v3386 = vand.u32 %v3034, 4294901760
  %v3387 = vsub.f32 %v3034, %v3386
  %v3388 = vand.u32 %v3387, 4294901760
  %v3389 = vsub.f32 %v3387, %v3388
  %v3390 = vand.u32 %v3389, 4294901760
  %3391 = vmatmul.f32.gmra.mxu0 %v3390
  %v3392 = vpop.f32.mrf.mxu0
  %v3393 = vadd.f32 0.0, %v3392
  %3394 = vdwg.mxu0
  %3395 = vmatpush.msra.mxu0 0.0
  %3396 = vmatpush.msra.mxu0 0.0
  %3397 = vmatpush.msra.mxu0 0.0
  %3398 = vmatpush.msra.mxu0 0.0
  %3399 = vmatpush.msra.mxu0 0.0
  %3400 = vmatpush.msra.mxu0 0.0
  %3401 = vmatpush.msra.mxu0 0.0
  %3402 = vmatpush.msra.mxu0 0.0
  %3403 = vmatpush.msra.mxu0 0.0
  %3404 = vmatpush.msra.mxu0 0.0
  %v3405 = vand.u32 %v2983, 4294901760
  %v3406 = vsub.f32 %v2983, %v3405
  %v3407 = vand.u32 %v3406, 4294901760
  %v3408 = vsub.f32 %v3406, %v3407
  %v3409 = vand.u32 %v3408, 4294901760
  %3410 = vmatpush.msra.mxu0 %v3409
  %v3411 = vand.u32 %v2981, 4294901760
  %v3412 = vsub.f32 %v2981, %v3411
  %v3413 = vand.u32 %v3412, 4294901760
  %v3414 = vsub.f32 %v3412, %v3413
  %v3415 = vand.u32 %v3414, 4294901760
  %3416 = vmatpush.msra.mxu0 %v3415
  %v3417 = vand.u32 %v3018, 4294901760
  %v3418 = vsub.f32 %v3018, %v3417
  %v3419 = vand.u32 %v3418, 4294901760
  %v3420 = vsub.f32 %v3418, %v3419
  %v3421 = vand.u32 %v3420, 4294901760
  %3422 = vmatpush.msra.mxu0 %v3421
  %v3423 = vand.u32 %v3016, 4294901760
  %v3424 = vsub.f32 %v3016, %v3423
  %v3425 = vand.u32 %v3424, 4294901760
  %v3426 = vsub.f32 %v3424, %v3425
  %v3427 = vand.u32 %v3426, 4294901760
  %3428 = vmatpush.msra.mxu0 %v3427
  %v3429 = vand.u32 %v3002, 4294901760
  %v3430 = vsub.f32 %v3002, %v3429
  %v3431 = vand.u32 %v3430, 4294901760
  %v3432 = vsub.f32 %v3430, %v3431
  %v3433 = vand.u32 %v3432, 4294901760
  %3434 = vmatpush.msra.mxu0 %v3433
  %v3435 = vand.u32 %v3000, 4294901760
  %v3436 = vsub.f32 %v3000, %v3435
  %v3437 = vand.u32 %v3436, 4294901760
  %v3438 = vsub.f32 %v3436, %v3437
  %v3439 = vand.u32 %v3438, 4294901760
  %3440 = vmatpush.msra.mxu0 %v3439
  %v3441 = vand.u32 %v3025, 4294901760
  %3442 = vmatmul.f32.gmra.mxu0 %v3441
  %v3443 = vpop.f32.mrf.mxu0
  %v3444 = vadd.f32 %v3369, %v3443
  %v3445 = vand.u32 %v3028, 4294901760
  %3446 = vmatmul.f32.gmra.mxu0 %v3445
  %v3447 = vpop.f32.mrf.mxu0
  %v3448 = vadd.f32 %v3377, %v3447
  %v3449 = vand.u32 %v3031, 4294901760
  %3450 = vmatmul.f32.gmra.mxu0 %v3449
  %v3451 = vpop.f32.mrf.mxu0
  %v3452 = vadd.f32 %v3385, %v3451
  %v3453 = vand.u32 %v3034, 4294901760
  %3454 = vmatmul.f32.gmra.mxu0 %v3453
  %v3455 = vpop.f32.mrf.mxu0
  %v3456 = vadd.f32 %v3393, %v3455
  %3457 = vdwg.mxu0
  %3458 = vmatpush.msra.mxu0 0.0
  %3459 = vmatpush.msra.mxu0 0.0
  %3460 = vmatpush.msra.mxu0 0.0
  %3461 = vmatpush.msra.mxu0 0.0
  %3462 = vmatpush.msra.mxu0 0.0
  %3463 = vmatpush.msra.mxu0 0.0
  %3464 = vmatpush.msra.mxu0 0.0
  %3465 = vmatpush.msra.mxu0 0.0
  %3466 = vmatpush.msra.mxu0 0.0
  %3467 = vmatpush.msra.mxu0 0.0
  %v3468 = vand.u32 %v2983, 4294901760
  %v3469 = vsub.f32 %v2983, %v3468
  %3470 = vmatpush.msra.mxu0 %v3469
  %v3471 = vand.u32 %v2981, 4294901760
  %v3472 = vsub.f32 %v2981, %v3471
  %3473 = vmatpush.msra.mxu0 %v3472
  %v3474 = vand.u32 %v3018, 4294901760
  %v3475 = vsub.f32 %v3018, %v3474
  %3476 = vmatpush.msra.mxu0 %v3475
  %v3477 = vand.u32 %v3016, 4294901760
  %v3478 = vsub.f32 %v3016, %v3477
  %3479 = vmatpush.msra.mxu0 %v3478
  %v3480 = vand.u32 %v3002, 4294901760
  %v3481 = vsub.f32 %v3002, %v3480
  %3482 = vmatpush.msra.mxu0 %v3481
  %v3483 = vand.u32 %v3000, 4294901760
  %v3484 = vsub.f32 %v3000, %v3483
  %3485 = vmatpush.msra.mxu0 %v3484
  %v3486 = vand.u32 %v3025, 4294901760
  %v3487 = vsub.f32 %v3025, %v3486
  %3488 = vmatmul.f32.gmra.mxu0 %v3487
  %v3489 = vpop.f32.mrf.mxu0
  %v3490 = vadd.f32 %v3444, %v3489
  %v3491 = vand.u32 %v3028, 4294901760
  %v3492 = vsub.f32 %v3028, %v3491
  %3493 = vmatmul.f32.gmra.mxu0 %v3492
  %v3494 = vpop.f32.mrf.mxu0
  %v3495 = vadd.f32 %v3448, %v3494
  %v3496 = vand.u32 %v3031, 4294901760
  %v3497 = vsub.f32 %v3031, %v3496
  %3498 = vmatmul.f32.gmra.mxu0 %v3497
  %v3499 = vpop.f32.mrf.mxu0
  %v3500 = vadd.f32 %v3452, %v3499
  %v3501 = vand.u32 %v3034, 4294901760
  %v3502 = vsub.f32 %v3034, %v3501
  %3503 = vmatmul.f32.gmra.mxu0 %v3502
  %v3504 = vpop.f32.mrf.mxu0
  %v3505 = vadd.f32 %v3456, %v3504
  %3506 = vdwg.mxu0
  %3507 = vmatpush.msra.mxu0 0.0
  %3508 = vmatpush.msra.mxu0 0.0
  %3509 = vmatpush.msra.mxu0 0.0
  %3510 = vmatpush.msra.mxu0 0.0
  %3511 = vmatpush.msra.mxu0 0.0
  %3512 = vmatpush.msra.mxu0 0.0
  %3513 = vmatpush.msra.mxu0 0.0
  %3514 = vmatpush.msra.mxu0 0.0
  %3515 = vmatpush.msra.mxu0 0.0
  %3516 = vmatpush.msra.mxu0 0.0
  %v3517 = vand.u32 %v2983, 4294901760
  %3518 = vmatpush.msra.mxu0 %v3517
  %v3519 = vand.u32 %v2981, 4294901760
  %3520 = vmatpush.msra.mxu0 %v3519
  %v3521 = vand.u32 %v3018, 4294901760
  %3522 = vmatpush.msra.mxu0 %v3521
  %v3523 = vand.u32 %v3016, 4294901760
  %3524 = vmatpush.msra.mxu0 %v3523
  %v3525 = vand.u32 %v3002, 4294901760
  %3526 = vmatpush.msra.mxu0 %v3525
  %v3527 = vand.u32 %v3000, 4294901760
  %3528 = vmatpush.msra.mxu0 %v3527
  %v3529 = vand.u32 %v3025, 4294901760
  %v3530 = vsub.f32 %v3025, %v3529
  %v3531 = vand.u32 %v3530, 4294901760
  %3532 = vmatmul.f32.gmra.mxu0 %v3531
  %v3533 = vpop.f32.mrf.mxu0
  %v3534 = vadd.f32 %v3490, %v3533
  %v3535 = vand.u32 %v3028, 4294901760
  %v3536 = vsub.f32 %v3028, %v3535
  %v3537 = vand.u32 %v3536, 4294901760
  %3538 = vmatmul.f32.gmra.mxu0 %v3537
  %v3539 = vpop.f32.mrf.mxu0
  %v3540 = vadd.f32 %v3495, %v3539
  %v3541 = vand.u32 %v3031, 4294901760
  %v3542 = vsub.f32 %v3031, %v3541
  %v3543 = vand.u32 %v3542, 4294901760
  %3544 = vmatmul.f32.gmra.mxu0 %v3543
  %v3545 = vpop.f32.mrf.mxu0
  %v3546 = vadd.f32 %v3500, %v3545
  %v3547 = vand.u32 %v3034, 4294901760
  %v3548 = vsub.f32 %v3034, %v3547
  %v3549 = vand.u32 %v3548, 4294901760
  %3550 = vmatmul.f32.gmra.mxu0 %v3549
  %v3551 = vpop.f32.mrf.mxu0
  %v3552 = vadd.f32 %v3505, %v3551
  %3553 = vdwg.mxu0
  %3554 = vmatpush.msra.mxu0 0.0
  %3555 = vmatpush.msra.mxu0 0.0
  %3556 = vmatpush.msra.mxu0 0.0
  %3557 = vmatpush.msra.mxu0 0.0
  %3558 = vmatpush.msra.mxu0 0.0
  %3559 = vmatpush.msra.mxu0 0.0
  %3560 = vmatpush.msra.mxu0 0.0
  %3561 = vmatpush.msra.mxu0 0.0
  %3562 = vmatpush.msra.mxu0 0.0
  %3563 = vmatpush.msra.mxu0 0.0
  %v3564 = vand.u32 %v2983, 4294901760
  %v3565 = vsub.f32 %v2983, %v3564
  %v3566 = vand.u32 %v3565, 4294901760
  %3567 = vmatpush.msra.mxu0 %v3566
  %v3568 = vand.u32 %v2981, 4294901760
  %v3569 = vsub.f32 %v2981, %v3568
  %v3570 = vand.u32 %v3569, 4294901760
  %3571 = vmatpush.msra.mxu0 %v3570
  %v3572 = vand.u32 %v3018, 4294901760
  %v3573 = vsub.f32 %v3018, %v3572
  %v3574 = vand.u32 %v3573, 4294901760
  %3575 = vmatpush.msra.mxu0 %v3574
  %v3576 = vand.u32 %v3016, 4294901760
  %v3577 = vsub.f32 %v3016, %v3576
  %v3578 = vand.u32 %v3577, 4294901760
  %3579 = vmatpush.msra.mxu0 %v3578
  %v3580 = vand.u32 %v3002, 4294901760
  %v3581 = vsub.f32 %v3002, %v3580
  %v3582 = vand.u32 %v3581, 4294901760
  %3583 = vmatpush.msra.mxu0 %v3582
  %v3584 = vand.u32 %v3000, 4294901760
  %v3585 = vsub.f32 %v3000, %v3584
  %v3586 = vand.u32 %v3585, 4294901760
  %3587 = vmatpush.msra.mxu0 %v3586
  %v3588 = vand.u32 %v3025, 4294901760
  %3589 = vmatmul.f32.gmra.mxu0 %v3588
  %v3590 = vpop.f32.mrf.mxu0
  %v3591 = vadd.f32 %v3534, %v3590
  %v3592 = vand.u32 %v3028, 4294901760
  %3593 = vmatmul.f32.gmra.mxu0 %v3592
  %v3594 = vpop.f32.mrf.mxu0
  %v3595 = vadd.f32 %v3540, %v3594
  %v3596 = vand.u32 %v3031, 4294901760
  %3597 = vmatmul.f32.gmra.mxu0 %v3596
  %v3598 = vpop.f32.mrf.mxu0
  %v3599 = vadd.f32 %v3546, %v3598
  %v3600 = vand.u32 %v3034, 4294901760
  %3601 = vmatmul.f32.gmra.mxu0 %v3600
  %v3602 = vpop.f32.mrf.mxu0
  %v3603 = vadd.f32 %v3552, %v3602
  %3604 = vdwg.mxu0
  %3605 = vmatpush.msra.mxu0 0.0
  %3606 = vmatpush.msra.mxu0 0.0
  %3607 = vmatpush.msra.mxu0 0.0
  %3608 = vmatpush.msra.mxu0 0.0
  %3609 = vmatpush.msra.mxu0 0.0
  %3610 = vmatpush.msra.mxu0 0.0
  %3611 = vmatpush.msra.mxu0 0.0
  %3612 = vmatpush.msra.mxu0 0.0
  %3613 = vmatpush.msra.mxu0 0.0
  %3614 = vmatpush.msra.mxu0 0.0
  %v3615 = vand.u32 %v2983, 4294901760
  %3616 = vmatpush.msra.mxu0 %v3615
  %v3617 = vand.u32 %v2981, 4294901760
  %3618 = vmatpush.msra.mxu0 %v3617
  %v3619 = vand.u32 %v3018, 4294901760
  %3620 = vmatpush.msra.mxu0 %v3619
  %v3621 = vand.u32 %v3016, 4294901760
  %3622 = vmatpush.msra.mxu0 %v3621
  %v3623 = vand.u32 %v3002, 4294901760
  %3624 = vmatpush.msra.mxu0 %v3623
  %v3625 = vand.u32 %v3000, 4294901760
  %3626 = vmatpush.msra.mxu0 %v3625
  %v3627 = vand.u32 %v3025, 4294901760
  %3628 = vmatmul.f32.gmra.mxu0 %v3627
  %v3629 = vpop.f32.mrf.mxu0
  %v3630 = vadd.f32 %v3591, %v3629
  %v3631 = vand.u32 %v3028, 4294901760
  %3632 = vmatmul.f32.gmra.mxu0 %v3631
  %v3633 = vpop.f32.mrf.mxu0
  %v3634 = vadd.f32 %v3595, %v3633
  %v3635 = vand.u32 %v3031, 4294901760
  %3636 = vmatmul.f32.gmra.mxu0 %v3635
  %v3637 = vpop.f32.mrf.mxu0
  %v3638 = vadd.f32 %v3599, %v3637
  %v3639 = vand.u32 %v3034, 4294901760
  %3640 = vmatmul.f32.gmra.mxu0 %v3639
  %v3641 = vpop.f32.mrf.mxu0
  %v3642 = vadd.f32 %v3603, %v3641
  %3643 = vdwg.mxu0
  %v3644 = vadd.f32 %v3326, %v3630
  %3645 = vadd.xlane.f32.xlu0 %v3644
  %v3646 = vpop.xlane.xlu0 %3645
  %v3647 = vadd.f32 %v3330, %v3634
  %3648 = vadd.xlane.f32.xlu0 %v3647
  %v3649 = vpop.xlane.xlu0 %3648
  %v3650 = vadd.f32 %v3334, %v3638
  %3651 = vadd.xlane.f32.xlu0 %v3650
  %v3652 = vpop.xlane.xlu0 %3651
  %v3653 = vadd.f32 %v3338, %v3642
  %3654 = vadd.xlane.f32.xlu0 %v3653
  %v3655 = vpop.xlane.xlu0 %3654
  %v3656 = vmul.f32 %v3646, %v737
  %v3657 = vmul.f32 %v3649, %v737
  %v3658 = vmul.f32 %v3652, %v737
  %v3659 = vmul.f32 %v3655, %v737
  %v3660 = vsub.f32 %v3326, %v3656
  %v3661 = vsub.f32 %v3630, %v3656
  %v3662 = vsub.f32 %v3330, %v3657
  %v3663 = vsub.f32 %v3634, %v3657
  %v3664 = vsub.f32 %v3334, %v3658
  %v3665 = vsub.f32 %v3638, %v3658
  %v3666 = vsub.f32 %v3338, %v3659
  %v3667 = vsub.f32 %v3642, %v3659
  %v3668 = vmul.f32 %v3660, %v3660
  %v3669 = vmul.f32 %v3661, %v3661
  %v3670 = vmul.f32 %v3662, %v3662
  %v3671 = vmul.f32 %v3663, %v3663
  %v3672 = vmul.f32 %v3664, %v3664
  %v3673 = vmul.f32 %v3665, %v3665
  %v3674 = vmul.f32 %v3666, %v3666
  %v3675 = vmul.f32 %v3667, %v3667
  %v3676 = vadd.f32 %v3668, %v3669
  %3677 = vadd.xlane.f32.xlu0 %v3676
  %v3678 = vpop.xlane.xlu0 %3677
  %v3679 = vadd.f32 %v3670, %v3671
  %3680 = vadd.xlane.f32.xlu0 %v3679
  %v3681 = vpop.xlane.xlu0 %3680
  %v3682 = vadd.f32 %v3672, %v3673
  %3683 = vadd.xlane.f32.xlu0 %v3682
  %v3684 = vpop.xlane.xlu0 %3683
  %v3685 = vadd.f32 %v3674, %v3675
  %3686 = vadd.xlane.f32.xlu0 %v3685
  %v3687 = vpop.xlane.xlu0 %3686
  %v3688 = vmul.f32 %v3678, %v737
  %v3689 = vmul.f32 %v3681, %v737
  %v3690 = vmul.f32 %v3684, %v737
  %v3691 = vmul.f32 %v3687, %v737
  %s3692 = scalar_lea.vmem %s2, 64
  %v3693 = vld [vmem:[%s3692] sm:$0xff]
  %v3694 = vld [vmem:[%s3692 + $0x8] sm:$0xff]
  %v3695 = vld [vmem:[%s3692 + $0x10] sm:$0xff]
  %v3696 = vld [vmem:[%s3692 + $0x18] sm:$0xff]
  %v3697 = vadd.f32 %v3688, 1e-05
  %v3698 = vadd.f32 %v3689, 1e-05
  %v3699 = vadd.f32 %v3690, 1e-05
  %v3700 = vadd.f32 %v3691, 1e-05
  %v3701 = vrsqrt.pop %v3697
  %v3702 = vmul.f32 %v3701, %v3697
  %v3703 = vmul.f32 %v3702, %v3701
  %v3704 = vmul.f32 0.5, %v3703
  %v3705 = vsub.f32 1.5, %v3704
  %v3706 = vmul.f32 %v3701, %v3705
  %vm3707 = vweird.f32 %v3697
  %vm3708 = vweird.f32 %v3701
  %vm3709 = vmor %vm3707, %vm3708
  %v3710 = vsel %vm3709, %v3701, %v3706
  %v3711 = vrsqrt.pop %v3698
  %v3712 = vmul.f32 %v3711, %v3698
  %v3713 = vmul.f32 %v3712, %v3711
  %v3714 = vmul.f32 0.5, %v3713
  %v3715 = vsub.f32 1.5, %v3714
  %v3716 = vmul.f32 %v3711, %v3715
  %vm3717 = vweird.f32 %v3698
  %vm3718 = vweird.f32 %v3711
  %vm3719 = vmor %vm3717, %vm3718
  %v3720 = vsel %vm3719, %v3711, %v3716
  %v3721 = vrsqrt.pop %v3699
  %v3722 = vmul.f32 %v3721, %v3699
  %v3723 = vmul.f32 %v3722, %v3721
  %v3724 = vmul.f32 0.5, %v3723
  %v3725 = vsub.f32 1.5, %v3724
  %v3726 = vmul.f32 %v3721, %v3725
  %vm3727 = vweird.f32 %v3699
  %vm3728 = vweird.f32 %v3721
  %vm3729 = vmor %vm3727, %vm3728
  %v3730 = vsel %vm3729, %v3721, %v3726
  %v3731 = vrsqrt.pop %v3700
  %v3732 = vmul.f32 %v3731, %v3700
  %v3733 = vmul.f32 %v3732, %v3731
  %v3734 = vmul.f32 0.5, %v3733
  %v3735 = vsub.f32 1.5, %v3734
  %v3736 = vmul.f32 %v3731, %v3735
  %vm3737 = vweird.f32 %v3700
  %vm3738 = vweird.f32 %v3731
  %vm3739 = vmor %vm3737, %vm3738
  %v3740 = vsel %vm3739, %v3731, %v3736
  %v3741 = vmul.f32 %v3693, %v3710
  %v3742 = vmul.f32 %v3694, %v3720
  %v3743 = vmul.f32 %v3695, %v3730
  %v3744 = vmul.f32 %v3696, %v3740
  %3746 = vset.pattern.permute.xlu0 0
  %3747 = vperm.xlu0 %3746, %v3741
  %v3748 = vpop.permute.xlu0 %3747
  %3751 = vset.pattern.permute.xlu0 0
  %3752 = vperm.xlu0 %3751, %v3742
  %v3753 = vpop.permute.xlu0 %3752
  %3756 = vset.pattern.permute.xlu0 0
  %3757 = vperm.xlu0 %3756, %v3743
  %v3758 = vpop.permute.xlu0 %3757
  %3761 = vset.pattern.permute.xlu0 0
  %3762 = vperm.xlu0 %3761, %v3744
  %v3763 = vpop.permute.xlu0 %3762
  %v3765 = vmul.f32 %v3660, %v3748
  %v3766 = vmul.f32 %v3661, %v3748
  %v3767 = vmul.f32 %v3662, %v3753
  %v3768 = vmul.f32 %v3663, %v3753
  %v3769 = vmul.f32 %v3664, %v3758
  %v3770 = vmul.f32 %v3665, %v3758
  %v3771 = vmul.f32 %v3666, %v3763
  %v3772 = vmul.f32 %v3667, %v3763
  %s3773 = scalar_lea.vmem %s3, 64
  %v3774 = vld [vmem:[%s3773] sm:$0xff]
  %v3775 = vld [vmem:[%s3773 + $0x8] sm:$0xff]
  %v3776 = vld [vmem:[%s3773 + $0x10] sm:$0xff]
  %v3777 = vld [vmem:[%s3773 + $0x18] sm:$0xff]
  %3779 = vset.pattern.permute.xlu0 0
  %3780 = vperm.xlu0 %3779, %v3774
  %v3781 = vpop.permute.xlu0 %3780
  %3784 = vset.pattern.permute.xlu0 0
  %3785 = vperm.xlu0 %3784, %v3775
  %v3786 = vpop.permute.xlu0 %3785
  %3789 = vset.pattern.permute.xlu0 0
  %3790 = vperm.xlu0 %3789, %v3776
  %v3791 = vpop.permute.xlu0 %3790
  %3794 = vset.pattern.permute.xlu0 0
  %3795 = vperm.xlu0 %3794, %v3777
  %v3796 = vpop.permute.xlu0 %3795
  %v3798 = vadd.f32 %v3765, %v3781
  %v3799 = vadd.f32 %v3766, %v3781
  %v3800 = vadd.f32 %v3767, %v3786
  %v3801 = vadd.f32 %v3768, %v3786
  %v3802 = vadd.f32 %v3769, %v3791
  %v3803 = vadd.f32 %v3770, %v3791
  %v3804 = vadd.f32 %v3771, %v3796
  %v3805 = vadd.f32 %v3772, %v3796
  %v3806 = vtanh.pop %v3798
  %v3807 = vtanh.pop %v3799
  %v3808 = vtanh.pop %v3800
  %v3809 = vtanh.pop %v3801
  %v3810 = vsub.f32 0.0, %v3802
  %v3811 = vsub.f32 0.0, %v3803
  %v3812 = vsub.f32 0.0, %v3804
  %v3813 = vsub.f32 0.0, %v3805
  %v3814 = vmul.f32 %v3810, 1.442695
  %v3815 = vpow.pop %v3814
  %v3816 = vmul.f32 %v3811, 1.442695
  %v3817 = vpow.pop %v3816
  %v3818 = vmul.f32 %v3812, 1.442695
  %v3819 = vpow.pop %v3818
  %v3820 = vmul.f32 %v3813, 1.442695
  %v3821 = vpow.pop %v3820
  %v3822 = vadd.f32 %v3815, 1.0
  %v3823 = vadd.f32 %v3817, 1.0
  %v3824 = vadd.f32 %v3819, 1.0
  %v3825 = vadd.f32 %v3821, 1.0
  %v3826 = vrcp.pop %v3822
  %v3827 = vmul.f32 %v3822, %v3826
  %v3828 = vsub.f32 1.0, %v3827
  %v3829 = vmul.f32 %v3826, %v3828
  %v3830 = vadd.f32 %v3826, %v3829
  %vm3831 = vweird.f32 %v3822
  %vm3832 = vweird.f32 %v3826
  %vm3833 = vmor %vm3831, %vm3832
  %v3834 = vsel %vm3833, %v3826, %v3830
  %v3835 = vand.u32 2147483647, %v3822
  %vm3836 = vcmp.eq.f32.partialorder %v3835, 8.507059e+37
  %v3837 = vand.u32 %v3822, 2147483648
  %v3838 = vor.u32 1.1754944e-38, %v3837
  %v3839 = vsel %vm3836, %v3838, %v3834
  %v3840 = vmul.f32 1.0, %v3839
  %v3841 = vrcp.pop %v3823
  %v3842 = vmul.f32 %v3823, %v3841
  %v3843 = vsub.f32 1.0, %v3842
  %v3844 = vmul.f32 %v3841, %v3843
  %v3845 = vadd.f32 %v3841, %v3844
  %vm3846 = vweird.f32 %v3823
  %vm3847 = vweird.f32 %v3841
  %vm3848 = vmor %vm3846, %vm3847
  %v3849 = vsel %vm3848, %v3841, %v3845
  %v3850 = vand.u32 2147483647, %v3823
  %vm3851 = vcmp.eq.f32.partialorder %v3850, 8.507059e+37
  %v3852 = vand.u32 %v3823, 2147483648
  %v3853 = vor.u32 1.1754944e-38, %v3852
  %v3854 = vsel %vm3851, %v3853, %v3849
  %v3855 = vmul.f32 1.0, %v3854
  %v3856 = vrcp.pop %v3824
  %v3857 = vmul.f32 %v3824, %v3856
  %v3858 = vsub.f32 1.0, %v3857
  %v3859 = vmul.f32 %v3856, %v3858
  %v3860 = vadd.f32 %v3856, %v3859
  %vm3861 = vweird.f32 %v3824
  %vm3862 = vweird.f32 %v3856
  %vm3863 = vmor %vm3861, %vm3862
  %v3864 = vsel %vm3863, %v3856, %v3860
  %v3865 = vand.u32 2147483647, %v3824
  %vm3866 = vcmp.eq.f32.partialorder %v3865, 8.507059e+37
  %v3867 = vand.u32 %v3824, 2147483648
  %v3868 = vor.u32 1.1754944e-38, %v3867
  %v3869 = vsel %vm3866, %v3868, %v3864
  %v3870 = vmul.f32 1.0, %v3869
  %v3871 = vrcp.pop %v3825
  %v3872 = vmul.f32 %v3825, %v3871
  %v3873 = vsub.f32 1.0, %v3872
  %v3874 = vmul.f32 %v3871, %v3873
  %v3875 = vadd.f32 %v3871, %v3874
  %vm3876 = vweird.f32 %v3825
  %vm3877 = vweird.f32 %v3871
  %vm3878 = vmor %vm3876, %vm3877
  %v3879 = vsel %vm3878, %v3871, %v3875
  %v3880 = vand.u32 2147483647, %v3825
  %vm3881 = vcmp.eq.f32.partialorder %v3880, 8.507059e+37
  %v3882 = vand.u32 %v3825, 2147483648
  %v3883 = vor.u32 1.1754944e-38, %v3882
  %v3884 = vsel %vm3881, %v3883, %v3879
  %v3885 = vmul.f32 1.0, %v3884
  %v3886 = vmul.f32 %v3806, %v3840
  %v3887 = vmul.f32 %v3807, %v3855
  %v3888 = vmul.f32 %v3808, %v3870
  %v3889 = vmul.f32 %v3809, %v3885
  %s3890 = scalar_lea.vmem %s4, 64
  %v3891 = vld [vmem:[%s3890] sm:$0xff]
  %v3892 = vld [vmem:[%s3890 + $0x8] sm:$0xff]
  %v3893 = vld [vmem:[%s3890 + $0x10] sm:$0xff]
  %v3894 = vld [vmem:[%s3890 + $0x18] sm:$0xff]
  %s3895 = scalar_lea.vmem %s5, 64
  %v3896 = vld [vmem:[%s3895] sm:$0xff]
  %v3897 = vld [vmem:[%s3895 + $0x8] sm:$0xff]
  %v3898 = vld [vmem:[%s3895 + $0x10] sm:$0xff]
  %v3899 = vld [vmem:[%s3895 + $0x18] sm:$0xff]
  %3901 = vset.pattern.permute.xlu0 0
  %3902 = vperm.xlu0 %3901, %v3896
  %v3903 = vpop.permute.xlu0 %3902
  %3906 = vset.pattern.permute.xlu0 0
  %3907 = vperm.xlu0 %3906, %v3897
  %v3908 = vpop.permute.xlu0 %3907
  %3911 = vset.pattern.permute.xlu0 0
  %3912 = vperm.xlu0 %3911, %v3898
  %v3913 = vpop.permute.xlu0 %3912
  %3916 = vset.pattern.permute.xlu0 0
  %3917 = vperm.xlu0 %3916, %v3899
  %v3918 = vpop.permute.xlu0 %3917
  %v3921 = vsel %vm998, %v3891, 0
  %v3924 = vsel %vm998, %v3892, 0
  %v3927 = vsel %vm998, %v3893, 0
  %v3930 = vsel %vm998, %v3894, 0
  %3932 = vmatpush.msra.mxu0 0.0
  %3933 = vmatpush.msra.mxu0 0.0
  %3934 = vmatpush.msra.mxu0 0.0
  %3935 = vmatpush.msra.mxu0 0.0
  %3936 = vmatpush.msra.mxu0 0.0
  %3937 = vmatpush.msra.mxu0 0.0
  %3938 = vmatpush.msra.mxu0 0.0
  %3939 = vmatpush.msra.mxu0 0.0
  %3940 = vmatpush.msra.mxu0 0.0
  %3941 = vmatpush.msra.mxu0 0.0
  %3942 = vmatpush.msra.mxu0 0.0
  %3943 = vmatpush.msra.mxu0 0.0
  %3944 = vmatpush.msra.mxu0 0.0
  %3945 = vmatpush.msra.mxu0 0.0
  %v3946 = vand.u32 %v3888, 4294901760
  %3947 = vmatpush.msra.mxu0 %v3946
  %v3948 = vand.u32 %v3886, 4294901760
  %3949 = vmatpush.msra.mxu0 %v3948
  %v3950 = vand.u32 %v3921, 4294901760
  %v3951 = vsub.f32 %v3921, %v3950
  %v3952 = vand.u32 %v3951, 4294901760
  %v3953 = vsub.f32 %v3951, %v3952
  %v3954 = vand.u32 %v3953, 4294901760
  %3955 = vmatmul.f32.gmra.mxu0 %v3954
  %v3956 = vpop.f32.mrf.mxu0
  %v3957 = vadd.f32 %v3903, %v3956
  %v3958 = vand.u32 %v3924, 4294901760
  %v3959 = vsub.f32 %v3924, %v3958
  %v3960 = vand.u32 %v3959, 4294901760
  %v3961 = vsub.f32 %v3959, %v3960
  %v3962 = vand.u32 %v3961, 4294901760
  %3963 = vmatmul.f32.gmra.mxu0 %v3962
  %v3964 = vpop.f32.mrf.mxu0
  %v3965 = vadd.f32 %v3908, %v3964
  %v3966 = vand.u32 %v3927, 4294901760
  %v3967 = vsub.f32 %v3927, %v3966
  %v3968 = vand.u32 %v3967, 4294901760
  %v3969 = vsub.f32 %v3967, %v3968
  %v3970 = vand.u32 %v3969, 4294901760
  %3971 = vmatmul.f32.gmra.mxu0 %v3970
  %v3972 = vpop.f32.mrf.mxu0
  %v3973 = vadd.f32 %v3913, %v3972
  %v3974 = vand.u32 %v3930, 4294901760
  %v3975 = vsub.f32 %v3930, %v3974
  %v3976 = vand.u32 %v3975, 4294901760
  %v3977 = vsub.f32 %v3975, %v3976
  %v3978 = vand.u32 %v3977, 4294901760
  %3979 = vmatmul.f32.gmra.mxu0 %v3978
  %v3980 = vpop.f32.mrf.mxu0
  %v3981 = vadd.f32 %v3918, %v3980
  %3982 = vdwg.mxu0
  %3983 = vmatpush.msra.mxu0 0.0
  %3984 = vmatpush.msra.mxu0 0.0
  %3985 = vmatpush.msra.mxu0 0.0
  %3986 = vmatpush.msra.mxu0 0.0
  %3987 = vmatpush.msra.mxu0 0.0
  %3988 = vmatpush.msra.mxu0 0.0
  %3989 = vmatpush.msra.mxu0 0.0
  %3990 = vmatpush.msra.mxu0 0.0
  %3991 = vmatpush.msra.mxu0 0.0
  %3992 = vmatpush.msra.mxu0 0.0
  %3993 = vmatpush.msra.mxu0 0.0
  %3994 = vmatpush.msra.mxu0 0.0
  %3995 = vmatpush.msra.mxu0 0.0
  %3996 = vmatpush.msra.mxu0 0.0
  %v3997 = vand.u32 %v3888, 4294901760
  %v3998 = vsub.f32 %v3888, %v3997
  %v3999 = vand.u32 %v3998, 4294901760
  %v4000 = vsub.f32 %v3998, %v3999
  %v4001 = vand.u32 %v4000, 4294901760
  %4002 = vmatpush.msra.mxu0 %v4001
  %v4003 = vand.u32 %v3886, 4294901760
  %v4004 = vsub.f32 %v3886, %v4003
  %v4005 = vand.u32 %v4004, 4294901760
  %v4006 = vsub.f32 %v4004, %v4005
  %v4007 = vand.u32 %v4006, 4294901760
  %4008 = vmatpush.msra.mxu0 %v4007
  %v4009 = vand.u32 %v3921, 4294901760
  %4010 = vmatmul.f32.gmra.mxu0 %v4009
  %v4011 = vpop.f32.mrf.mxu0
  %v4012 = vadd.f32 %v3957, %v4011
  %v4013 = vand.u32 %v3924, 4294901760
  %4014 = vmatmul.f32.gmra.mxu0 %v4013
  %v4015 = vpop.f32.mrf.mxu0
  %v4016 = vadd.f32 %v3965, %v4015
  %v4017 = vand.u32 %v3927, 4294901760
  %4018 = vmatmul.f32.gmra.mxu0 %v4017
  %v4019 = vpop.f32.mrf.mxu0
  %v4020 = vadd.f32 %v3973, %v4019
  %v4021 = vand.u32 %v3930, 4294901760
  %4022 = vmatmul.f32.gmra.mxu0 %v4021
  %v4023 = vpop.f32.mrf.mxu0
  %v4024 = vadd.f32 %v3981, %v4023
  %4025 = vdwg.mxu0
  %4026 = vmatpush.msra.mxu0 0.0
  %4027 = vmatpush.msra.mxu0 0.0
  %4028 = vmatpush.msra.mxu0 0.0
  %4029 = vmatpush.msra.mxu0 0.0
  %4030 = vmatpush.msra.mxu0 0.0
  %4031 = vmatpush.msra.mxu0 0.0
  %4032 = vmatpush.msra.mxu0 0.0
  %4033 = vmatpush.msra.mxu0 0.0
  %4034 = vmatpush.msra.mxu0 0.0
  %4035 = vmatpush.msra.mxu0 0.0
  %4036 = vmatpush.msra.mxu0 0.0
  %4037 = vmatpush.msra.mxu0 0.0
  %4038 = vmatpush.msra.mxu0 0.0
  %4039 = vmatpush.msra.mxu0 0.0
  %v4040 = vand.u32 %v3888, 4294901760
  %v4041 = vsub.f32 %v3888, %v4040
  %4042 = vmatpush.msra.mxu0 %v4041
  %v4043 = vand.u32 %v3886, 4294901760
  %v4044 = vsub.f32 %v3886, %v4043
  %4045 = vmatpush.msra.mxu0 %v4044
  %v4046 = vand.u32 %v3921, 4294901760
  %v4047 = vsub.f32 %v3921, %v4046
  %4048 = vmatmul.f32.gmra.mxu0 %v4047
  %v4049 = vpop.f32.mrf.mxu0
  %v4050 = vadd.f32 %v4012, %v4049
  %v4051 = vand.u32 %v3924, 4294901760
  %v4052 = vsub.f32 %v3924, %v4051
  %4053 = vmatmul.f32.gmra.mxu0 %v4052
  %v4054 = vpop.f32.mrf.mxu0
  %v4055 = vadd.f32 %v4016, %v4054
  %v4056 = vand.u32 %v3927, 4294901760
  %v4057 = vsub.f32 %v3927, %v4056
  %4058 = vmatmul.f32.gmra.mxu0 %v4057
  %v4059 = vpop.f32.mrf.mxu0
  %v4060 = vadd.f32 %v4020, %v4059
  %v4061 = vand.u32 %v3930, 4294901760
  %v4062 = vsub.f32 %v3930, %v4061
  %4063 = vmatmul.f32.gmra.mxu0 %v4062
  %v4064 = vpop.f32.mrf.mxu0
  %v4065 = vadd.f32 %v4024, %v4064
  %4066 = vdwg.mxu0
  %4067 = vmatpush.msra.mxu0 0.0
  %4068 = vmatpush.msra.mxu0 0.0
  %4069 = vmatpush.msra.mxu0 0.0
  %4070 = vmatpush.msra.mxu0 0.0
  %4071 = vmatpush.msra.mxu0 0.0
  %4072 = vmatpush.msra.mxu0 0.0
  %4073 = vmatpush.msra.mxu0 0.0
  %4074 = vmatpush.msra.mxu0 0.0
  %4075 = vmatpush.msra.mxu0 0.0
  %4076 = vmatpush.msra.mxu0 0.0
  %4077 = vmatpush.msra.mxu0 0.0
  %4078 = vmatpush.msra.mxu0 0.0
  %4079 = vmatpush.msra.mxu0 0.0
  %4080 = vmatpush.msra.mxu0 0.0
  %v4081 = vand.u32 %v3888, 4294901760
  %4082 = vmatpush.msra.mxu0 %v4081
  %v4083 = vand.u32 %v3886, 4294901760
  %4084 = vmatpush.msra.mxu0 %v4083
  %v4085 = vand.u32 %v3921, 4294901760
  %v4086 = vsub.f32 %v3921, %v4085
  %v4087 = vand.u32 %v4086, 4294901760
  %4088 = vmatmul.f32.gmra.mxu0 %v4087
  %v4089 = vpop.f32.mrf.mxu0
  %v4090 = vadd.f32 %v4050, %v4089
  %v4091 = vand.u32 %v3924, 4294901760
  %v4092 = vsub.f32 %v3924, %v4091
  %v4093 = vand.u32 %v4092, 4294901760
  %4094 = vmatmul.f32.gmra.mxu0 %v4093
  %v4095 = vpop.f32.mrf.mxu0
  %v4096 = vadd.f32 %v4055, %v4095
  %v4097 = vand.u32 %v3927, 4294901760
  %v4098 = vsub.f32 %v3927, %v4097
  %v4099 = vand.u32 %v4098, 4294901760
  %4100 = vmatmul.f32.gmra.mxu0 %v4099
  %v4101 = vpop.f32.mrf.mxu0
  %v4102 = vadd.f32 %v4060, %v4101
  %v4103 = vand.u32 %v3930, 4294901760
  %v4104 = vsub.f32 %v3930, %v4103
  %v4105 = vand.u32 %v4104, 4294901760
  %4106 = vmatmul.f32.gmra.mxu0 %v4105
  %v4107 = vpop.f32.mrf.mxu0
  %v4108 = vadd.f32 %v4065, %v4107
  %4109 = vdwg.mxu0
  %4110 = vmatpush.msra.mxu0 0.0
  %4111 = vmatpush.msra.mxu0 0.0
  %4112 = vmatpush.msra.mxu0 0.0
  %4113 = vmatpush.msra.mxu0 0.0
  %4114 = vmatpush.msra.mxu0 0.0
  %4115 = vmatpush.msra.mxu0 0.0
  %4116 = vmatpush.msra.mxu0 0.0
  %4117 = vmatpush.msra.mxu0 0.0
  %4118 = vmatpush.msra.mxu0 0.0
  %4119 = vmatpush.msra.mxu0 0.0
  %4120 = vmatpush.msra.mxu0 0.0
  %4121 = vmatpush.msra.mxu0 0.0
  %4122 = vmatpush.msra.mxu0 0.0
  %4123 = vmatpush.msra.mxu0 0.0
  %v4124 = vand.u32 %v3888, 4294901760
  %v4125 = vsub.f32 %v3888, %v4124
  %v4126 = vand.u32 %v4125, 4294901760
  %4127 = vmatpush.msra.mxu0 %v4126
  %v4128 = vand.u32 %v3886, 4294901760
  %v4129 = vsub.f32 %v3886, %v4128
  %v4130 = vand.u32 %v4129, 4294901760
  %4131 = vmatpush.msra.mxu0 %v4130
  %v4132 = vand.u32 %v3921, 4294901760
  %4133 = vmatmul.f32.gmra.mxu0 %v4132
  %v4134 = vpop.f32.mrf.mxu0
  %v4135 = vadd.f32 %v4090, %v4134
  %v4136 = vand.u32 %v3924, 4294901760
  %4137 = vmatmul.f32.gmra.mxu0 %v4136
  %v4138 = vpop.f32.mrf.mxu0
  %v4139 = vadd.f32 %v4096, %v4138
  %v4140 = vand.u32 %v3927, 4294901760
  %4141 = vmatmul.f32.gmra.mxu0 %v4140
  %v4142 = vpop.f32.mrf.mxu0
  %v4143 = vadd.f32 %v4102, %v4142
  %v4144 = vand.u32 %v3930, 4294901760
  %4145 = vmatmul.f32.gmra.mxu0 %v4144
  %v4146 = vpop.f32.mrf.mxu0
  %v4147 = vadd.f32 %v4108, %v4146
  %4148 = vdwg.mxu0
  %4149 = vmatpush.msra.mxu0 0.0
  %4150 = vmatpush.msra.mxu0 0.0
  %4151 = vmatpush.msra.mxu0 0.0
  %4152 = vmatpush.msra.mxu0 0.0
  %4153 = vmatpush.msra.mxu0 0.0
  %4154 = vmatpush.msra.mxu0 0.0
  %4155 = vmatpush.msra.mxu0 0.0
  %4156 = vmatpush.msra.mxu0 0.0
  %4157 = vmatpush.msra.mxu0 0.0
  %4158 = vmatpush.msra.mxu0 0.0
  %4159 = vmatpush.msra.mxu0 0.0
  %4160 = vmatpush.msra.mxu0 0.0
  %4161 = vmatpush.msra.mxu0 0.0
  %4162 = vmatpush.msra.mxu0 0.0
  %v4163 = vand.u32 %v3888, 4294901760
  %4164 = vmatpush.msra.mxu0 %v4163
  %v4165 = vand.u32 %v3886, 4294901760
  %4166 = vmatpush.msra.mxu0 %v4165
  %v4167 = vand.u32 %v3921, 4294901760
  %4168 = vmatmul.f32.gmra.mxu0 %v4167
  %v4169 = vpop.f32.mrf.mxu0
  %v4170 = vadd.f32 %v4135, %v4169
  %v4171 = vand.u32 %v3924, 4294901760
  %4172 = vmatmul.f32.gmra.mxu0 %v4171
  %v4173 = vpop.f32.mrf.mxu0
  %v4174 = vadd.f32 %v4139, %v4173
  %v4175 = vand.u32 %v3927, 4294901760
  %4176 = vmatmul.f32.gmra.mxu0 %v4175
  %v4177 = vpop.f32.mrf.mxu0
  %v4178 = vadd.f32 %v4143, %v4177
  %v4179 = vand.u32 %v3930, 4294901760
  %4180 = vmatmul.f32.gmra.mxu0 %v4179
  %v4181 = vpop.f32.mrf.mxu0
  %v4182 = vadd.f32 %v4147, %v4181
  %4183 = vdwg.mxu0
  %4184 = vmatpush.msra.mxu0 0.0
  %4185 = vmatpush.msra.mxu0 0.0
  %4186 = vmatpush.msra.mxu0 0.0
  %4187 = vmatpush.msra.mxu0 0.0
  %4188 = vmatpush.msra.mxu0 0.0
  %4189 = vmatpush.msra.mxu0 0.0
  %4190 = vmatpush.msra.mxu0 0.0
  %4191 = vmatpush.msra.mxu0 0.0
  %4192 = vmatpush.msra.mxu0 0.0
  %4193 = vmatpush.msra.mxu0 0.0
  %4194 = vmatpush.msra.mxu0 0.0
  %4195 = vmatpush.msra.mxu0 0.0
  %4196 = vmatpush.msra.mxu0 0.0
  %4197 = vmatpush.msra.mxu0 0.0
  %v4198 = vand.u32 %v3889, 4294901760
  %4199 = vmatpush.msra.mxu0 %v4198
  %v4200 = vand.u32 %v3887, 4294901760
  %4201 = vmatpush.msra.mxu0 %v4200
  %v4202 = vand.u32 %v3921, 4294901760
  %v4203 = vsub.f32 %v3921, %v4202
  %v4204 = vand.u32 %v4203, 4294901760
  %v4205 = vsub.f32 %v4203, %v4204
  %v4206 = vand.u32 %v4205, 4294901760
  %4207 = vmatmul.f32.gmra.mxu0 %v4206
  %v4208 = vpop.f32.mrf.mxu0
  %v4209 = vadd.f32 %v3903, %v4208
  %v4210 = vand.u32 %v3924, 4294901760
  %v4211 = vsub.f32 %v3924, %v4210
  %v4212 = vand.u32 %v4211, 4294901760
  %v4213 = vsub.f32 %v4211, %v4212
  %v4214 = vand.u32 %v4213, 4294901760
  %4215 = vmatmul.f32.gmra.mxu0 %v4214
  %v4216 = vpop.f32.mrf.mxu0
  %v4217 = vadd.f32 %v3908, %v4216
  %v4218 = vand.u32 %v3927, 4294901760
  %v4219 = vsub.f32 %v3927, %v4218
  %v4220 = vand.u32 %v4219, 4294901760
  %v4221 = vsub.f32 %v4219, %v4220
  %v4222 = vand.u32 %v4221, 4294901760
  %4223 = vmatmul.f32.gmra.mxu0 %v4222
  %v4224 = vpop.f32.mrf.mxu0
  %v4225 = vadd.f32 %v3913, %v4224
  %v4226 = vand.u32 %v3930, 4294901760
  %v4227 = vsub.f32 %v3930, %v4226
  %v4228 = vand.u32 %v4227, 4294901760
  %v4229 = vsub.f32 %v4227, %v4228
  %v4230 = vand.u32 %v4229, 4294901760
  %4231 = vmatmul.f32.gmra.mxu0 %v4230
  %v4232 = vpop.f32.mrf.mxu0
  %v4233 = vadd.f32 %v3918, %v4232
  %4234 = vdwg.mxu0
  %4235 = vmatpush.msra.mxu0 0.0
  %4236 = vmatpush.msra.mxu0 0.0
  %4237 = vmatpush.msra.mxu0 0.0
  %4238 = vmatpush.msra.mxu0 0.0
  %4239 = vmatpush.msra.mxu0 0.0
  %4240 = vmatpush.msra.mxu0 0.0
  %4241 = vmatpush.msra.mxu0 0.0
  %4242 = vmatpush.msra.mxu0 0.0
  %4243 = vmatpush.msra.mxu0 0.0
  %4244 = vmatpush.msra.mxu0 0.0
  %4245 = vmatpush.msra.mxu0 0.0
  %4246 = vmatpush.msra.mxu0 0.0
  %4247 = vmatpush.msra.mxu0 0.0
  %4248 = vmatpush.msra.mxu0 0.0
  %v4249 = vand.u32 %v3889, 4294901760
  %v4250 = vsub.f32 %v3889, %v4249
  %v4251 = vand.u32 %v4250, 4294901760
  %v4252 = vsub.f32 %v4250, %v4251
  %v4253 = vand.u32 %v4252, 4294901760
  %4254 = vmatpush.msra.mxu0 %v4253
  %v4255 = vand.u32 %v3887, 4294901760
  %v4256 = vsub.f32 %v3887, %v4255
  %v4257 = vand.u32 %v4256, 4294901760
  %v4258 = vsub.f32 %v4256, %v4257
  %v4259 = vand.u32 %v4258, 4294901760
  %4260 = vmatpush.msra.mxu0 %v4259
  %v4261 = vand.u32 %v3921, 4294901760
  %4262 = vmatmul.f32.gmra.mxu0 %v4261
  %v4263 = vpop.f32.mrf.mxu0
  %v4264 = vadd.f32 %v4209, %v4263
  %v4265 = vand.u32 %v3924, 4294901760
  %4266 = vmatmul.f32.gmra.mxu0 %v4265
  %v4267 = vpop.f32.mrf.mxu0
  %v4268 = vadd.f32 %v4217, %v4267
  %v4269 = vand.u32 %v3927, 4294901760
  %4270 = vmatmul.f32.gmra.mxu0 %v4269
  %v4271 = vpop.f32.mrf.mxu0
  %v4272 = vadd.f32 %v4225, %v4271
  %v4273 = vand.u32 %v3930, 4294901760
  %4274 = vmatmul.f32.gmra.mxu0 %v4273
  %v4275 = vpop.f32.mrf.mxu0
  %v4276 = vadd.f32 %v4233, %v4275
  %4277 = vdwg.mxu0
  %4278 = vmatpush.msra.mxu0 0.0
  %4279 = vmatpush.msra.mxu0 0.0
  %4280 = vmatpush.msra.mxu0 0.0
  %4281 = vmatpush.msra.mxu0 0.0
  %4282 = vmatpush.msra.mxu0 0.0
  %4283 = vmatpush.msra.mxu0 0.0
  %4284 = vmatpush.msra.mxu0 0.0
  %4285 = vmatpush.msra.mxu0 0.0
  %4286 = vmatpush.msra.mxu0 0.0
  %4287 = vmatpush.msra.mxu0 0.0
  %4288 = vmatpush.msra.mxu0 0.0
  %4289 = vmatpush.msra.mxu0 0.0
  %4290 = vmatpush.msra.mxu0 0.0
  %4291 = vmatpush.msra.mxu0 0.0
  %v4292 = vand.u32 %v3889, 4294901760
  %v4293 = vsub.f32 %v3889, %v4292
  %4294 = vmatpush.msra.mxu0 %v4293
  %v4295 = vand.u32 %v3887, 4294901760
  %v4296 = vsub.f32 %v3887, %v4295
  %4297 = vmatpush.msra.mxu0 %v4296
  %v4298 = vand.u32 %v3921, 4294901760
  %v4299 = vsub.f32 %v3921, %v4298
  %4300 = vmatmul.f32.gmra.mxu0 %v4299
  %v4301 = vpop.f32.mrf.mxu0
  %v4302 = vadd.f32 %v4264, %v4301
  %v4303 = vand.u32 %v3924, 4294901760
  %v4304 = vsub.f32 %v3924, %v4303
  %4305 = vmatmul.f32.gmra.mxu0 %v4304
  %v4306 = vpop.f32.mrf.mxu0
  %v4307 = vadd.f32 %v4268, %v4306
  %v4308 = vand.u32 %v3927, 4294901760
  %v4309 = vsub.f32 %v3927, %v4308
  %4310 = vmatmul.f32.gmra.mxu0 %v4309
  %v4311 = vpop.f32.mrf.mxu0
  %v4312 = vadd.f32 %v4272, %v4311
  %v4313 = vand.u32 %v3930, 4294901760
  %v4314 = vsub.f32 %v3930, %v4313
  %4315 = vmatmul.f32.gmra.mxu0 %v4314
  %v4316 = vpop.f32.mrf.mxu0
  %v4317 = vadd.f32 %v4276, %v4316
  %4318 = vdwg.mxu0
  %4319 = vmatpush.msra.mxu0 0.0
  %4320 = vmatpush.msra.mxu0 0.0
  %4321 = vmatpush.msra.mxu0 0.0
  %4322 = vmatpush.msra.mxu0 0.0
  %4323 = vmatpush.msra.mxu0 0.0
  %4324 = vmatpush.msra.mxu0 0.0
  %4325 = vmatpush.msra.mxu0 0.0
  %4326 = vmatpush.msra.mxu0 0.0
  %4327 = vmatpush.msra.mxu0 0.0
  %4328 = vmatpush.msra.mxu0 0.0
  %4329 = vmatpush.msra.mxu0 0.0
  %4330 = vmatpush.msra.mxu0 0.0
  %4331 = vmatpush.msra.mxu0 0.0
  %4332 = vmatpush.msra.mxu0 0.0
  %v4333 = vand.u32 %v3889, 4294901760
  %4334 = vmatpush.msra.mxu0 %v4333
  %v4335 = vand.u32 %v3887, 4294901760
  %4336 = vmatpush.msra.mxu0 %v4335
  %v4337 = vand.u32 %v3921, 4294901760
  %v4338 = vsub.f32 %v3921, %v4337
  %v4339 = vand.u32 %v4338, 4294901760
  %4340 = vmatmul.f32.gmra.mxu0 %v4339
  %v4341 = vpop.f32.mrf.mxu0
  %v4342 = vadd.f32 %v4302, %v4341
  %v4343 = vand.u32 %v3924, 4294901760
  %v4344 = vsub.f32 %v3924, %v4343
  %v4345 = vand.u32 %v4344, 4294901760
  %4346 = vmatmul.f32.gmra.mxu0 %v4345
  %v4347 = vpop.f32.mrf.mxu0
  %v4348 = vadd.f32 %v4307, %v4347
  %v4349 = vand.u32 %v3927, 4294901760
  %v4350 = vsub.f32 %v3927, %v4349
  %v4351 = vand.u32 %v4350, 4294901760
  %4352 = vmatmul.f32.gmra.mxu0 %v4351
  %v4353 = vpop.f32.mrf.mxu0
  %v4354 = vadd.f32 %v4312, %v4353
  %v4355 = vand.u32 %v3930, 4294901760
  %v4356 = vsub.f32 %v3930, %v4355
  %v4357 = vand.u32 %v4356, 4294901760
  %4358 = vmatmul.f32.gmra.mxu0 %v4357
  %v4359 = vpop.f32.mrf.mxu0
  %v4360 = vadd.f32 %v4317, %v4359
  %4361 = vdwg.mxu0
  %4362 = vmatpush.msra.mxu0 0.0
  %4363 = vmatpush.msra.mxu0 0.0
  %4364 = vmatpush.msra.mxu0 0.0
  %4365 = vmatpush.msra.mxu0 0.0
  %4366 = vmatpush.msra.mxu0 0.0
  %4367 = vmatpush.msra.mxu0 0.0
  %4368 = vmatpush.msra.mxu0 0.0
  %4369 = vmatpush.msra.mxu0 0.0
  %4370 = vmatpush.msra.mxu0 0.0
  %4371 = vmatpush.msra.mxu0 0.0
  %4372 = vmatpush.msra.mxu0 0.0
  %4373 = vmatpush.msra.mxu0 0.0
  %4374 = vmatpush.msra.mxu0 0.0
  %4375 = vmatpush.msra.mxu0 0.0
  %v4376 = vand.u32 %v3889, 4294901760
  %v4377 = vsub.f32 %v3889, %v4376
  %v4378 = vand.u32 %v4377, 4294901760
  %4379 = vmatpush.msra.mxu0 %v4378
  %v4380 = vand.u32 %v3887, 4294901760
  %v4381 = vsub.f32 %v3887, %v4380
  %v4382 = vand.u32 %v4381, 4294901760
  %4383 = vmatpush.msra.mxu0 %v4382
  %v4384 = vand.u32 %v3921, 4294901760
  %4385 = vmatmul.f32.gmra.mxu0 %v4384
  %v4386 = vpop.f32.mrf.mxu0
  %v4387 = vadd.f32 %v4342, %v4386
  %v4388 = vand.u32 %v3924, 4294901760
  %4389 = vmatmul.f32.gmra.mxu0 %v4388
  %v4390 = vpop.f32.mrf.mxu0
  %v4391 = vadd.f32 %v4348, %v4390
  %v4392 = vand.u32 %v3927, 4294901760
  %4393 = vmatmul.f32.gmra.mxu0 %v4392
  %v4394 = vpop.f32.mrf.mxu0
  %v4395 = vadd.f32 %v4354, %v4394
  %v4396 = vand.u32 %v3930, 4294901760
  %4397 = vmatmul.f32.gmra.mxu0 %v4396
  %v4398 = vpop.f32.mrf.mxu0
  %v4399 = vadd.f32 %v4360, %v4398
  %4400 = vdwg.mxu0
  %4401 = vmatpush.msra.mxu0 0.0
  %4402 = vmatpush.msra.mxu0 0.0
  %4403 = vmatpush.msra.mxu0 0.0
  %4404 = vmatpush.msra.mxu0 0.0
  %4405 = vmatpush.msra.mxu0 0.0
  %4406 = vmatpush.msra.mxu0 0.0
  %4407 = vmatpush.msra.mxu0 0.0
  %4408 = vmatpush.msra.mxu0 0.0
  %4409 = vmatpush.msra.mxu0 0.0
  %4410 = vmatpush.msra.mxu0 0.0
  %4411 = vmatpush.msra.mxu0 0.0
  %4412 = vmatpush.msra.mxu0 0.0
  %4413 = vmatpush.msra.mxu0 0.0
  %4414 = vmatpush.msra.mxu0 0.0
  %v4415 = vand.u32 %v3889, 4294901760
  %4416 = vmatpush.msra.mxu0 %v4415
  %v4417 = vand.u32 %v3887, 4294901760
  %4418 = vmatpush.msra.mxu0 %v4417
  %v4419 = vand.u32 %v3921, 4294901760
  %4420 = vmatmul.f32.gmra.mxu0 %v4419
  %v4421 = vpop.f32.mrf.mxu0
  %v4422 = vadd.f32 %v4387, %v4421
  %v4423 = vand.u32 %v3924, 4294901760
  %4424 = vmatmul.f32.gmra.mxu0 %v4423
  %v4425 = vpop.f32.mrf.mxu0
  %v4426 = vadd.f32 %v4391, %v4425
  %v4427 = vand.u32 %v3927, 4294901760
  %4428 = vmatmul.f32.gmra.mxu0 %v4427
  %v4429 = vpop.f32.mrf.mxu0
  %v4430 = vadd.f32 %v4395, %v4429
  %v4431 = vand.u32 %v3930, 4294901760
  %4432 = vmatmul.f32.gmra.mxu0 %v4431
  %v4433 = vpop.f32.mrf.mxu0
  %v4434 = vadd.f32 %v4399, %v4433
  %4435 = vdwg.mxu0
  %s4436 = scalar_lea.vmem %s6, 64
  %4437 = vst [vmem:[%s4436] sm:$0xff] %v4178
  %4438 = vst [vmem:[%s4436 + $0x8] sm:$0xff] %v4430
  %4439 = vst [vmem:[%s4436 + $0x10] sm:$0xff] %v4182
  %4440 = vst [vmem:[%s4436 + $0x18] sm:$0xff] %v4434
  %v4441 = vadd.f32 %v4170, %v2980
  %v4442 = vadd.f32 %v4422, %v2981
  %v4443 = vadd.f32 %v4174, %v2982
  %v4444 = vadd.f32 %v4426, %v2983
  %4445 = vst [vmem:[%s7] sm:$0xff] %v4441
  %4446 = vst [vmem:[%s7 + $0x8] sm:$0xff] %v4442
  %4447 = vst [vmem:[%s7 + $0x10] sm:$0xff] %v4443
  %4448 = vst [vmem:[%s7 + $0x18] sm:$0xff] %v4444
  // Predicated region
  $region26: #{dilated_stack_forward.1} parent=0 // pred_check
    _
  $region27: #{dilated_stack_forward.1} parent=0 // pred_check_branch
    %4450 = sbr.rel (0) target = $region29
  $region28: #{dilated_stack_forward.1} parent=0 // pred_region
    _
  $region29: #{dilated_stack_forward.1} parent=0 // pred_fallthru
    _
  // Predicated region
  $region30: #{dilated_stack_forward.1} parent=0 // pred_check
    _
  $region31: #{dilated_stack_forward.1} parent=0 // pred_check_branch
    %4452 = sbr.rel (0) target = $region33
  $region32: #{dilated_stack_forward.1} parent=0 // pred_region
    _
  $region33: #{dilated_stack_forward.1} parent=0 // pred_fallthru
    _
  // Predicated region
  $region34: #{dilated_stack_forward.1} parent=0 // pred_check
    _
  $region35: #{dilated_stack_forward.1} parent=0 // pred_check_branch
    %4454 = sbr.rel (0) target = $region37
  $region36: #{dilated_stack_forward.1} parent=0 // pred_region
    _
  $region37: #{dilated_stack_forward.1} parent=0 // pred_fallthru
    _
  // Predicated region
  $region38: #{dilated_stack_forward.1} parent=0 // pred_check
    _
  $region39: #{dilated_stack_forward.1} parent=0 // pred_check_branch
    %4456 = sbr.rel (0) target = $region41
  $region40: #{dilated_stack_forward.1} parent=0 // pred_region
    _
  $region41: #{dilated_stack_forward.1} parent=0 // pred_fallthru
    _

</llo_original>
